<compile_context>
chip_gen: v7x
topology: tpu7x:2x2x1
jax: 0.10.0
libtpu: 0.0.40
codegen_flags: <defaults>
</compile_context>

<pallas_src>
import functools

import jax
import jax.numpy as jnp
from jax import lax
from jax.experimental import pallas as pl
from jax.experimental.pallas import tpu as pltpu

_LANE = 128


def _round_up(v, m):
    return ((v + m - 1) // m) * m


def _pad_cols(v):
    # v6e/v7x MXU is 256 columns wide: round >128 output dims to 256 so there is no
    # ragged half-width pass (harmless extra zero-padding on v5e).
    return _round_up(max(v, 1), 256 if v > 128 else 128)


def _incnet_kernel(x_ref, wconv_ref, wcls_ref, *out_refs,
                   TB, H, W, C_in, CH, with_feats):
    """One grid step = TB samples.

    x_ref:      (TB, H+2, W+2, C_in)  bf16  zero-padded input tile (SAME padding)
    wconv_ref:  (9, C_in, CP)         bf16  conv weight per (ky, kx) tap
    wcls_ref:   (CP, NCP)             bf16  classifier weight^T (zero padded)
    logits_ref: (1, TB, NCP)          f32
    feats_ref:  (1, TB, CP)           f32   (only when with_feats)
    """
    if with_feats:
        logits_ref, feats_ref = out_refs
    else:
        (logits_ref,) = out_refs

    cp = wconv_ref.shape[-1]
    rows = TB * CH * W
    n_chunks = H // CH
    inv_hw = jnp.float32(1.0 / (H * W))

    def h_body(hb, gap):
        h0 = hb * CH
        acc = jnp.zeros((rows, cp), jnp.float32)
        for dy in range(3):
            # Dynamic offset on a leading (untiled) dim -> cheap, alignment-free.
            row = x_ref[:, pl.ds(h0 + dy, CH), :, :].astype(jnp.float32)
            for dx in range(3):
                # f32 value slice at sublane offset dx (0..2): safe relayout;
                # cast back to bf16 so the MXU uses its native bf16 path.
                xs = row[:, :, dx:dx + W, :]                       # (TB, CH, W, C_in)
                xs = xs.reshape(rows, C_in).astype(jnp.bfloat16)
                acc += jnp.dot(xs, wconv_ref[dy * 3 + dx],
                               preferred_element_type=jnp.float32)
        acc = jnp.maximum(acc, 0.0)                                # ReLU
        # Partial global-average-pool sum for this H chunk.
        return gap + acc.reshape(TB, CH * W, cp).sum(axis=1)

    gap = lax.fori_loop(0, n_chunks, h_body, jnp.zeros((TB, cp), jnp.float32))
    feats = gap * inv_hw                                           # GAP

    if with_feats:
        feats_ref[0] = feats.astype(feats_ref.dtype)

    logits = jnp.dot(feats.astype(jnp.bfloat16), wcls_ref[...],
                     preferred_element_type=jnp.float32)
    logits_ref[0] = logits.astype(logits_ref.dtype)


@functools.partial(jax.jit, static_argnames=("get_feats",))
def incremental_net_forward(x_nchw, w_conv, w_cls, get_feats=False):
    """x_nchw: (B, C_in, H, W) — PyTorch layout at the API boundary.

    w_conv: (3, 3, C_in, C_out)   (HWIO)
    w_cls:  (n_classes, C_out)    (PyTorch nn.Linear layout, no bias)
    """
    B, C_in, H, W = x_nchw.shape
    C_out = w_conv.shape[-1]
    n_classes = w_cls.shape[0]
    HW = H * W

    CP = _pad_cols(C_out)
    NCP = _pad_cols(n_classes)

    # ---- Batch tiling: several pipelined grid steps (>= ~2 per v7x TensorCore),
    # bounded by a VMEM budget that is safe on v7x (64 MiB physical).
    TARGET_STEPS = 8
    VMEM_BUDGET = 24 << 20

    # Per-sample VMEM-tiled footprint of the padded-input slab (bf16 (16,128) tiles),
    # double-buffered by the BlockSpec pipeline, plus its slice of the f32 outputs.
    x_slab = (H + 2) * _round_up(W + 2, 16) * _round_up(C_in, _LANE) * 2
    per_sample = 2 * x_slab + 8 * (CP + NCP) * 4
    fixed = 2 * (9 * _round_up(C_in, 16) * CP * 2 + CP * NCP * 2)  # resident weights
    tb_vmem = max(1, (VMEM_BUDGET - fixed) // per_sample)

    if B <= 1:
        TB = 1
    else:
        tb_steps = -(-B // TARGET_STEPS)          # TB giving ~TARGET_STEPS grid steps
        TB = int(max(1, min(64, tb_vmem, tb_steps, B)))
    num_steps = -(-B // TB)
    B_pad = num_steps * TB

    # ---- In-kernel H chunking: bound the live (rows, CP) f32 conv intermediate.
    CH = 1
    for ch in range(2, H + 1):
        if H % ch == 0 and TB * ch * W * CP * 4 <= (1 << 20):
            CH = ch

    # ---- Operands: bf16 streaming (cast BEFORE pad), f32 accumulation in-kernel.
    x_nhwc = jnp.transpose(x_nchw, (0, 2, 3, 1)).astype(jnp.bfloat16)
    x_pad = jnp.pad(x_nhwc, ((0, B_pad - B), (1, 1), (1, 1), (0, 0)))

    w_conv_k = w_conv.reshape(9, C_in, C_out).astype(jnp.bfloat16)   # (ky,kx) taps
    w_conv_k = jnp.pad(w_conv_k, ((0, 0), (0, 0), (0, CP - C_out)))
    w_cls_t = jnp.pad(w_cls.T.astype(jnp.bfloat16),
                      ((0, CP - C_out), (0, NCP - n_classes)))       # (CP, NCP)

    kernel = functools.partial(_incnet_kernel, TB=TB, H=H, W=W, C_in=C_in,
                               CH=CH, with_feats=get_feats)

    out_shape = [jax.ShapeDtypeStruct((num_steps, TB, NCP), jnp.float32)]
    out_specs = [pl.BlockSpec((1, TB, NCP), lambda i: (i, 0, 0))]
    if get_feats:
        out_shape.append(jax.ShapeDtypeStruct((num_steps, TB, CP), jnp.float32))
        out_specs.append(pl.BlockSpec((1, TB, CP), lambda i: (i, 0, 0)))

    out_bytes = num_steps * TB * NCP * 4 + (num_steps * TB * CP * 4 if get_feats else 0)
    cost = pl.CostEstimate(
        flops=2 * B_pad * HW * (9 * C_in) * CP + 2 * B_pad * CP * NCP,
        transcendentals=0,
        bytes_accessed=int(x_pad.size * 2 + w_conv_k.size * 2
                           + w_cls_t.size * 2 + out_bytes))

    outs = pl.pallas_call(
        kernel,
        out_shape=tuple(out_shape),
        grid_spec=pltpu.PrefetchScalarGridSpec(
            num_scalar_prefetch=0,
            grid=(num_steps,),
            in_specs=[
                pl.BlockSpec((TB, H + 2, W + 2, C_in), lambda i: (i, 0, 0, 0)),
                pl.BlockSpec((9, C_in, CP), lambda i: (0, 0, 0)),
                pl.BlockSpec((CP, NCP), lambda i: (0, 0)),
            ],
            out_specs=tuple(out_specs),
        ),
        compiler_params=pltpu.CompilerParams(
            dimension_semantics=("parallel",),
            vmem_limit_bytes=48 << 20),
        cost_estimate=cost,
    )(x_pad, w_conv_k, w_cls_t)

    logits = outs[0].reshape(B_pad, NCP)[:B, :n_classes]
    if get_feats:
        feats = outs[1].reshape(B_pad, CP)[:B, :C_out]
        return logits, feats
    return logits


def _reference_forward(x_nchw, w_conv, w_cls):
    """Pure-JAX f32 reference (conv -> relu -> GAP -> linear)."""
    x_nhwc = jnp.transpose(x_nchw, (0, 2, 3, 1))
    conv = jax.lax.conv_general_dilated(
        x_nhwc, w_conv, window_strides=(1, 1), padding="SAME",
        dimension_numbers=("NHWC", "HWIO", "NHWC"))
    conv = jnp.maximum(conv, 0.0)
    feats = jnp.mean(conv, axis=(1, 2))                           # (B, C_out)
    logits = feats @ w_cls.T
    return logits, feats


if __name__ == "__main__":
    key = jax.random.PRNGKey(0)
    k_x, k_conv, k_cls = jax.random.split(key, 3)

    B, C_in, H, W = 2, 4, 16, 16
    feature_size = 32          # C_out of the backbone == classifier in-features
    n_classes = 10

    x = jax.random.normal(k_x, (B, C_in, H, W), dtype=jnp.float32)
    w_conv = jax.random.normal(k_conv, (3, 3, C_in, feature_size),
                               dtype=jnp.float32) * 0.1
    # Classifier: kaiming_normal_(nonlinearity='linear') -> std = 1/sqrt(fan_in)
    w_cls = jax.random.normal(k_cls, (n_classes, feature_size),
                              dtype=jnp.float32) / jnp.sqrt(float(feature_size))

    logits, feats = incremental_net_forward(x, w_conv, w_cls, get_feats=True)
    logits = jax.block_until_ready(logits)
    feats = jax.block_until_ready(feats)

    logits_only = jax.block_until_ready(
        incremental_net_forward(x, w_conv, w_cls, get_feats=False))

    ref_logits, ref_feats = _reference_forward(x, w_conv, w_cls)
    assert logits.shape == (B, n_classes)
    assert feats.shape == (B, feature_size)
    assert logits_only.shape == (B, n_classes)
    # bf16 operand streaming (autocast analogue) -> looser tolerance vs f32 ref.
    assert jnp.allclose(logits, ref_logits, atol=2e-2, rtol=2e-2)
    assert jnp.allclose(feats, ref_feats, atol=2e-2, rtol=2e-2)
    assert jnp.allclose(logits_only, logits, atol=1e-5, rtol=1e-5)

    print("KERNEL_OK")
</pallas_src>

<mosaic_0001>
module attributes {stable_mosaic.version = 11 : i64} {
  func.func @_incnet_kernel(%arg0: i32, %arg1: memref<1x18x18x4xbf16, #tpu.memory_space<vmem>>, %arg2: memref<9x4x128xbf16, #tpu.memory_space<vmem>>, %arg3: memref<128x128xbf16, #tpu.memory_space<vmem>>, %arg4: memref<1x1x128xf32, #tpu.memory_space<vmem>>, %arg5: memref<1x1x128xf32, #tpu.memory_space<vmem>>) attributes {dimension_semantics = [#tpu.dimension_semantics<parallel>], iteration_bounds = array<i64: 2>, scalar_prefetch = 0 : i64, scratch_operands = 0 : i64, tpu.core_type = #tpu.core_type<tc>, window_params = [{transform_indices = @transform_0, window_bounds = array<i64: 1, 18, 18, 4>}, {pipeline_mode = #tpu.pipeline_mode<synchronous>, transform_indices = @transform_1, window_bounds = array<i64: 9, 4, 128>}, {pipeline_mode = #tpu.pipeline_mode<synchronous>, transform_indices = @transform_2, window_bounds = array<i64: 128, 128>}, {transform_indices = @transform_3, window_bounds = array<i64: 1, 1, 128>}, {transform_indices = @transform_4, window_bounds = array<i64: 1, 1, 128>}]} {
    %cst = arith.constant 0.000000e+00 : f32
    %0 = vector.broadcast %cst : f32 to vector<1x128xf32>
    %c0_i32 = arith.constant 0 : i32
    %c16_i32 = arith.constant 16 : i32
    %1 = arith.muli %c0_i32, %c16_i32 : i32
    %cst_0 = arith.constant 0.000000e+00 : f32
    %2 = vector.broadcast %cst_0 : f32 to vector<256x128xf32>
    %c0_i32_1 = arith.constant 0 : i32
    %3 = arith.addi %1, %c0_i32_1 : i32
    %c0 = arith.constant 0 : index
    %4 = arith.index_cast %3 : i32 to index
    %c0_2 = arith.constant 0 : index
    %c0_3 = arith.constant 0 : index
    %5 = vector.load %arg1[%c0, %4, %c0_2, %c0_3] : memref<1x18x18x4xbf16, #tpu.memory_space<vmem>>, vector<1x16x18x4xbf16>
    %6 = arith.extf %5 : vector<1x16x18x4xbf16> to vector<1x16x18x4xf32>
    %7 = vector.extract_strided_slice %6 {offsets = [0, 0, 0, 0], sizes = [1, 16, 16, 4], strides = [1, 1, 1, 1]} : vector<1x16x18x4xf32> to vector<1x16x16x4xf32>
    %8 = vector.shape_cast %7 : vector<1x16x16x4xf32> to vector<256x4xf32>
    %9 = arith.truncf %8 : vector<256x4xf32> to vector<256x4xbf16>
    %c0_4 = arith.constant 0 : index
    %c0_5 = arith.constant 0 : index
    %c0_6 = arith.constant 0 : index
    %10 = vector.load %arg2[%c0_4, %c0_5, %c0_6] : memref<9x4x128xbf16, #tpu.memory_space<vmem>>, vector<1x4x128xbf16>
    %11 = vector.shape_cast %10 : vector<1x4x128xbf16> to vector<4x128xbf16>
    %cst_7 = arith.constant dense<0.000000e+00> : vector<256x128xf32>
    %12 = tpu.matmul %9, %11, %cst_7 {dimension_numbers = #tpu.dot_dimension_numbers<[1], [0], [0], [1], [0, 0, 1, 1], [], []>} : vector<256x4xbf16>, vector<4x128xbf16>, vector<256x128xf32> -> vector<256x128xf32>
    %13 = arith.addf %2, %12 : vector<256x128xf32>
    %14 = vector.extract_strided_slice %6 {offsets = [0, 0, 1, 0], sizes = [1, 16, 16, 4], strides = [1, 1, 1, 1]} : vector<1x16x18x4xf32> to vector<1x16x16x4xf32>
    %15 = vector.shape_cast %14 : vector<1x16x16x4xf32> to vector<256x4xf32>
    %16 = arith.truncf %15 : vector<256x4xf32> to vector<256x4xbf16>
    %c1 = arith.constant 1 : index
    %c0_8 = arith.constant 0 : index
    %c0_9 = arith.constant 0 : index
    %17 = vector.load %arg2[%c1, %c0_8, %c0_9] : memref<9x4x128xbf16, #tpu.memory_space<vmem>>, vector<1x4x128xbf16>
    %18 = vector.shape_cast %17 : vector<1x4x128xbf16> to vector<4x128xbf16>
    %cst_10 = arith.constant dense<0.000000e+00> : vector<256x128xf32>
    %19 = tpu.matmul %16, %18, %cst_10 {dimension_numbers = #tpu.dot_dimension_numbers<[1], [0], [0], [1], [0, 0, 1, 1], [], []>} : vector<256x4xbf16>, vector<4x128xbf16>, vector<256x128xf32> -> vector<256x128xf32>
    %20 = arith.addf %13, %19 : vector<256x128xf32>
    %21 = vector.extract_strided_slice %6 {offsets = [0, 0, 2, 0], sizes = [1, 16, 16, 4], strides = [1, 1, 1, 1]} : vector<1x16x18x4xf32> to vector<1x16x16x4xf32>
    %22 = vector.shape_cast %21 : vector<1x16x16x4xf32> to vector<256x4xf32>
    %23 = arith.truncf %22 : vector<256x4xf32> to vector<256x4xbf16>
    %c2 = arith.constant 2 : index
    %c0_11 = arith.constant 0 : index
    %c0_12 = arith.constant 0 : index
    %24 = vector.load %arg2[%c2, %c0_11, %c0_12] : memref<9x4x128xbf16, #tpu.memory_space<vmem>>, vector<1x4x128xbf16>
    %25 = vector.shape_cast %24 : vector<1x4x128xbf16> to vector<4x128xbf16>
    %cst_13 = arith.constant dense<0.000000e+00> : vector<256x128xf32>
    %26 = tpu.matmul %23, %25, %cst_13 {dimension_numbers = #tpu.dot_dimension_numbers<[1], [0], [0], [1], [0, 0, 1, 1], [], []>} : vector<256x4xbf16>, vector<4x128xbf16>, vector<256x128xf32> -> vector<256x128xf32>
    %27 = arith.addf %20, %26 : vector<256x128xf32>
    %c1_i32 = arith.constant 1 : i32
    %28 = arith.addi %1, %c1_i32 : i32
    %c0_14 = arith.constant 0 : index
    %29 = arith.index_cast %28 : i32 to index
    %c0_15 = arith.constant 0 : index
    %c0_16 = arith.constant 0 : index
    %30 = vector.load %arg1[%c0_14, %29, %c0_15, %c0_16] : memref<1x18x18x4xbf16, #tpu.memory_space<vmem>>, vector<1x16x18x4xbf16>
    %31 = arith.extf %30 : vector<1x16x18x4xbf16> to vector<1x16x18x4xf32>
    %32 = vector.extract_strided_slice %31 {offsets = [0, 0, 0, 0], sizes = [1, 16, 16, 4], strides = [1, 1, 1, 1]} : vector<1x16x18x4xf32> to vector<1x16x16x4xf32>
    %33 = vector.shape_cast %32 : vector<1x16x16x4xf32> to vector<256x4xf32>
    %34 = arith.truncf %33 : vector<256x4xf32> to vector<256x4xbf16>
    %c3 = arith.constant 3 : index
    %c0_17 = arith.constant 0 : index
    %c0_18 = arith.constant 0 : index
    %35 = vector.load %arg2[%c3, %c0_17, %c0_18] : memref<9x4x128xbf16, #tpu.memory_space<vmem>>, vector<1x4x128xbf16>
    %36 = vector.shape_cast %35 : vector<1x4x128xbf16> to vector<4x128xbf16>
    %cst_19 = arith.constant dense<0.000000e+00> : vector<256x128xf32>
    %37 = tpu.matmul %34, %36, %cst_19 {dimension_numbers = #tpu.dot_dimension_numbers<[1], [0], [0], [1], [0, 0, 1, 1], [], []>} : vector<256x4xbf16>, vector<4x128xbf16>, vector<256x128xf32> -> vector<256x128xf32>
    %38 = arith.addf %27, %37 : vector<256x128xf32>
    %39 = vector.extract_strided_slice %31 {offsets = [0, 0, 1, 0], sizes = [1, 16, 16, 4], strides = [1, 1, 1, 1]} : vector<1x16x18x4xf32> to vector<1x16x16x4xf32>
    %40 = vector.shape_cast %39 : vector<1x16x16x4xf32> to vector<256x4xf32>
    %41 = arith.truncf %40 : vector<256x4xf32> to vector<256x4xbf16>
    %c4 = arith.constant 4 : index
    %c0_20 = arith.constant 0 : index
    %c0_21 = arith.constant 0 : index
    %42 = vector.load %arg2[%c4, %c0_20, %c0_21] : memref<9x4x128xbf16, #tpu.memory_space<vmem>>, vector<1x4x128xbf16>
    %43 = vector.shape_cast %42 : vector<1x4x128xbf16> to vector<4x128xbf16>
    %cst_22 = arith.constant dense<0.000000e+00> : vector<256x128xf32>
    %44 = tpu.matmul %41, %43, %cst_22 {dimension_numbers = #tpu.dot_dimension_numbers<[1], [0], [0], [1], [0, 0, 1, 1], [], []>} : vector<256x4xbf16>, vector<4x128xbf16>, vector<256x128xf32> -> vector<256x128xf32>
    %45 = arith.addf %38, %44 : vector<256x128xf32>
    %46 = vector.extract_strided_slice %31 {offsets = [0, 0, 2, 0], sizes = [1, 16, 16, 4], strides = [1, 1, 1, 1]} : vector<1x16x18x4xf32> to vector<1x16x16x4xf32>
    %47 = vector.shape_cast %46 : vector<1x16x16x4xf32> to vector<256x4xf32>
    %48 = arith.truncf %47 : vector<256x4xf32> to vector<256x4xbf16>
    %c5 = arith.constant 5 : index
    %c0_23 = arith.constant 0 : index
    %c0_24 = arith.constant 0 : index
    %49 = vector.load %arg2[%c5, %c0_23, %c0_24] : memref<9x4x128xbf16, #tpu.memory_space<vmem>>, vector<1x4x128xbf16>
    %50 = vector.shape_cast %49 : vector<1x4x128xbf16> to vector<4x128xbf16>
    %cst_25 = arith.constant dense<0.000000e+00> : vector<256x128xf32>
    %51 = tpu.matmul %48, %50, %cst_25 {dimension_numbers = #tpu.dot_dimension_numbers<[1], [0], [0], [1], [0, 0, 1, 1], [], []>} : vector<256x4xbf16>, vector<4x128xbf16>, vector<256x128xf32> -> vector<256x128xf32>
    %52 = arith.addf %45, %51 : vector<256x128xf32>
    %c2_i32 = arith.constant 2 : i32
    %53 = arith.addi %1, %c2_i32 : i32
    %c0_26 = arith.constant 0 : index
    %54 = arith.index_cast %53 : i32 to index
    %c0_27 = arith.constant 0 : index
    %c0_28 = arith.constant 0 : index
    %55 = vector.load %arg1[%c0_26, %54, %c0_27, %c0_28] : memref<1x18x18x4xbf16, #tpu.memory_space<vmem>>, vector<1x16x18x4xbf16>
    %56 = arith.extf %55 : vector<1x16x18x4xbf16> to vector<1x16x18x4xf32>
    %57 = vector.extract_strided_slice %56 {offsets = [0, 0, 0, 0], sizes = [1, 16, 16, 4], strides = [1, 1, 1, 1]} : vector<1x16x18x4xf32> to vector<1x16x16x4xf32>
    %58 = vector.shape_cast %57 : vector<1x16x16x4xf32> to vector<256x4xf32>
    %59 = arith.truncf %58 : vector<256x4xf32> to vector<256x4xbf16>
    %c6 = arith.constant 6 : index
    %c0_29 = arith.constant 0 : index
    %c0_30 = arith.constant 0 : index
    %60 = vector.load %arg2[%c6, %c0_29, %c0_30] : memref<9x4x128xbf16, #tpu.memory_space<vmem>>, vector<1x4x128xbf16>
    %61 = vector.shape_cast %60 : vector<1x4x128xbf16> to vector<4x128xbf16>
    %cst_31 = arith.constant dense<0.000000e+00> : vector<256x128xf32>
    %62 = tpu.matmul %59, %61, %cst_31 {dimension_numbers = #tpu.dot_dimension_numbers<[1], [0], [0], [1], [0, 0, 1, 1], [], []>} : vector<256x4xbf16>, vector<4x128xbf16>, vector<256x128xf32> -> vector<256x128xf32>
    %63 = arith.addf %52, %62 : vector<256x128xf32>
    %64 = vector.extract_strided_slice %56 {offsets = [0, 0, 1, 0], sizes = [1, 16, 16, 4], strides = [1, 1, 1, 1]} : vector<1x16x18x4xf32> to vector<1x16x16x4xf32>
    %65 = vector.shape_cast %64 : vector<1x16x16x4xf32> to vector<256x4xf32>
    %66 = arith.truncf %65 : vector<256x4xf32> to vector<256x4xbf16>
    %c7 = arith.constant 7 : index
    %c0_32 = arith.constant 0 : index
    %c0_33 = arith.constant 0 : index
    %67 = vector.load %arg2[%c7, %c0_32, %c0_33] : memref<9x4x128xbf16, #tpu.memory_space<vmem>>, vector<1x4x128xbf16>
    %68 = vector.shape_cast %67 : vector<1x4x128xbf16> to vector<4x128xbf16>
    %cst_34 = arith.constant dense<0.000000e+00> : vector<256x128xf32>
    %69 = tpu.matmul %66, %68, %cst_34 {dimension_numbers = #tpu.dot_dimension_numbers<[1], [0], [0], [1], [0, 0, 1, 1], [], []>} : vector<256x4xbf16>, vector<4x128xbf16>, vector<256x128xf32> -> vector<256x128xf32>
    %70 = arith.addf %63, %69 : vector<256x128xf32>
    %71 = vector.extract_strided_slice %56 {offsets = [0, 0, 2, 0], sizes = [1, 16, 16, 4], strides = [1, 1, 1, 1]} : vector<1x16x18x4xf32> to vector<1x16x16x4xf32>
    %72 = vector.shape_cast %71 : vector<1x16x16x4xf32> to vector<256x4xf32>
    %73 = arith.truncf %72 : vector<256x4xf32> to vector<256x4xbf16>
    %c8 = arith.constant 8 : index
    %c0_35 = arith.constant 0 : index
    %c0_36 = arith.constant 0 : index
    %74 = vector.load %arg2[%c8, %c0_35, %c0_36] : memref<9x4x128xbf16, #tpu.memory_space<vmem>>, vector<1x4x128xbf16>
    %75 = vector.shape_cast %74 : vector<1x4x128xbf16> to vector<4x128xbf16>
    %cst_37 = arith.constant dense<0.000000e+00> : vector<256x128xf32>
    %76 = tpu.matmul %73, %75, %cst_37 {dimension_numbers = #tpu.dot_dimension_numbers<[1], [0], [0], [1], [0, 0, 1, 1], [], []>} : vector<256x4xbf16>, vector<4x128xbf16>, vector<256x128xf32> -> vector<256x128xf32>
    %77 = arith.addf %70, %76 : vector<256x128xf32>
    %cst_38 = arith.constant 0.000000e+00 : f32
    %78 = vector.broadcast %cst_38 : f32 to vector<256x128xf32>
    %79 = arith.maximumf %77, %78 : vector<256x128xf32>
    %80 = vector.shape_cast %79 : vector<256x128xf32> to vector<1x256x128xf32>
    %cst_39 = arith.constant dense<0.000000e+00> : vector<1x128xf32>
    %81 = vector.multi_reduction <add>, %80, %cst_39 [1] : vector<1x256x128xf32> to vector<1x128xf32>
    %82 = arith.addf %0, %81 : vector<1x128xf32>
    %c1_i32_40 = arith.constant 1 : i32
    %cst_41 = arith.constant 3.906250e-03 : f32
    %83 = vector.broadcast %cst_41 : f32 to vector<1x128xf32>
    %84 = arith.mulf %82, %83 : vector<1x128xf32>
    %c0_42 = arith.constant 0 : index
    %c0_43 = arith.constant 0 : index
    %c0_44 = arith.constant 0 : index
    %85 = vector.load %arg5[%c0_42, %c0_43, %c0_44] : memref<1x1x128xf32, #tpu.memory_space<vmem>>, vector<1x1x128xf32>
    %86 = vector.shape_cast %85 : vector<1x1x128xf32> to vector<1x128xf32>
    %87 = vector.shape_cast %84 : vector<1x128xf32> to vector<1x1x128xf32>
    tpu.vector_store %arg5[%c0_42, %c0_43, %c0_44], %87 {strides = array<i32>} : memref<1x1x128xf32, #tpu.memory_space<vmem>>, vector<1x1x128xf32>,
    %88 = arith.truncf %84 : vector<1x128xf32> to vector<1x128xbf16>
    %c0_45 = arith.constant 0 : index
    %c0_46 = arith.constant 0 : index
    %89 = vector.load %arg3[%c0_45, %c0_46] : memref<128x128xbf16, #tpu.memory_space<vmem>>, vector<128x128xbf16>
    %cst_47 = arith.constant dense<0.000000e+00> : vector<1x128xf32>
    %90 = tpu.matmul %88, %89, %cst_47 {dimension_numbers = #tpu.dot_dimension_numbers<[1], [0], [0], [1], [0, 0, 1, 1], [], []>} : vector<1x128xbf16>, vector<128x128xbf16>, vector<1x128xf32> -> vector<1x128xf32>
    %c0_48 = arith.constant 0 : index
    %c0_49 = arith.constant 0 : index
    %c0_50 = arith.constant 0 : index
    %91 = vector.load %arg4[%c0_48, %c0_49, %c0_50] : memref<1x1x128xf32, #tpu.memory_space<vmem>>, vector<1x1x128xf32>
    %92 = vector.shape_cast %91 : vector<1x1x128xf32> to vector<1x128xf32>
    %93 = vector.shape_cast %90 : vector<1x128xf32> to vector<1x1x128xf32>
    tpu.vector_store %arg4[%c0_48, %c0_49, %c0_50], %93 {strides = array<i32>} : memref<1x1x128xf32, #tpu.memory_space<vmem>>, vector<1x1x128xf32>,
    return
  }
  func.func @transform_0(%arg0: i32) -> (i32, i32, i32, i32) {
    %c0_i32 = arith.constant 0 : i32
    %c0_i32_0 = arith.constant 0 : i32
    %c0_i32_1 = arith.constant 0 : i32
    %c0_i32_2 = arith.constant 0 : i32
    return %arg0, %c0_i32, %c0_i32_0, %c0_i32_1 : i32, i32, i32, i32
  }
  func.func @transform_1(%arg0: i32) -> (i32, i32, i32) {
    %c0_i32 = arith.constant 0 : i32
    %c0_i32_0 = arith.constant 0 : i32
    %c0_i32_1 = arith.constant 0 : i32
    %c0_i32_2 = arith.constant 0 : i32
    return %c0_i32, %c0_i32_0, %c0_i32_1 : i32, i32, i32
  }
  func.func @transform_2(%arg0: i32) -> (i32, i32) {
    %c0_i32 = arith.constant 0 : i32
    %c0_i32_0 = arith.constant 0 : i32
    %c0_i32_1 = arith.constant 0 : i32
    return %c0_i32, %c0_i32_0 : i32, i32
  }
  func.func @transform_3(%arg0: i32) -> (i32, i32, i32) {
    %c0_i32 = arith.constant 0 : i32
    %c0_i32_0 = arith.constant 0 : i32
    %c0_i32_1 = arith.constant 0 : i32
    return %arg0, %c0_i32, %c0_i32_0 : i32, i32, i32
  }
  func.func @transform_4(%arg0: i32) -> (i32, i32, i32) {
    %c0_i32 = arith.constant 0 : i32
    %c0_i32_0 = arith.constant 0 : i32
    %c0_i32_1 = arith.constant 0 : i32
    return %arg0, %c0_i32, %c0_i32_0 : i32, i32, i32
  }
}

</mosaic_0001>

<llo_original>
// kernel: incremental_net_forward.1
$region0: #{incremental_net_forward.1}
  #allocation0 [shape = 'u32[]', space=smem, size = 0x4, offset = 0x4, fixed_abs, tag = 'smem constant byte address 0x4 - core index']
  #allocation1 [shape = 'u32[144,128]{1,0:T(1,128)}', space=vmem, size = 0x12000, scoped, tag = 'internal scratch']
  %s0 = inlined_call_operand.vmem [shape: bf16[2,18,18,4], index: 0, kind: input, shape index: {}]
  %s1 = inlined_call_operand.vmem [shape: bf16[9,4,128], index: 1, kind: input, shape index: {}]
  %s2 = inlined_call_operand.vmem [shape: bf16[128,128], index: 2, kind: input, shape index: {}]
  %s3 = inlined_call_operand.hbm [shape: f32[2,1,128], index: 3, kind: output, shape index: {0}]
  %s4 = inlined_call_operand.hbm [shape: f32[2,1,128], index: 4, kind: output, shape index: {1}]
  %5 = xla_tuple %s3, %s4
  %s6 = sld [smem:[#allocation0]]
  $region53: #{incremental_net_forward.1} parent=0
    _
  %s8 = ssub.s32 1, %s6
  %s9 = scalar_select 0, %s8, %s6
  $region1: #{incremental_net_forward.1} parent=0
    #allocation2 [shape = 'u8[1024]{0}', space=vmem, size = 0x400, scoped, tag = 'output window, operand 0']
    #allocation3 [shape = 's32[2]{0}', space=sflag, size = 0x8, scoped, tag = 'scoped memory for incremental_net_forward.1']
    #allocation4 [shape = 'u8[1024]{0}', space=vmem, size = 0x400, scoped, tag = 'output window, operand 1']
    #allocation5 [shape = 's32[2]{0}', space=sflag, size = 0x8, scoped, tag = 'scoped memory for incremental_net_forward.1']
    %10 = vsyncpa [#allocation3], 0
    %s11 = scalar_lea.sflag [#allocation3], 1
    %12 = vsyncpa %s11, 0
    %13 = vsyncpa [#allocation5], 0
    %s14 = scalar_lea.sflag [#allocation5], 1
    %15 = vsyncpa %s14, 0
    loop: start=0, step=1, limit=4
    $region2: #{incremental_net_forward.1} parent=1 // loop_pre_header
      _
    $region3: #{incremental_net_forward.1} parent=1 // loop_header
      %s17 = sphi 0, %s21
      %p18 = scmp.ge.s32.totalorder %s17, 4
      %s27 = sphi 0, %s29
      %s30 = sphi 0, %s27
      %s31 = sphi 0, %s30
      %s47 = sphi 0, %s31
      %s51 = sphi 0, %s51
      %s53 = sphi 0, %s51
      %s54 = sphi 0, %s53
      %s68 = sphi 0, %s54
      %s72 = sphi 0, %s72
      %s74 = sphi 0, %s72
      %s75 = sphi 0, %s74
      %s89 = sphi 0, %s75
      %s95 = sphi 0, %s97
      %s98 = sphi 0, %s95
      %s99 = sphi 0, %s98
      %s115 = sphi 0, %s99
      %s121 = sphi 0, %s123
      %s124 = sphi 0, %s121
      %s125 = sphi 0, %s124
      %s141 = sphi 0, %s125
    $region4: #{incremental_net_forward.1} parent=1 // loop_header_branch
      %20 = sbr.rel (%p18) target = $region8
    $region5: #{incremental_net_forward.1} parent=1 // loop_body
      %s22 = ssub.s32 %s17, 1
      %s23 = ssub.s32 %s17, 2
      %s24 = sadd.s32 %s17, 1
      %s25 = ssub.s32 %s17, %s24
      %p26 = scmp.eq.s32.totalorder %s25, 0
      %s28 = sadd.s32 %s27, 1
      %s29 = scalar_select %p26, %s27, %s28
      %p32 = pneg %p26
      %p33 = scmp.eq.s32.totalorder %s17, 1
      %p34 = por %p32, %p33
      %p35 = scmp.ne.s32.totalorder %s27, %s30
      %p36 = scmp.eq.s32.totalorder %s17, 0
      %p37 = por %p35, %p36
      %p38 = scmp.ne.s32.totalorder %s27, %s30
      %p39 = scmp.eq.s32.totalorder %s22, 1
      %p40 = por %p38, %p39
      %p41 = scmp.ne.s32.totalorder %s30, %s31
      %p42 = scmp.eq.s32.totalorder %s22, 0
      %p43 = por %p41, %p42
      %p44 = scmp.ne.s32.totalorder %s30, %s31
      %p45 = scmp.eq.s32.totalorder %s23, 1
      %p46 = por %p44, %p45
      %p48 = scmp.ne.s32.totalorder %s31, %s47
      %p49 = scmp.eq.s32.totalorder %s23, 0
      %p50 = por %p48, %p49
      %s52 = sadd.s32 %s51, 1
      %p55 = scmp.eq.s32.totalorder %s17, 1
      %p56 = scmp.ne.s32.totalorder %s51, %s53
      %p57 = scmp.eq.s32.totalorder %s17, 0
      %p58 = por %p56, %p57
      %p59 = scmp.ne.s32.totalorder %s51, %s53
      %p60 = scmp.eq.s32.totalorder %s22, 1
      %p61 = por %p59, %p60
      %p62 = scmp.ne.s32.totalorder %s53, %s54
      %p63 = scmp.eq.s32.totalorder %s22, 0
      %p64 = por %p62, %p63
      %p65 = scmp.ne.s32.totalorder %s53, %s54
      %p66 = scmp.eq.s32.totalorder %s23, 1
      %p67 = por %p65, %p66
      %p69 = scmp.ne.s32.totalorder %s54, %s68
      %p70 = scmp.eq.s32.totalorder %s23, 0
      %p71 = por %p69, %p70
      %s73 = sadd.s32 %s72, 1
      %p76 = scmp.eq.s32.totalorder %s17, 1
      %p77 = scmp.ne.s32.totalorder %s72, %s74
      %p78 = scmp.eq.s32.totalorder %s17, 0
      %p79 = por %p77, %p78
      %p80 = scmp.ne.s32.totalorder %s72, %s74
      %p81 = scmp.eq.s32.totalorder %s22, 1
      %p82 = por %p80, %p81
      %p83 = scmp.ne.s32.totalorder %s74, %s75
      %p84 = scmp.eq.s32.totalorder %s22, 0
      %p85 = por %p83, %p84
      %p86 = scmp.ne.s32.totalorder %s74, %s75
      %p87 = scmp.eq.s32.totalorder %s23, 1
      %p88 = por %p86, %p87
      %p90 = scmp.ne.s32.totalorder %s75, %s89
      %p91 = scmp.eq.s32.totalorder %s23, 0
      %p92 = por %p90, %p91
      %s93 = ssub.s32 %s17, %s24
      %p94 = scmp.eq.s32.totalorder %s93, 0
      %s96 = sadd.s32 %s95, 1
      %s97 = scalar_select %p94, %s95, %s96
      %p100 = pneg %p94
      %p101 = scmp.eq.s32.totalorder %s17, 1
      %p102 = por %p100, %p101
      %p103 = scmp.ne.s32.totalorder %s95, %s98
      %p104 = scmp.eq.s32.totalorder %s17, 0
      %p105 = por %p103, %p104
      %p106 = scmp.ne.s32.totalorder %s95, %s98
      %p107 = scmp.eq.s32.totalorder %s22, 1
      %p108 = por %p106, %p107
      %p109 = scmp.ne.s32.totalorder %s98, %s99
      %p110 = scmp.eq.s32.totalorder %s22, 0
      %p111 = por %p109, %p110
      %p112 = scmp.ne.s32.totalorder %s98, %s99
      %p113 = scmp.eq.s32.totalorder %s23, 1
      %p114 = por %p112, %p113
      %p116 = scmp.ne.s32.totalorder %s99, %s115
      %p117 = scmp.eq.s32.totalorder %s23, 0
      %p118 = por %p116, %p117
      %s119 = ssub.s32 %s17, %s24
      %p120 = scmp.eq.s32.totalorder %s119, 0
      %s122 = sadd.s32 %s121, 1
      %s123 = scalar_select %p120, %s121, %s122
      %p126 = pneg %p120
      %p127 = scmp.eq.s32.totalorder %s17, 1
      %p128 = por %p126, %p127
      %p129 = scmp.ne.s32.totalorder %s121, %s124
      %p130 = scmp.eq.s32.totalorder %s17, 0
      %p131 = por %p129, %p130
      %p132 = scmp.ne.s32.totalorder %s121, %s124
      %p133 = scmp.eq.s32.totalorder %s22, 1
      %p134 = por %p132, %p133
      %p135 = scmp.ne.s32.totalorder %s124, %s125
      %p136 = scmp.eq.s32.totalorder %s22, 0
      %p137 = por %p135, %p136
      %p138 = scmp.ne.s32.totalorder %s124, %s125
      %p139 = scmp.eq.s32.totalorder %s23, 1
      %p140 = por %p138, %p139
      %p142 = scmp.ne.s32.totalorder %s125, %s141
      %p143 = scmp.eq.s32.totalorder %s23, 0
      %p144 = por %p142, %p143
      %p145 = scmp.le.s32.totalorder 1, %s17
      %p146 = scmp.lt.s32.totalorder %s17, 3
      %p147 = pnand %p145, %p146
      %p148 = pneg %p147
      // Predicated region
      $region9: #{incremental_net_forward.1} parent=5 // pred_check
        _
      $region10: #{incremental_net_forward.1} parent=5 // pred_check_branch
        %150 = sbr.rel (%p147) target = $region12
      $region11: #{incremental_net_forward.1} parent=5 // pred_region
        %s151 = ssub.s32 %s17, 1
        // Predicated region
        $region13: #{incremental_net_forward.1} parent=11 // pred_check
          %p152 = pneg %p64
        $region14: #{incremental_net_forward.1} parent=11 // pred_check_branch
          %154 = sbr.rel (%p152) target = $region16
        $region15: #{incremental_net_forward.1} parent=11 // pred_region
          _
        $region16: #{incremental_net_forward.1} parent=11 // pred_fallthru
          _
        // Predicated region
        $region17: #{incremental_net_forward.1} parent=11 // pred_check
          %p155 = pneg %p85
        $region18: #{incremental_net_forward.1} parent=11 // pred_check_branch
          %157 = sbr.rel (%p155) target = $region20
        $region19: #{incremental_net_forward.1} parent=11 // pred_region
          _
        $region20: #{incremental_net_forward.1} parent=11 // pred_fallthru
          _
      $region12: #{incremental_net_forward.1} parent=5 // pred_fallthru
        _
      %p158 = scmp.lt.s32.totalorder %s17, 2
      // Predicated region
      $region21: #{incremental_net_forward.1} parent=5 // pred_check
        %p159 = pneg %p158
      $region22: #{incremental_net_forward.1} parent=5 // pred_check_branch
        %161 = sbr.rel (%p159) target = $region24
      $region23: #{incremental_net_forward.1} parent=5 // pred_region
        // Predicated region
        $region25: #{incremental_net_forward.1} parent=23 // pred_check
          %p162 = pneg %p37
        $region26: #{incremental_net_forward.1} parent=23 // pred_check_branch
          %164 = sbr.rel (%p162) target = $region28
        $region27: #{incremental_net_forward.1} parent=23 // pred_region
          %p165 = scmp.lt.s32.totalorder %s17, 1
          %s166 = scalar_select %p165, %s17, 1
          %s167 = smul.addr %s166, 54
          %s168 = smul.addr %s167, 4
          %s169 = scalar_lea.vmem %s0, %s168
        $region28: #{incremental_net_forward.1} parent=23 // pred_fallthru
          _
      $region24: #{incremental_net_forward.1} parent=5 // pred_fallthru
        _
      %p170 = scmp.le.s32.totalorder 1, %s17
      %p171 = scmp.lt.s32.totalorder %s17, 3
      %p172 = pnand %p170, %p171
      %p173 = pneg %p172
      // Predicated region
      $region29: #{incremental_net_forward.1} parent=5 // pred_check
        _
      $region30: #{incremental_net_forward.1} parent=5 // pred_check_branch
        %175 = sbr.rel (%p172) target = $region32
      $region31: #{incremental_net_forward.1} parent=5 // pred_region
        %s176 = ssub.s32 %s17, 1
        %p177 = scmp.lt.s32.totalorder %s22, 1
        %s178 = scalar_select %p177, %s22, 1
        %s179 = smul.addr %s178, 54
        %s180 = smul.addr %s179, 4
        %s181 = scalar_lea.vmem %s0, %s180
        %p182 = pneg %p43
        %p183 = pneg %p40
        %p184 = pneg %p64
        %p185 = pneg %p61
        %p186 = pneg %p85
        %p187 = pneg %p82
        %p188 = pneg %p111
        %p189 = pneg %p108
        %s190 = sand.u32 %s98, 1
        %s191 = scalar_lea.sflag [#allocation3], %s190
        %s192 = sand.u32 %s98, 1
        %s193 = scalar_lea.vmem [#allocation2], %s192
        %p194 = pneg %p137
        %p195 = pneg %p134
        %s196 = sand.u32 %s124, 1
        %s197 = scalar_lea.sflag [#allocation5], %s196
        %s198 = sand.u32 %s124, 1
        %s199 = scalar_lea.vmem [#allocation4], %s198
        %p200 = scmp.lt.s32.totalorder %s22, 1
        %s201 = scalar_select %p200, %s22, 1
        %s202 = smul.addr %s201, 54
        %s203 = smul.addr %s202, 4
        %s204 = scalar_lea.vmem %s0, %s203
        %v206 = vld [vmem:[%s204] sm:$0xf]
        %v207 = vld [vmem:[%s204 + $0x4] sm:$0xf]
        %v208 = vld [vmem:[%s204 + $0x8] sm:$0x1]
        %v209 = vld [vmem:[%s204 + $0xc] sm:$0xf]
        %v210 = vld [vmem:[%s204 + $0x10] sm:$0xf]
        %v211 = vld [vmem:[%s204 + $0x14] sm:$0x1]
        %v212 = vld [vmem:[%s204 + $0x18] sm:$0xf]
        %v213 = vld [vmem:[%s204 + $0x1c] sm:$0xf]
        %v214 = vld [vmem:[%s204 + $0x20] sm:$0x1]
        %v215 = vld [vmem:[%s204 + $0x24] sm:$0xf]
        %v216 = vld [vmem:[%s204 + $0x28] sm:$0xf]
        %v217 = vld [vmem:[%s204 + $0x2c] sm:$0x1]
        %v218 = vld [vmem:[%s204 + $0x30] sm:$0xf]
        %v219 = vld [vmem:[%s204 + $0x34] sm:$0xf]
        %v220 = vld [vmem:[%s204 + $0x38] sm:$0x1]
        %v221 = vld [vmem:[%s204 + $0x3c] sm:$0xf]
        %v222 = vld [vmem:[%s204 + $0x40] sm:$0xf]
        %v223 = vld [vmem:[%s204 + $0x44] sm:$0x1]
        %v224 = vld [vmem:[%s204 + $0x48] sm:$0xf]
        %v225 = vld [vmem:[%s204 + $0x4c] sm:$0xf]
        %v226 = vld [vmem:[%s204 + $0x50] sm:$0x1]
        %v227 = vld [vmem:[%s204 + $0x54] sm:$0xf]
        %v228 = vld [vmem:[%s204 + $0x58] sm:$0xf]
        %v229 = vld [vmem:[%s204 + $0x5c] sm:$0x1]
        %v230 = vld [vmem:[%s204 + $0x60] sm:$0xf]
        %v231 = vld [vmem:[%s204 + $0x64] sm:$0xf]
        %v232 = vld [vmem:[%s204 + $0x68] sm:$0x1]
        %v233 = vld [vmem:[%s204 + $0x6c] sm:$0xf]
        %v234 = vld [vmem:[%s204 + $0x70] sm:$0xf]
        %v235 = vld [vmem:[%s204 + $0x74] sm:$0x1]
        %v236 = vld [vmem:[%s204 + $0x78] sm:$0xf]
        %v237 = vld [vmem:[%s204 + $0x7c] sm:$0xf]
        %v238 = vld [vmem:[%s204 + $0x80] sm:$0x1]
        %v239 = vld [vmem:[%s204 + $0x84] sm:$0xf]
        %v240 = vld [vmem:[%s204 + $0x88] sm:$0xf]
        %v241 = vld [vmem:[%s204 + $0x8c] sm:$0x1]
        %v242 = vld [vmem:[%s204 + $0x90] sm:$0xf]
        %v243 = vld [vmem:[%s204 + $0x94] sm:$0xf]
        %v244 = vld [vmem:[%s204 + $0x98] sm:$0x1]
        %v245 = vld [vmem:[%s204 + $0x9c] sm:$0xf]
        %v246 = vld [vmem:[%s204 + $0xa0] sm:$0xf]
        %v247 = vld [vmem:[%s204 + $0xa4] sm:$0x1]
        %v248 = vld [vmem:[%s204 + $0xa8] sm:$0xf]
        %v249 = vld [vmem:[%s204 + $0xac] sm:$0xf]
        %v250 = vld [vmem:[%s204 + $0xb0] sm:$0x1]
        %v251 = vld [vmem:[%s204 + $0xb4] sm:$0xf]
        %v252 = vld [vmem:[%s204 + $0xb8] sm:$0xf]
        %v253 = vld [vmem:[%s204 + $0xbc] sm:$0x1]
        %v254 = vunpack.c.l.bf16 %v206
        %v255 = vunpack.c.l.bf16 %v207
        %v256 = vunpack.c.l.bf16 %v208
        %v257 = vunpack.c.l.bf16 %v209
        %v258 = vunpack.c.l.bf16 %v210
        %v259 = vunpack.c.l.bf16 %v211
        %v260 = vunpack.c.l.bf16 %v212
        %v261 = vunpack.c.l.bf16 %v213
        %v262 = vunpack.c.l.bf16 %v214
        %v263 = vunpack.c.l.bf16 %v215
        %v264 = vunpack.c.l.bf16 %v216
        %v265 = vunpack.c.l.bf16 %v217
        %v266 = vunpack.c.l.bf16 %v218
        %v267 = vunpack.c.l.bf16 %v219
        %v268 = vunpack.c.l.bf16 %v220
        %v269 = vunpack.c.l.bf16 %v221
        %v270 = vunpack.c.l.bf16 %v222
        %v271 = vunpack.c.l.bf16 %v223
        %v272 = vunpack.c.l.bf16 %v224
        %v273 = vunpack.c.l.bf16 %v225
        %v274 = vunpack.c.l.bf16 %v226
        %v275 = vunpack.c.l.bf16 %v227
        %v276 = vunpack.c.l.bf16 %v228
        %v277 = vunpack.c.l.bf16 %v229
        %v278 = vunpack.c.l.bf16 %v230
        %v279 = vunpack.c.l.bf16 %v231
        %v280 = vunpack.c.l.bf16 %v232
        %v281 = vunpack.c.l.bf16 %v233
        %v282 = vunpack.c.l.bf16 %v234
        %v283 = vunpack.c.l.bf16 %v235
        %v284 = vunpack.c.l.bf16 %v236
        %v285 = vunpack.c.l.bf16 %v237
        %v286 = vunpack.c.l.bf16 %v238
        %v287 = vunpack.c.l.bf16 %v239
        %v288 = vunpack.c.l.bf16 %v240
        %v289 = vunpack.c.l.bf16 %v241
        %v290 = vunpack.c.l.bf16 %v242
        %v291 = vunpack.c.l.bf16 %v243
        %v292 = vunpack.c.l.bf16 %v244
        %v293 = vunpack.c.l.bf16 %v245
        %v294 = vunpack.c.l.bf16 %v246
        %v295 = vunpack.c.l.bf16 %v247
        %v296 = vunpack.c.l.bf16 %v248
        %v297 = vunpack.c.l.bf16 %v249
        %v298 = vunpack.c.l.bf16 %v250
        %v299 = vunpack.c.l.bf16 %v251
        %v300 = vunpack.c.l.bf16 %v252
        %v301 = vunpack.c.l.bf16 %v253
        %v302 = vpack.c.bf16 %v255, %v254
        %v303 = vpack.c.bf16 %v258, %v257
        %v304 = vpack.c.bf16 %v261, %v260
        %v305 = vpack.c.bf16 %v264, %v263
        %v306 = vpack.c.bf16 %v267, %v266
        %v307 = vpack.c.bf16 %v270, %v269
        %v308 = vpack.c.bf16 %v273, %v272
        %v309 = vpack.c.bf16 %v276, %v275
        %v310 = vpack.c.bf16 %v279, %v278
        %v311 = vpack.c.bf16 %v282, %v281
        %v312 = vpack.c.bf16 %v285, %v284
        %v313 = vpack.c.bf16 %v288, %v287
        %v314 = vpack.c.bf16 %v291, %v290
        %v315 = vpack.c.bf16 %v294, %v293
        %v316 = vpack.c.bf16 %v297, %v296
        %v317 = vpack.c.bf16 %v300, %v299
        %v318 = vld [vmem:[%s1] sm:$0x3]
        %vm367 = vcmask 1046528
        %v368 = vrot.slane %v254, 1
        %v369 = vrot.slane %v255, 1
        %v370 = vsel %vm367, %v368, %v369
        %v371 = vrot.slane %v256, 1
        %v372 = vsel %vm367, %v369, %v371
        %v373 = vrot.slane %v257, 1
        %v374 = vrot.slane %v258, 1
        %v375 = vsel %vm367, %v373, %v374
        %v376 = vrot.slane %v259, 1
        %v377 = vsel %vm367, %v374, %v376
        %v378 = vrot.slane %v260, 1
        %v379 = vrot.slane %v261, 1
        %v380 = vsel %vm367, %v378, %v379
        %v381 = vrot.slane %v262, 1
        %v382 = vsel %vm367, %v379, %v381
        %v383 = vrot.slane %v263, 1
        %v384 = vrot.slane %v264, 1
        %v385 = vsel %vm367, %v383, %v384
        %v386 = vrot.slane %v265, 1
        %v387 = vsel %vm367, %v384, %v386
        %v388 = vrot.slane %v266, 1
        %v389 = vrot.slane %v267, 1
        %v390 = vsel %vm367, %v388, %v389
        %v391 = vrot.slane %v268, 1
        %v392 = vsel %vm367, %v389, %v391
        %v393 = vrot.slane %v269, 1
        %v394 = vrot.slane %v270, 1
        %v395 = vsel %vm367, %v393, %v394
        %v396 = vrot.slane %v271, 1
        %v397 = vsel %vm367, %v394, %v396
        %v398 = vrot.slane %v272, 1
        %v399 = vrot.slane %v273, 1
        %v400 = vsel %vm367, %v398, %v399
        %v401 = vrot.slane %v274, 1
        %v402 = vsel %vm367, %v399, %v401
        %v403 = vrot.slane %v275, 1
        %v404 = vrot.slane %v276, 1
        %v405 = vsel %vm367, %v403, %v404
        %v406 = vrot.slane %v277, 1
        %v407 = vsel %vm367, %v404, %v406
        %v408 = vrot.slane %v278, 1
        %v409 = vrot.slane %v279, 1
        %v410 = vsel %vm367, %v408, %v409
        %v411 = vrot.slane %v280, 1
        %v412 = vsel %vm367, %v409, %v411
        %v413 = vrot.slane %v281, 1
        %v414 = vrot.slane %v282, 1
        %v415 = vsel %vm367, %v413, %v414
        %v416 = vrot.slane %v283, 1
        %v417 = vsel %vm367, %v414, %v416
        %v418 = vrot.slane %v284, 1
        %v419 = vrot.slane %v285, 1
        %v420 = vsel %vm367, %v418, %v419
        %v421 = vrot.slane %v286, 1
        %v422 = vsel %vm367, %v419, %v421
        %v423 = vrot.slane %v287, 1
        %v424 = vrot.slane %v288, 1
        %v425 = vsel %vm367, %v423, %v424
        %v426 = vrot.slane %v289, 1
        %v427 = vsel %vm367, %v424, %v426
        %v428 = vrot.slane %v290, 1
        %v429 = vrot.slane %v291, 1
        %v430 = vsel %vm367, %v428, %v429
        %v431 = vrot.slane %v292, 1
        %v432 = vsel %vm367, %v429, %v431
        %v433 = vrot.slane %v293, 1
        %v434 = vrot.slane %v294, 1
        %v435 = vsel %vm367, %v433, %v434
        %v436 = vrot.slane %v295, 1
        %v437 = vsel %vm367, %v434, %v436
        %v438 = vrot.slane %v296, 1
        %v439 = vrot.slane %v297, 1
        %v440 = vsel %vm367, %v438, %v439
        %v441 = vrot.slane %v298, 1
        %v442 = vsel %vm367, %v439, %v441
        %v443 = vrot.slane %v299, 1
        %v444 = vrot.slane %v300, 1
        %v445 = vsel %vm367, %v443, %v444
        %v446 = vrot.slane %v301, 1
        %v447 = vsel %vm367, %v444, %v446
        %v480 = vpack.c.bf16 %v372, %v370
        %v481 = vpack.c.bf16 %v377, %v375
        %v482 = vpack.c.bf16 %v382, %v380
        %v483 = vpack.c.bf16 %v387, %v385
        %v484 = vpack.c.bf16 %v392, %v390
        %v485 = vpack.c.bf16 %v397, %v395
        %v486 = vpack.c.bf16 %v402, %v400
        %v487 = vpack.c.bf16 %v407, %v405
        %v488 = vpack.c.bf16 %v412, %v410
        %v489 = vpack.c.bf16 %v417, %v415
        %v490 = vpack.c.bf16 %v422, %v420
        %v491 = vpack.c.bf16 %v427, %v425
        %v492 = vpack.c.bf16 %v432, %v430
        %v493 = vpack.c.bf16 %v437, %v435
        %v494 = vpack.c.bf16 %v442, %v440
        %v495 = vpack.c.bf16 %v447, %v445
        %s496 = scalar_lea.vmem %s1, 2
        %v497 = vld [vmem:[%s496] sm:$0x3]
        %vm498 = vcmask 31744
        %v500 = vsel %vm498, %v480, 0
        %v503 = vsel %vm498, %v481, 0
        %v506 = vsel %vm498, %v482, 0
        %v509 = vsel %vm498, %v483, 0
        %v512 = vsel %vm498, %v484, 0
        %v515 = vsel %vm498, %v485, 0
        %v518 = vsel %vm498, %v486, 0
        %v521 = vsel %vm498, %v487, 0
        %v524 = vsel %vm498, %v488, 0
        %v527 = vsel %vm498, %v489, 0
        %v530 = vsel %vm498, %v490, 0
        %v533 = vsel %vm498, %v491, 0
        %v536 = vsel %vm498, %v492, 0
        %v539 = vsel %vm498, %v493, 0
        %v542 = vsel %vm498, %v494, 0
        %v545 = vsel %vm498, %v495, 0
        %vm547 = vcmask 1041408
        %v549 = vsel %vm547, %v497, 0
        %551 = vmatprep.subr.bf16.mxu0 0
        %552 = vmatpush1.bf16.msra.mxu0 %v549
        %553 = vmatprep.subr.bf16.mxu0 0
        %554 = vmatpush1.bf16.msra.mxu0 0
        %555 = vmatprep.subr.bf16.mxu0 0
        %556 = vmatpush1.bf16.msra.mxu0 0
        %557 = vmatprep.subr.bf16.mxu0 0
        %558 = vmatpush1.bf16.msra.mxu0 0
        %559 = vmatprep.subr.bf16.mxu0 0
        %560 = vmatpush1.bf16.msra.mxu0 0
        %561 = vmatprep.subr.bf16.mxu0 0
        %562 = vmatpush1.bf16.msra.mxu0 0
        %563 = vmatprep.subr.bf16.mxu0 0
        %564 = vmatpush1.bf16.msra.mxu0 0
        %565 = vmatprep.subr.bf16.mxu0 0
        %566 = vmatpush1.bf16.msra.mxu0 0
        %567 = vmatprep.subr.bf16.mxu0 0
        %568 = vmatpush1.bf16.msra.mxu0 0
        %569 = vmatprep.subr.bf16.mxu0 0
        %570 = vmatpush1.bf16.msra.mxu0 0
        %571 = vmatprep.subr.bf16.mxu0 0
        %572 = vmatpush1.bf16.msra.mxu0 0
        %573 = vmatprep.subr.bf16.mxu0 0
        %574 = vmatpush1.bf16.msra.mxu0 0
        %575 = vmatprep.subr.bf16.mxu0 0
        %576 = vmatpush1.bf16.msra.mxu0 0
        %577 = vmatprep.subr.bf16.mxu0 0
        %578 = vmatpush1.bf16.msra.mxu0 0
        %579 = vmatprep.subr.bf16.mxu0 0
        %580 = vmatpush1.bf16.msra.mxu0 0
        %581 = vmatprep.subr.bf16.mxu0 0
        %582 = vmatpush1.bf16.msra.mxu0 0
        %583 = vmatprep.mubr.bf16.mxu0 0
        %584 = vmatmul.mubr.bf16.gmra.mrb[0].mxu0 %v500
        %v585 = vpop.f32.mrb[0].mxu0
        %v586 = vadd.f32 0.0, %v585
        %v587 = vpop.f32.mrb[0].mxu0
        %v588 = vpop.f32.mrb[0].mxu0
        %v589 = vadd.f32 0.0, %v588
        %v590 = vpop.f32.mrb[0].mxu0
        %591 = vmatprep.mubr.bf16.mxu0 0
        %592 = vmatmul.mubr.bf16.gmra.mrb[0].mxu0 %v503
        %v593 = vpop.f32.mrb[0].mxu0
        %v594 = vadd.f32 0.0, %v593
        %v595 = vpop.f32.mrb[0].mxu0
        %v596 = vpop.f32.mrb[0].mxu0
        %v597 = vadd.f32 0.0, %v596
        %v598 = vpop.f32.mrb[0].mxu0
        %599 = vmatprep.mubr.bf16.mxu0 0
        %600 = vmatmul.mubr.bf16.gmra.mrb[0].mxu0 %v506
        %v601 = vpop.f32.mrb[0].mxu0
        %v602 = vadd.f32 0.0, %v601
        %v603 = vpop.f32.mrb[0].mxu0
        %v604 = vpop.f32.mrb[0].mxu0
        %v605 = vadd.f32 0.0, %v604
        %v606 = vpop.f32.mrb[0].mxu0
        %607 = vmatprep.mubr.bf16.mxu0 0
        %608 = vmatmul.mubr.bf16.gmra.mrb[0].mxu0 %v509
        %v609 = vpop.f32.mrb[0].mxu0
        %v610 = vadd.f32 0.0, %v609
        %v611 = vpop.f32.mrb[0].mxu0
        %v612 = vpop.f32.mrb[0].mxu0
        %v613 = vadd.f32 0.0, %v612
        %v614 = vpop.f32.mrb[0].mxu0
        %615 = vmatprep.mubr.bf16.mxu0 0
        %616 = vmatmul.mubr.bf16.gmra.mrb[0].mxu0 %v512
        %v617 = vpop.f32.mrb[0].mxu0
        %v618 = vadd.f32 0.0, %v617
        %v619 = vpop.f32.mrb[0].mxu0
        %v620 = vpop.f32.mrb[0].mxu0
        %v621 = vadd.f32 0.0, %v620
        %v622 = vpop.f32.mrb[0].mxu0
        %623 = vmatprep.mubr.bf16.mxu0 0
        %624 = vmatmul.mubr.bf16.gmra.mrb[0].mxu0 %v515
        %v625 = vpop.f32.mrb[0].mxu0
        %v626 = vadd.f32 0.0, %v625
        %v627 = vpop.f32.mrb[0].mxu0
        %v628 = vpop.f32.mrb[0].mxu0
        %v629 = vadd.f32 0.0, %v628
        %v630 = vpop.f32.mrb[0].mxu0
        %631 = vmatprep.mubr.bf16.mxu0 0
        %632 = vmatmul.mubr.bf16.gmra.mrb[0].mxu0 %v518
        %v633 = vpop.f32.mrb[0].mxu0
        %v634 = vadd.f32 0.0, %v633
        %v635 = vpop.f32.mrb[0].mxu0
        %v636 = vpop.f32.mrb[0].mxu0
        %v637 = vadd.f32 0.0, %v636
        %v638 = vpop.f32.mrb[0].mxu0
        %639 = vmatprep.mubr.bf16.mxu0 0
        %640 = vmatmul.mubr.bf16.gmra.mrb[0].mxu0 %v521
        %v641 = vpop.f32.mrb[0].mxu0
        %v642 = vadd.f32 0.0, %v641
        %v643 = vpop.f32.mrb[0].mxu0
        %v644 = vpop.f32.mrb[0].mxu0
        %v645 = vadd.f32 0.0, %v644
        %v646 = vpop.f32.mrb[0].mxu0
        %647 = vmatprep.mubr.bf16.mxu0 0
        %648 = vmatmul.mubr.bf16.gmra.mrb[0].mxu0 %v524
        %v649 = vpop.f32.mrb[0].mxu0
        %v650 = vadd.f32 0.0, %v649
        %v651 = vpop.f32.mrb[0].mxu0
        %v652 = vpop.f32.mrb[0].mxu0
        %v653 = vadd.f32 0.0, %v652
        %v654 = vpop.f32.mrb[0].mxu0
        %655 = vmatprep.mubr.bf16.mxu0 0
        %656 = vmatmul.mubr.bf16.gmra.mrb[0].mxu0 %v527
        %v657 = vpop.f32.mrb[0].mxu0
        %v658 = vadd.f32 0.0, %v657
        %v659 = vpop.f32.mrb[0].mxu0
        %v660 = vpop.f32.mrb[0].mxu0
        %v661 = vadd.f32 0.0, %v660
        %v662 = vpop.f32.mrb[0].mxu0
        %663 = vmatprep.mubr.bf16.mxu0 0
        %664 = vmatmul.mubr.bf16.gmra.mrb[0].mxu0 %v530
        %v665 = vpop.f32.mrb[0].mxu0
        %v666 = vadd.f32 0.0, %v665
        %v667 = vpop.f32.mrb[0].mxu0
        %v668 = vpop.f32.mrb[0].mxu0
        %v669 = vadd.f32 0.0, %v668
        %v670 = vpop.f32.mrb[0].mxu0
        %671 = vmatprep.mubr.bf16.mxu0 0
        %672 = vmatmul.mubr.bf16.gmra.mrb[0].mxu0 %v533
        %v673 = vpop.f32.mrb[0].mxu0
        %v674 = vadd.f32 0.0, %v673
        %v675 = vpop.f32.mrb[0].mxu0
        %v676 = vpop.f32.mrb[0].mxu0
        %v677 = vadd.f32 0.0, %v676
        %v678 = vpop.f32.mrb[0].mxu0
        %679 = vmatprep.mubr.bf16.mxu0 0
        %680 = vmatmul.mubr.bf16.gmra.mrb[0].mxu0 %v536
        %v681 = vpop.f32.mrb[0].mxu0
        %v682 = vadd.f32 0.0, %v681
        %v683 = vpop.f32.mrb[0].mxu0
        %v684 = vpop.f32.mrb[0].mxu0
        %v685 = vadd.f32 0.0, %v684
        %v686 = vpop.f32.mrb[0].mxu0
        %687 = vmatprep.mubr.bf16.mxu0 0
        %688 = vmatmul.mubr.bf16.gmra.mrb[0].mxu0 %v539
        %v689 = vpop.f32.mrb[0].mxu0
        %v690 = vadd.f32 0.0, %v689
        %v691 = vpop.f32.mrb[0].mxu0
        %v692 = vpop.f32.mrb[0].mxu0
        %v693 = vadd.f32 0.0, %v692
        %v694 = vpop.f32.mrb[0].mxu0
        %695 = vmatprep.mubr.bf16.mxu0 0
        %696 = vmatmul.mubr.bf16.gmra.mrb[0].mxu0 %v542
        %v697 = vpop.f32.mrb[0].mxu0
        %v698 = vadd.f32 0.0, %v697
        %v699 = vpop.f32.mrb[0].mxu0
        %v700 = vpop.f32.mrb[0].mxu0
        %v701 = vadd.f32 0.0, %v700
        %v702 = vpop.f32.mrb[0].mxu0
        %703 = vmatprep.mubr.bf16.mxu0 0
        %704 = vmatmul.mubr.bf16.gmra.mrb[0].mxu0 %v545
        %v705 = vpop.f32.mrb[0].mxu0
        %v706 = vadd.f32 0.0, %v705
        %v707 = vpop.f32.mrb[0].mxu0
        %v708 = vpop.f32.mrb[0].mxu0
        %v709 = vadd.f32 0.0, %v708
        %v710 = vpop.f32.mrb[0].mxu0
        %711 = vdwg.mxu0
        %v713 = vsel %vm498, %v302, 0
        %v716 = vsel %vm498, %v303, 0
        %v719 = vsel %vm498, %v304, 0
        %v722 = vsel %vm498, %v305, 0
        %v725 = vsel %vm498, %v306, 0
        %v728 = vsel %vm498, %v307, 0
        %v731 = vsel %vm498, %v308, 0
        %v734 = vsel %vm498, %v309, 0
        %v737 = vsel %vm498, %v310, 0
        %v740 = vsel %vm498, %v311, 0
        %v743 = vsel %vm498, %v312, 0
        %v746 = vsel %vm498, %v313, 0
        %v749 = vsel %vm498, %v314, 0
        %v752 = vsel %vm498, %v315, 0
        %v755 = vsel %vm498, %v316, 0
        %v758 = vsel %vm498, %v317, 0
        %v761 = vsel %vm547, %v318, 0
        %763 = vmatprep.subr.bf16.mxu0 0
        %764 = vmatpush1.bf16.msra.mxu0 %v761
        %765 = vmatprep.subr.bf16.mxu0 0
        %766 = vmatpush1.bf16.msra.mxu0 0
        %767 = vmatprep.subr.bf16.mxu0 0
        %768 = vmatpush1.bf16.msra.mxu0 0
        %769 = vmatprep.subr.bf16.mxu0 0
        %770 = vmatpush1.bf16.msra.mxu0 0
        %771 = vmatprep.subr.bf16.mxu0 0
        %772 = vmatpush1.bf16.msra.mxu0 0
        %773 = vmatprep.subr.bf16.mxu0 0
        %774 = vmatpush1.bf16.msra.mxu0 0
        %775 = vmatprep.subr.bf16.mxu0 0
        %776 = vmatpush1.bf16.msra.mxu0 0
        %777 = vmatprep.subr.bf16.mxu0 0
        %778 = vmatpush1.bf16.msra.mxu0 0
        %779 = vmatprep.subr.bf16.mxu0 0
        %780 = vmatpush1.bf16.msra.mxu0 0
        %781 = vmatprep.subr.bf16.mxu0 0
        %782 = vmatpush1.bf16.msra.mxu0 0
        %783 = vmatprep.subr.bf16.mxu0 0
        %784 = vmatpush1.bf16.msra.mxu0 0
        %785 = vmatprep.subr.bf16.mxu0 0
        %786 = vmatpush1.bf16.msra.mxu0 0
        %787 = vmatprep.subr.bf16.mxu0 0
        %788 = vmatpush1.bf16.msra.mxu0 0
        %789 = vmatprep.subr.bf16.mxu0 0
        %790 = vmatpush1.bf16.msra.mxu0 0
        %791 = vmatprep.subr.bf16.mxu0 0
        %792 = vmatpush1.bf16.msra.mxu0 0
        %793 = vmatprep.subr.bf16.mxu0 0
        %794 = vmatpush1.bf16.msra.mxu0 0
        %795 = vmatprep.mubr.bf16.mxu0 0
        %796 = vmatmul.mubr.bf16.gmra.mrb[0].mxu0 %v713
        %v797 = vpop.f32.mrb[0].mxu0
        %v798 = vadd.f32 %v586, %v797
        %v799 = vpop.f32.mrb[0].mxu0
        %v800 = vpop.f32.mrb[0].mxu0
        %v801 = vadd.f32 %v589, %v800
        %v802 = vpop.f32.mrb[0].mxu0
        %803 = vmatprep.mubr.bf16.mxu0 0
        %804 = vmatmul.mubr.bf16.gmra.mrb[0].mxu0 %v716
        %v805 = vpop.f32.mrb[0].mxu0
        %v806 = vadd.f32 %v594, %v805
        %v807 = vpop.f32.mrb[0].mxu0
        %v808 = vpop.f32.mrb[0].mxu0
        %v809 = vadd.f32 %v597, %v808
        %v810 = vpop.f32.mrb[0].mxu0
        %811 = vmatprep.mubr.bf16.mxu0 0
        %812 = vmatmul.mubr.bf16.gmra.mrb[0].mxu0 %v719
        %v813 = vpop.f32.mrb[0].mxu0
        %v814 = vadd.f32 %v602, %v813
        %v815 = vpop.f32.mrb[0].mxu0
        %v816 = vpop.f32.mrb[0].mxu0
        %v817 = vadd.f32 %v605, %v816
        %v818 = vpop.f32.mrb[0].mxu0
        %819 = vmatprep.mubr.bf16.mxu0 0
        %820 = vmatmul.mubr.bf16.gmra.mrb[0].mxu0 %v722
        %v821 = vpop.f32.mrb[0].mxu0
        %v822 = vadd.f32 %v610, %v821
        %v823 = vpop.f32.mrb[0].mxu0
        %v824 = vpop.f32.mrb[0].mxu0
        %v825 = vadd.f32 %v613, %v824
        %v826 = vpop.f32.mrb[0].mxu0
        %827 = vmatprep.mubr.bf16.mxu0 0
        %828 = vmatmul.mubr.bf16.gmra.mrb[0].mxu0 %v725
        %v829 = vpop.f32.mrb[0].mxu0
        %v830 = vadd.f32 %v618, %v829
        %v831 = vpop.f32.mrb[0].mxu0
        %v832 = vpop.f32.mrb[0].mxu0
        %v833 = vadd.f32 %v621, %v832
        %v834 = vpop.f32.mrb[0].mxu0
        %835 = vmatprep.mubr.bf16.mxu0 0
        %836 = vmatmul.mubr.bf16.gmra.mrb[0].mxu0 %v728
        %v837 = vpop.f32.mrb[0].mxu0
        %v838 = vadd.f32 %v626, %v837
        %v839 = vpop.f32.mrb[0].mxu0
        %v840 = vpop.f32.mrb[0].mxu0
        %v841 = vadd.f32 %v629, %v840
        %v842 = vpop.f32.mrb[0].mxu0
        %843 = vmatprep.mubr.bf16.mxu0 0
        %844 = vmatmul.mubr.bf16.gmra.mrb[0].mxu0 %v731
        %v845 = vpop.f32.mrb[0].mxu0
        %v846 = vadd.f32 %v634, %v845
        %v847 = vpop.f32.mrb[0].mxu0
        %v848 = vpop.f32.mrb[0].mxu0
        %v849 = vadd.f32 %v637, %v848
        %v850 = vpop.f32.mrb[0].mxu0
        %851 = vmatprep.mubr.bf16.mxu0 0
        %852 = vmatmul.mubr.bf16.gmra.mrb[0].mxu0 %v734
        %v853 = vpop.f32.mrb[0].mxu0
        %v854 = vadd.f32 %v642, %v853
        %v855 = vpop.f32.mrb[0].mxu0
        %v856 = vpop.f32.mrb[0].mxu0
        %v857 = vadd.f32 %v645, %v856
        %v858 = vpop.f32.mrb[0].mxu0
        %859 = vmatprep.mubr.bf16.mxu0 0
        %860 = vmatmul.mubr.bf16.gmra.mrb[0].mxu0 %v737
        %v861 = vpop.f32.mrb[0].mxu0
        %v862 = vadd.f32 %v650, %v861
        %v863 = vpop.f32.mrb[0].mxu0
        %v864 = vpop.f32.mrb[0].mxu0
        %v865 = vadd.f32 %v653, %v864
        %v866 = vpop.f32.mrb[0].mxu0
        %867 = vmatprep.mubr.bf16.mxu0 0
        %868 = vmatmul.mubr.bf16.gmra.mrb[0].mxu0 %v740
        %v869 = vpop.f32.mrb[0].mxu0
        %v870 = vadd.f32 %v658, %v869
        %v871 = vpop.f32.mrb[0].mxu0
        %v872 = vpop.f32.mrb[0].mxu0
        %v873 = vadd.f32 %v661, %v872
        %v874 = vpop.f32.mrb[0].mxu0
        %875 = vmatprep.mubr.bf16.mxu0 0
        %876 = vmatmul.mubr.bf16.gmra.mrb[0].mxu0 %v743
        %v877 = vpop.f32.mrb[0].mxu0
        %v878 = vadd.f32 %v666, %v877
        %v879 = vpop.f32.mrb[0].mxu0
        %v880 = vpop.f32.mrb[0].mxu0
        %v881 = vadd.f32 %v669, %v880
        %v882 = vpop.f32.mrb[0].mxu0
        %883 = vmatprep.mubr.bf16.mxu0 0
        %884 = vmatmul.mubr.bf16.gmra.mrb[0].mxu0 %v746
        %v885 = vpop.f32.mrb[0].mxu0
        %v886 = vadd.f32 %v674, %v885
        %v887 = vpop.f32.mrb[0].mxu0
        %v888 = vpop.f32.mrb[0].mxu0
        %v889 = vadd.f32 %v677, %v888
        %v890 = vpop.f32.mrb[0].mxu0
        %891 = vmatprep.mubr.bf16.mxu0 0
        %892 = vmatmul.mubr.bf16.gmra.mrb[0].mxu0 %v749
        %v893 = vpop.f32.mrb[0].mxu0
        %v894 = vadd.f32 %v682, %v893
        %v895 = vpop.f32.mrb[0].mxu0
        %v896 = vpop.f32.mrb[0].mxu0
        %v897 = vadd.f32 %v685, %v896
        %v898 = vpop.f32.mrb[0].mxu0
        %899 = vmatprep.mubr.bf16.mxu0 0
        %900 = vmatmul.mubr.bf16.gmra.mrb[0].mxu0 %v752
        %v901 = vpop.f32.mrb[0].mxu0
        %v902 = vadd.f32 %v690, %v901
        %v903 = vpop.f32.mrb[0].mxu0
        %v904 = vpop.f32.mrb[0].mxu0
        %v905 = vadd.f32 %v693, %v904
        %v906 = vpop.f32.mrb[0].mxu0
        %907 = vmatprep.mubr.bf16.mxu0 0
        %908 = vmatmul.mubr.bf16.gmra.mrb[0].mxu0 %v755
        %v909 = vpop.f32.mrb[0].mxu0
        %v910 = vadd.f32 %v698, %v909
        %v911 = vpop.f32.mrb[0].mxu0
        %v912 = vpop.f32.mrb[0].mxu0
        %v913 = vadd.f32 %v701, %v912
        %v914 = vpop.f32.mrb[0].mxu0
        %915 = vmatprep.mubr.bf16.mxu0 0
        %916 = vmatmul.mubr.bf16.gmra.mrb[0].mxu0 %v758
        %v917 = vpop.f32.mrb[0].mxu0
        %v918 = vadd.f32 %v706, %v917
        %v919 = vpop.f32.mrb[0].mxu0
        %v920 = vpop.f32.mrb[0].mxu0
        %v921 = vadd.f32 %v709, %v920
        %v922 = vpop.f32.mrb[0].mxu0
        %923 = vdwg.mxu0
        %vm924 = vcmask 1045504
        %v925 = vrot.slane %v254, 2
        %v926 = vrot.slane %v255, 2
        %v927 = vsel %vm924, %v925, %v926
        %v928 = vrot.slane %v256, 2
        %v929 = vsel %vm924, %v926, %v928
        %v930 = vrot.slane %v257, 2
        %v931 = vrot.slane %v258, 2
        %v932 = vsel %vm924, %v930, %v931
        %v933 = vrot.slane %v259, 2
        %v934 = vsel %vm924, %v931, %v933
        %v935 = vrot.slane %v260, 2
        %v936 = vrot.slane %v261, 2
        %v937 = vsel %vm924, %v935, %v936
        %v938 = vrot.slane %v262, 2
        %v939 = vsel %vm924, %v936, %v938
        %v940 = vrot.slane %v263, 2
        %v941 = vrot.slane %v264, 2
        %v942 = vsel %vm924, %v940, %v941
        %v943 = vrot.slane %v265, 2
        %v944 = vsel %vm924, %v941, %v943
        %v945 = vrot.slane %v266, 2
        %v946 = vrot.slane %v267, 2
        %v947 = vsel %vm924, %v945, %v946
        %v948 = vrot.slane %v268, 2
        %v949 = vsel %vm924, %v946, %v948
        %v950 = vrot.slane %v269, 2
        %v951 = vrot.slane %v270, 2
        %v952 = vsel %vm924, %v950, %v951
        %v953 = vrot.slane %v271, 2
        %v954 = vsel %vm924, %v951, %v953
        %v955 = vrot.slane %v272, 2
        %v956 = vrot.slane %v273, 2
        %v957 = vsel %vm924, %v955, %v956
        %v958 = vrot.slane %v274, 2
        %v959 = vsel %vm924, %v956, %v958
        %v960 = vrot.slane %v275, 2
        %v961 = vrot.slane %v276, 2
        %v962 = vsel %vm924, %v960, %v961
        %v963 = vrot.slane %v277, 2
        %v964 = vsel %vm924, %v961, %v963
        %v965 = vrot.slane %v278, 2
        %v966 = vrot.slane %v279, 2
        %v967 = vsel %vm924, %v965, %v966
        %v968 = vrot.slane %v280, 2
        %v969 = vsel %vm924, %v966, %v968
        %v970 = vrot.slane %v281, 2
        %v971 = vrot.slane %v282, 2
        %v972 = vsel %vm924, %v970, %v971
        %v973 = vrot.slane %v283, 2
        %v974 = vsel %vm924, %v971, %v973
        %v975 = vrot.slane %v284, 2
        %v976 = vrot.slane %v285, 2
        %v977 = vsel %vm924, %v975, %v976
        %v978 = vrot.slane %v286, 2
        %v979 = vsel %vm924, %v976, %v978
        %v980 = vrot.slane %v287, 2
        %v981 = vrot.slane %v288, 2
        %v982 = vsel %vm924, %v980, %v981
        %v983 = vrot.slane %v289, 2
        %v984 = vsel %vm924, %v981, %v983
        %v985 = vrot.slane %v290, 2
        %v986 = vrot.slane %v291, 2
        %v987 = vsel %vm924, %v985, %v986
        %v988 = vrot.slane %v292, 2
        %v989 = vsel %vm924, %v986, %v988
        %v990 = vrot.slane %v293, 2
        %v991 = vrot.slane %v294, 2
        %v992 = vsel %vm924, %v990, %v991
        %v993 = vrot.slane %v295, 2
        %v994 = vsel %vm924, %v991, %v993
        %v995 = vrot.slane %v296, 2
        %v996 = vrot.slane %v297, 2
        %v997 = vsel %vm924, %v995, %v996
        %v998 = vrot.slane %v298, 2
        %v999 = vsel %vm924, %v996, %v998
        %v1000 = vrot.slane %v299, 2
        %v1001 = vrot.slane %v300, 2
        %v1002 = vsel %vm924, %v1000, %v1001
        %v1003 = vrot.slane %v301, 2
        %v1004 = vsel %vm924, %v1001, %v1003
        %v1037 = vpack.c.bf16 %v929, %v927
        %v1038 = vpack.c.bf16 %v934, %v932
        %v1039 = vpack.c.bf16 %v939, %v937
        %v1040 = vpack.c.bf16 %v944, %v942
        %v1041 = vpack.c.bf16 %v949, %v947
        %v1042 = vpack.c.bf16 %v954, %v952
        %v1043 = vpack.c.bf16 %v959, %v957
        %v1044 = vpack.c.bf16 %v964, %v962
        %v1045 = vpack.c.bf16 %v969, %v967
        %v1046 = vpack.c.bf16 %v974, %v972
        %v1047 = vpack.c.bf16 %v979, %v977
        %v1048 = vpack.c.bf16 %v984, %v982
        %v1049 = vpack.c.bf16 %v989, %v987
        %v1050 = vpack.c.bf16 %v994, %v992
        %v1051 = vpack.c.bf16 %v999, %v997
        %v1052 = vpack.c.bf16 %v1004, %v1002
        %s1053 = scalar_lea.vmem %s1, 4
        %v1054 = vld [vmem:[%s1053] sm:$0x3]
        %v1056 = vsel %vm498, %v1037, 0
        %v1059 = vsel %vm498, %v1038, 0
        %v1062 = vsel %vm498, %v1039, 0
        %v1065 = vsel %vm498, %v1040, 0
        %v1068 = vsel %vm498, %v1041, 0
        %v1071 = vsel %vm498, %v1042, 0
        %v1074 = vsel %vm498, %v1043, 0
        %v1077 = vsel %vm498, %v1044, 0
        %v1080 = vsel %vm498, %v1045, 0
        %v1083 = vsel %vm498, %v1046, 0
        %v1086 = vsel %vm498, %v1047, 0
        %v1089 = vsel %vm498, %v1048, 0
        %v1092 = vsel %vm498, %v1049, 0
        %v1095 = vsel %vm498, %v1050, 0
        %v1098 = vsel %vm498, %v1051, 0
        %v1101 = vsel %vm498, %v1052, 0
        %v1104 = vsel %vm547, %v1054, 0
        %1106 = vmatprep.subr.bf16.mxu0 0
        %1107 = vmatpush1.bf16.msra.mxu0 %v1104
        %1108 = vmatprep.subr.bf16.mxu0 0
        %1109 = vmatpush1.bf16.msra.mxu0 0
        %1110 = vmatprep.subr.bf16.mxu0 0
        %1111 = vmatpush1.bf16.msra.mxu0 0
        %1112 = vmatprep.subr.bf16.mxu0 0
        %1113 = vmatpush1.bf16.msra.mxu0 0
        %1114 = vmatprep.subr.bf16.mxu0 0
        %1115 = vmatpush1.bf16.msra.mxu0 0
        %1116 = vmatprep.subr.bf16.mxu0 0
        %1117 = vmatpush1.bf16.msra.mxu0 0
        %1118 = vmatprep.subr.bf16.mxu0 0
        %1119 = vmatpush1.bf16.msra.mxu0 0
        %1120 = vmatprep.subr.bf16.mxu0 0
        %1121 = vmatpush1.bf16.msra.mxu0 0
        %1122 = vmatprep.subr.bf16.mxu0 0
        %1123 = vmatpush1.bf16.msra.mxu0 0
        %1124 = vmatprep.subr.bf16.mxu0 0
        %1125 = vmatpush1.bf16.msra.mxu0 0
        %1126 = vmatprep.subr.bf16.mxu0 0
        %1127 = vmatpush1.bf16.msra.mxu0 0
        %1128 = vmatprep.subr.bf16.mxu0 0
        %1129 = vmatpush1.bf16.msra.mxu0 0
        %1130 = vmatprep.subr.bf16.mxu0 0
        %1131 = vmatpush1.bf16.msra.mxu0 0
        %1132 = vmatprep.subr.bf16.mxu0 0
        %1133 = vmatpush1.bf16.msra.mxu0 0
        %1134 = vmatprep.subr.bf16.mxu0 0
        %1135 = vmatpush1.bf16.msra.mxu0 0
        %1136 = vmatprep.subr.bf16.mxu0 0
        %1137 = vmatpush1.bf16.msra.mxu0 0
        %1138 = vmatprep.mubr.bf16.mxu0 0
        %1139 = vmatmul.mubr.bf16.gmra.mrb[0].mxu0 %v1056
        %v1140 = vpop.f32.mrb[0].mxu0
        %v1141 = vadd.f32 0.0, %v1140
        %v1142 = vpop.f32.mrb[0].mxu0
        %v1143 = vpop.f32.mrb[0].mxu0
        %v1144 = vadd.f32 0.0, %v1143
        %v1145 = vpop.f32.mrb[0].mxu0
        %1146 = vmatprep.mubr.bf16.mxu0 0
        %1147 = vmatmul.mubr.bf16.gmra.mrb[0].mxu0 %v1059
        %v1148 = vpop.f32.mrb[0].mxu0
        %v1149 = vadd.f32 0.0, %v1148
        %v1150 = vpop.f32.mrb[0].mxu0
        %v1151 = vpop.f32.mrb[0].mxu0
        %v1152 = vadd.f32 0.0, %v1151
        %v1153 = vpop.f32.mrb[0].mxu0
        %1154 = vmatprep.mubr.bf16.mxu0 0
        %1155 = vmatmul.mubr.bf16.gmra.mrb[0].mxu0 %v1062
        %v1156 = vpop.f32.mrb[0].mxu0
        %v1157 = vadd.f32 0.0, %v1156
        %v1158 = vpop.f32.mrb[0].mxu0
        %v1159 = vpop.f32.mrb[0].mxu0
        %v1160 = vadd.f32 0.0, %v1159
        %v1161 = vpop.f32.mrb[0].mxu0
        %1162 = vmatprep.mubr.bf16.mxu0 0
        %1163 = vmatmul.mubr.bf16.gmra.mrb[0].mxu0 %v1065
        %v1164 = vpop.f32.mrb[0].mxu0
        %v1165 = vadd.f32 0.0, %v1164
        %v1166 = vpop.f32.mrb[0].mxu0
        %v1167 = vpop.f32.mrb[0].mxu0
        %v1168 = vadd.f32 0.0, %v1167
        %v1169 = vpop.f32.mrb[0].mxu0
        %1170 = vmatprep.mubr.bf16.mxu0 0
        %1171 = vmatmul.mubr.bf16.gmra.mrb[0].mxu0 %v1068
        %v1172 = vpop.f32.mrb[0].mxu0
        %v1173 = vadd.f32 0.0, %v1172
        %v1174 = vpop.f32.mrb[0].mxu0
        %v1175 = vpop.f32.mrb[0].mxu0
        %v1176 = vadd.f32 0.0, %v1175
        %v1177 = vpop.f32.mrb[0].mxu0
        %1178 = vmatprep.mubr.bf16.mxu0 0
        %1179 = vmatmul.mubr.bf16.gmra.mrb[0].mxu0 %v1071
        %v1180 = vpop.f32.mrb[0].mxu0
        %v1181 = vadd.f32 0.0, %v1180
        %v1182 = vpop.f32.mrb[0].mxu0
        %v1183 = vpop.f32.mrb[0].mxu0
        %v1184 = vadd.f32 0.0, %v1183
        %v1185 = vpop.f32.mrb[0].mxu0
        %1186 = vmatprep.mubr.bf16.mxu0 0
        %1187 = vmatmul.mubr.bf16.gmra.mrb[0].mxu0 %v1074
        %v1188 = vpop.f32.mrb[0].mxu0
        %v1189 = vadd.f32 0.0, %v1188
        %v1190 = vpop.f32.mrb[0].mxu0
        %v1191 = vpop.f32.mrb[0].mxu0
        %v1192 = vadd.f32 0.0, %v1191
        %v1193 = vpop.f32.mrb[0].mxu0
        %1194 = vmatprep.mubr.bf16.mxu0 0
        %1195 = vmatmul.mubr.bf16.gmra.mrb[0].mxu0 %v1077
        %v1196 = vpop.f32.mrb[0].mxu0
        %v1197 = vadd.f32 0.0, %v1196
        %v1198 = vpop.f32.mrb[0].mxu0
        %v1199 = vpop.f32.mrb[0].mxu0
        %v1200 = vadd.f32 0.0, %v1199
        %v1201 = vpop.f32.mrb[0].mxu0
        %1202 = vmatprep.mubr.bf16.mxu0 0
        %1203 = vmatmul.mubr.bf16.gmra.mrb[0].mxu0 %v1080
        %v1204 = vpop.f32.mrb[0].mxu0
        %v1205 = vadd.f32 0.0, %v1204
        %v1206 = vpop.f32.mrb[0].mxu0
        %v1207 = vpop.f32.mrb[0].mxu0
        %v1208 = vadd.f32 0.0, %v1207
        %v1209 = vpop.f32.mrb[0].mxu0
        %1210 = vmatprep.mubr.bf16.mxu0 0
        %1211 = vmatmul.mubr.bf16.gmra.mrb[0].mxu0 %v1083
        %v1212 = vpop.f32.mrb[0].mxu0
        %v1213 = vadd.f32 0.0, %v1212
        %v1214 = vpop.f32.mrb[0].mxu0
        %v1215 = vpop.f32.mrb[0].mxu0
        %v1216 = vadd.f32 0.0, %v1215
        %v1217 = vpop.f32.mrb[0].mxu0
        %1218 = vmatprep.mubr.bf16.mxu0 0
        %1219 = vmatmul.mubr.bf16.gmra.mrb[0].mxu0 %v1086
        %v1220 = vpop.f32.mrb[0].mxu0
        %v1221 = vadd.f32 0.0, %v1220
        %v1222 = vpop.f32.mrb[0].mxu0
        %v1223 = vpop.f32.mrb[0].mxu0
        %v1224 = vadd.f32 0.0, %v1223
        %v1225 = vpop.f32.mrb[0].mxu0
        %1226 = vmatprep.mubr.bf16.mxu0 0
        %1227 = vmatmul.mubr.bf16.gmra.mrb[0].mxu0 %v1089
        %v1228 = vpop.f32.mrb[0].mxu0
        %v1229 = vadd.f32 0.0, %v1228
        %v1230 = vpop.f32.mrb[0].mxu0
        %v1231 = vpop.f32.mrb[0].mxu0
        %v1232 = vadd.f32 0.0, %v1231
        %v1233 = vpop.f32.mrb[0].mxu0
        %1234 = vmatprep.mubr.bf16.mxu0 0
        %1235 = vmatmul.mubr.bf16.gmra.mrb[0].mxu0 %v1092
        %v1236 = vpop.f32.mrb[0].mxu0
        %v1237 = vadd.f32 0.0, %v1236
        %v1238 = vpop.f32.mrb[0].mxu0
        %v1239 = vpop.f32.mrb[0].mxu0
        %v1240 = vadd.f32 0.0, %v1239
        %v1241 = vpop.f32.mrb[0].mxu0
        %1242 = vmatprep.mubr.bf16.mxu0 0
        %1243 = vmatmul.mubr.bf16.gmra.mrb[0].mxu0 %v1095
        %v1244 = vpop.f32.mrb[0].mxu0
        %v1245 = vadd.f32 0.0, %v1244
        %v1246 = vpop.f32.mrb[0].mxu0
        %v1247 = vpop.f32.mrb[0].mxu0
        %v1248 = vadd.f32 0.0, %v1247
        %v1249 = vpop.f32.mrb[0].mxu0
        %1250 = vmatprep.mubr.bf16.mxu0 0
        %1251 = vmatmul.mubr.bf16.gmra.mrb[0].mxu0 %v1098
        %v1252 = vpop.f32.mrb[0].mxu0
        %v1253 = vadd.f32 0.0, %v1252
        %v1254 = vpop.f32.mrb[0].mxu0
        %v1255 = vpop.f32.mrb[0].mxu0
        %v1256 = vadd.f32 0.0, %v1255
        %v1257 = vpop.f32.mrb[0].mxu0
        %1258 = vmatprep.mubr.bf16.mxu0 0
        %1259 = vmatmul.mubr.bf16.gmra.mrb[0].mxu0 %v1101
        %v1260 = vpop.f32.mrb[0].mxu0
        %v1261 = vadd.f32 0.0, %v1260
        %v1262 = vpop.f32.mrb[0].mxu0
        %v1263 = vpop.f32.mrb[0].mxu0
        %v1264 = vadd.f32 0.0, %v1263
        %v1265 = vpop.f32.mrb[0].mxu0
        %1266 = vdwg.mxu0
        %v1267 = vadd.f32 %v798, %v1141
        %v1268 = vadd.f32 %v801, %v1144
        %v1269 = vadd.f32 %v806, %v1149
        %v1270 = vadd.f32 %v809, %v1152
        %v1271 = vadd.f32 %v814, %v1157
        %v1272 = vadd.f32 %v817, %v1160
        %v1273 = vadd.f32 %v822, %v1165
        %v1274 = vadd.f32 %v825, %v1168
        %v1275 = vadd.f32 %v830, %v1173
        %v1276 = vadd.f32 %v833, %v1176
        %v1277 = vadd.f32 %v838, %v1181
        %v1278 = vadd.f32 %v841, %v1184
        %v1279 = vadd.f32 %v846, %v1189
        %v1280 = vadd.f32 %v849, %v1192
        %v1281 = vadd.f32 %v854, %v1197
        %v1282 = vadd.f32 %v857, %v1200
        %v1283 = vadd.f32 %v862, %v1205
        %v1284 = vadd.f32 %v865, %v1208
        %v1285 = vadd.f32 %v870, %v1213
        %v1286 = vadd.f32 %v873, %v1216
        %v1287 = vadd.f32 %v878, %v1221
        %v1288 = vadd.f32 %v881, %v1224
        %v1289 = vadd.f32 %v886, %v1229
        %v1290 = vadd.f32 %v889, %v1232
        %v1291 = vadd.f32 %v894, %v1237
        %v1292 = vadd.f32 %v897, %v1240
        %v1293 = vadd.f32 %v902, %v1245
        %v1294 = vadd.f32 %v905, %v1248
        %v1295 = vadd.f32 %v910, %v1253
        %v1296 = vadd.f32 %v913, %v1256
        %v1297 = vadd.f32 %v918, %v1261
        %v1298 = vadd.f32 %v921, %v1264
        %s1299 = scalar_lea.vmem %s204, 12
        %v1300 = vld [vmem:[%s1299] sm:$0xf]
        %v1301 = vld [vmem:[%s1299 + $0x4] sm:$0xf]
        %v1302 = vld [vmem:[%s1299 + $0x8] sm:$0x1]
        %v1303 = vld [vmem:[%s1299 + $0xc] sm:$0xf]
        %v1304 = vld [vmem:[%s1299 + $0x10] sm:$0xf]
        %v1305 = vld [vmem:[%s1299 + $0x14] sm:$0x1]
        %v1306 = vld [vmem:[%s1299 + $0x18] sm:$0xf]
        %v1307 = vld [vmem:[%s1299 + $0x1c] sm:$0xf]
        %v1308 = vld [vmem:[%s1299 + $0x20] sm:$0x1]
        %v1309 = vld [vmem:[%s1299 + $0x24] sm:$0xf]
        %v1310 = vld [vmem:[%s1299 + $0x28] sm:$0xf]
        %v1311 = vld [vmem:[%s1299 + $0x2c] sm:$0x1]
        %v1312 = vld [vmem:[%s1299 + $0x30] sm:$0xf]
        %v1313 = vld [vmem:[%s1299 + $0x34] sm:$0xf]
        %v1314 = vld [vmem:[%s1299 + $0x38] sm:$0x1]
        %v1315 = vld [vmem:[%s1299 + $0x3c] sm:$0xf]
        %v1316 = vld [vmem:[%s1299 + $0x40] sm:$0xf]
        %v1317 = vld [vmem:[%s1299 + $0x44] sm:$0x1]
        %v1318 = vld [vmem:[%s1299 + $0x48] sm:$0xf]
        %v1319 = vld [vmem:[%s1299 + $0x4c] sm:$0xf]
        %v1320 = vld [vmem:[%s1299 + $0x50] sm:$0x1]
        %v1321 = vld [vmem:[%s1299 + $0x54] sm:$0xf]
        %v1322 = vld [vmem:[%s1299 + $0x58] sm:$0xf]
        %v1323 = vld [vmem:[%s1299 + $0x5c] sm:$0x1]
        %v1324 = vld [vmem:[%s1299 + $0x60] sm:$0xf]
        %v1325 = vld [vmem:[%s1299 + $0x64] sm:$0xf]
        %v1326 = vld [vmem:[%s1299 + $0x68] sm:$0x1]
        %v1327 = vld [vmem:[%s1299 + $0x6c] sm:$0xf]
        %v1328 = vld [vmem:[%s1299 + $0x70] sm:$0xf]
        %v1329 = vld [vmem:[%s1299 + $0x74] sm:$0x1]
        %v1330 = vld [vmem:[%s1299 + $0x78] sm:$0xf]
        %v1331 = vld [vmem:[%s1299 + $0x7c] sm:$0xf]
        %v1332 = vld [vmem:[%s1299 + $0x80] sm:$0x1]
        %v1333 = vld [vmem:[%s1299 + $0x84] sm:$0xf]
        %v1334 = vld [vmem:[%s1299 + $0x88] sm:$0xf]
        %v1335 = vld [vmem:[%s1299 + $0x8c] sm:$0x1]
        %v1336 = vld [vmem:[%s1299 + $0x90] sm:$0xf]
        %v1337 = vld [vmem:[%s1299 + $0x94] sm:$0xf]
        %v1338 = vld [vmem:[%s1299 + $0x98] sm:$0x1]
        %v1339 = vld [vmem:[%s1299 + $0x9c] sm:$0xf]
        %v1340 = vld [vmem:[%s1299 + $0xa0] sm:$0xf]
        %v1341 = vld [vmem:[%s1299 + $0xa4] sm:$0x1]
        %v1342 = vld [vmem:[%s1299 + $0xa8] sm:$0xf]
        %v1343 = vld [vmem:[%s1299 + $0xac] sm:$0xf]
        %v1344 = vld [vmem:[%s1299 + $0xb0] sm:$0x1]
        %v1345 = vld [vmem:[%s1299 + $0xb4] sm:$0xf]
        %v1346 = vld [vmem:[%s1299 + $0xb8] sm:$0xf]
        %v1347 = vld [vmem:[%s1299 + $0xbc] sm:$0x1]
        %v1348 = vunpack.c.l.bf16 %v1300
        %v1349 = vunpack.c.l.bf16 %v1301
        %v1350 = vunpack.c.l.bf16 %v1302
        %v1351 = vunpack.c.l.bf16 %v1303
        %v1352 = vunpack.c.l.bf16 %v1304
        %v1353 = vunpack.c.l.bf16 %v1305
        %v1354 = vunpack.c.l.bf16 %v1306
        %v1355 = vunpack.c.l.bf16 %v1307
        %v1356 = vunpack.c.l.bf16 %v1308
        %v1357 = vunpack.c.l.bf16 %v1309
        %v1358 = vunpack.c.l.bf16 %v1310
        %v1359 = vunpack.c.l.bf16 %v1311
        %v1360 = vunpack.c.l.bf16 %v1312
        %v1361 = vunpack.c.l.bf16 %v1313
        %v1362 = vunpack.c.l.bf16 %v1314
        %v1363 = vunpack.c.l.bf16 %v1315
        %v1364 = vunpack.c.l.bf16 %v1316
        %v1365 = vunpack.c.l.bf16 %v1317
        %v1366 = vunpack.c.l.bf16 %v1318
        %v1367 = vunpack.c.l.bf16 %v1319
        %v1368 = vunpack.c.l.bf16 %v1320
        %v1369 = vunpack.c.l.bf16 %v1321
        %v1370 = vunpack.c.l.bf16 %v1322
        %v1371 = vunpack.c.l.bf16 %v1323
        %v1372 = vunpack.c.l.bf16 %v1324
        %v1373 = vunpack.c.l.bf16 %v1325
        %v1374 = vunpack.c.l.bf16 %v1326
        %v1375 = vunpack.c.l.bf16 %v1327
        %v1376 = vunpack.c.l.bf16 %v1328
        %v1377 = vunpack.c.l.bf16 %v1329
        %v1378 = vunpack.c.l.bf16 %v1330
        %v1379 = vunpack.c.l.bf16 %v1331
        %v1380 = vunpack.c.l.bf16 %v1332
        %v1381 = vunpack.c.l.bf16 %v1333
        %v1382 = vunpack.c.l.bf16 %v1334
        %v1383 = vunpack.c.l.bf16 %v1335
        %v1384 = vunpack.c.l.bf16 %v1336
        %v1385 = vunpack.c.l.bf16 %v1337
        %v1386 = vunpack.c.l.bf16 %v1338
        %v1387 = vunpack.c.l.bf16 %v1339
        %v1388 = vunpack.c.l.bf16 %v1340
        %v1389 = vunpack.c.l.bf16 %v1341
        %v1390 = vunpack.c.l.bf16 %v1342
        %v1391 = vunpack.c.l.bf16 %v1343
        %v1392 = vunpack.c.l.bf16 %v1344
        %v1393 = vunpack.c.l.bf16 %v1345
        %v1394 = vunpack.c.l.bf16 %v1346
        %v1395 = vunpack.c.l.bf16 %v1347
        %v1396 = vpack.c.bf16 %v1349, %v1348
        %v1397 = vpack.c.bf16 %v1352, %v1351
        %v1398 = vpack.c.bf16 %v1355, %v1354
        %v1399 = vpack.c.bf16 %v1358, %v1357
        %v1400 = vpack.c.bf16 %v1361, %v1360
        %v1401 = vpack.c.bf16 %v1364, %v1363
        %v1402 = vpack.c.bf16 %v1367, %v1366
        %v1403 = vpack.c.bf16 %v1370, %v1369
        %v1404 = vpack.c.bf16 %v1373, %v1372
        %v1405 = vpack.c.bf16 %v1376, %v1375
        %v1406 = vpack.c.bf16 %v1379, %v1378
        %v1407 = vpack.c.bf16 %v1382, %v1381
        %v1408 = vpack.c.bf16 %v1385, %v1384
        %v1409 = vpack.c.bf16 %v1388, %v1387
        %v1410 = vpack.c.bf16 %v1391, %v1390
        %v1411 = vpack.c.bf16 %v1394, %v1393
        %s1412 = scalar_lea.vmem %s1, 6
        %v1413 = vld [vmem:[%s1412] sm:$0x3]
        %v1415 = vsel %vm498, %v1396, 0
        %v1418 = vsel %vm498, %v1397, 0
        %v1421 = vsel %vm498, %v1398, 0
        %v1424 = vsel %vm498, %v1399, 0
        %v1427 = vsel %vm498, %v1400, 0
        %v1430 = vsel %vm498, %v1401, 0
        %v1433 = vsel %vm498, %v1402, 0
        %v1436 = vsel %vm498, %v1403, 0
        %v1439 = vsel %vm498, %v1404, 0
        %v1442 = vsel %vm498, %v1405, 0
        %v1445 = vsel %vm498, %v1406, 0
        %v1448 = vsel %vm498, %v1407, 0
        %v1451 = vsel %vm498, %v1408, 0
        %v1454 = vsel %vm498, %v1409, 0
        %v1457 = vsel %vm498, %v1410, 0
        %v1460 = vsel %vm498, %v1411, 0
        %v1463 = vsel %vm547, %v1413, 0
        %1465 = vmatprep.subr.bf16.mxu0 0
        %1466 = vmatpush1.bf16.msra.mxu0 %v1463
        %1467 = vmatprep.subr.bf16.mxu0 0
        %1468 = vmatpush1.bf16.msra.mxu0 0
        %1469 = vmatprep.subr.bf16.mxu0 0
        %1470 = vmatpush1.bf16.msra.mxu0 0
        %1471 = vmatprep.subr.bf16.mxu0 0
        %1472 = vmatpush1.bf16.msra.mxu0 0
        %1473 = vmatprep.subr.bf16.mxu0 0
        %1474 = vmatpush1.bf16.msra.mxu0 0
        %1475 = vmatprep.subr.bf16.mxu0 0
        %1476 = vmatpush1.bf16.msra.mxu0 0
        %1477 = vmatprep.subr.bf16.mxu0 0
        %1478 = vmatpush1.bf16.msra.mxu0 0
        %1479 = vmatprep.subr.bf16.mxu0 0
        %1480 = vmatpush1.bf16.msra.mxu0 0
        %1481 = vmatprep.subr.bf16.mxu0 0
        %1482 = vmatpush1.bf16.msra.mxu0 0
        %1483 = vmatprep.subr.bf16.mxu0 0
        %1484 = vmatpush1.bf16.msra.mxu0 0
        %1485 = vmatprep.subr.bf16.mxu0 0
        %1486 = vmatpush1.bf16.msra.mxu0 0
        %1487 = vmatprep.subr.bf16.mxu0 0
        %1488 = vmatpush1.bf16.msra.mxu0 0
        %1489 = vmatprep.subr.bf16.mxu0 0
        %1490 = vmatpush1.bf16.msra.mxu0 0
        %1491 = vmatprep.subr.bf16.mxu0 0
        %1492 = vmatpush1.bf16.msra.mxu0 0
        %1493 = vmatprep.subr.bf16.mxu0 0
        %1494 = vmatpush1.bf16.msra.mxu0 0
        %1495 = vmatprep.subr.bf16.mxu0 0
        %1496 = vmatpush1.bf16.msra.mxu0 0
        %1497 = vmatprep.mubr.bf16.mxu0 0
        %1498 = vmatmul.mubr.bf16.gmra.mrb[0].mxu0 %v1415
        %v1499 = vpop.f32.mrb[0].mxu0
        %v1500 = vadd.f32 0.0, %v1499
        %v1501 = vpop.f32.mrb[0].mxu0
        %v1502 = vpop.f32.mrb[0].mxu0
        %v1503 = vadd.f32 0.0, %v1502
        %v1504 = vpop.f32.mrb[0].mxu0
        %1505 = vmatprep.mubr.bf16.mxu0 0
        %1506 = vmatmul.mubr.bf16.gmra.mrb[0].mxu0 %v1418
        %v1507 = vpop.f32.mrb[0].mxu0
        %v1508 = vadd.f32 0.0, %v1507
        %v1509 = vpop.f32.mrb[0].mxu0
        %v1510 = vpop.f32.mrb[0].mxu0
        %v1511 = vadd.f32 0.0, %v1510
        %v1512 = vpop.f32.mrb[0].mxu0
        %1513 = vmatprep.mubr.bf16.mxu0 0
        %1514 = vmatmul.mubr.bf16.gmra.mrb[0].mxu0 %v1421
        %v1515 = vpop.f32.mrb[0].mxu0
        %v1516 = vadd.f32 0.0, %v1515
        %v1517 = vpop.f32.mrb[0].mxu0
        %v1518 = vpop.f32.mrb[0].mxu0
        %v1519 = vadd.f32 0.0, %v1518
        %v1520 = vpop.f32.mrb[0].mxu0
        %1521 = vmatprep.mubr.bf16.mxu0 0
        %1522 = vmatmul.mubr.bf16.gmra.mrb[0].mxu0 %v1424
        %v1523 = vpop.f32.mrb[0].mxu0
        %v1524 = vadd.f32 0.0, %v1523
        %v1525 = vpop.f32.mrb[0].mxu0
        %v1526 = vpop.f32.mrb[0].mxu0
        %v1527 = vadd.f32 0.0, %v1526
        %v1528 = vpop.f32.mrb[0].mxu0
        %1529 = vmatprep.mubr.bf16.mxu0 0
        %1530 = vmatmul.mubr.bf16.gmra.mrb[0].mxu0 %v1427
        %v1531 = vpop.f32.mrb[0].mxu0
        %v1532 = vadd.f32 0.0, %v1531
        %v1533 = vpop.f32.mrb[0].mxu0
        %v1534 = vpop.f32.mrb[0].mxu0
        %v1535 = vadd.f32 0.0, %v1534
        %v1536 = vpop.f32.mrb[0].mxu0
        %1537 = vmatprep.mubr.bf16.mxu0 0
        %1538 = vmatmul.mubr.bf16.gmra.mrb[0].mxu0 %v1430
        %v1539 = vpop.f32.mrb[0].mxu0
        %v1540 = vadd.f32 0.0, %v1539
        %v1541 = vpop.f32.mrb[0].mxu0
        %v1542 = vpop.f32.mrb[0].mxu0
        %v1543 = vadd.f32 0.0, %v1542
        %v1544 = vpop.f32.mrb[0].mxu0
        %1545 = vmatprep.mubr.bf16.mxu0 0
        %1546 = vmatmul.mubr.bf16.gmra.mrb[0].mxu0 %v1433
        %v1547 = vpop.f32.mrb[0].mxu0
        %v1548 = vadd.f32 0.0, %v1547
        %v1549 = vpop.f32.mrb[0].mxu0
        %v1550 = vpop.f32.mrb[0].mxu0
        %v1551 = vadd.f32 0.0, %v1550
        %v1552 = vpop.f32.mrb[0].mxu0
        %1553 = vmatprep.mubr.bf16.mxu0 0
        %1554 = vmatmul.mubr.bf16.gmra.mrb[0].mxu0 %v1436
        %v1555 = vpop.f32.mrb[0].mxu0
        %v1556 = vadd.f32 0.0, %v1555
        %v1557 = vpop.f32.mrb[0].mxu0
        %v1558 = vpop.f32.mrb[0].mxu0
        %v1559 = vadd.f32 0.0, %v1558
        %v1560 = vpop.f32.mrb[0].mxu0
        %1561 = vmatprep.mubr.bf16.mxu0 0
        %1562 = vmatmul.mubr.bf16.gmra.mrb[0].mxu0 %v1439
        %v1563 = vpop.f32.mrb[0].mxu0
        %v1564 = vadd.f32 0.0, %v1563
        %v1565 = vpop.f32.mrb[0].mxu0
        %v1566 = vpop.f32.mrb[0].mxu0
        %v1567 = vadd.f32 0.0, %v1566
        %v1568 = vpop.f32.mrb[0].mxu0
        %1569 = vmatprep.mubr.bf16.mxu0 0
        %1570 = vmatmul.mubr.bf16.gmra.mrb[0].mxu0 %v1442
        %v1571 = vpop.f32.mrb[0].mxu0
        %v1572 = vadd.f32 0.0, %v1571
        %v1573 = vpop.f32.mrb[0].mxu0
        %v1574 = vpop.f32.mrb[0].mxu0
        %v1575 = vadd.f32 0.0, %v1574
        %v1576 = vpop.f32.mrb[0].mxu0
        %1577 = vmatprep.mubr.bf16.mxu0 0
        %1578 = vmatmul.mubr.bf16.gmra.mrb[0].mxu0 %v1445
        %v1579 = vpop.f32.mrb[0].mxu0
        %v1580 = vadd.f32 0.0, %v1579
        %v1581 = vpop.f32.mrb[0].mxu0
        %v1582 = vpop.f32.mrb[0].mxu0
        %v1583 = vadd.f32 0.0, %v1582
        %v1584 = vpop.f32.mrb[0].mxu0
        %1585 = vmatprep.mubr.bf16.mxu0 0
        %1586 = vmatmul.mubr.bf16.gmra.mrb[0].mxu0 %v1448
        %v1587 = vpop.f32.mrb[0].mxu0
        %v1588 = vadd.f32 0.0, %v1587
        %v1589 = vpop.f32.mrb[0].mxu0
        %v1590 = vpop.f32.mrb[0].mxu0
        %v1591 = vadd.f32 0.0, %v1590
        %v1592 = vpop.f32.mrb[0].mxu0
        %1593 = vmatprep.mubr.bf16.mxu0 0
        %1594 = vmatmul.mubr.bf16.gmra.mrb[0].mxu0 %v1451
        %v1595 = vpop.f32.mrb[0].mxu0
        %v1596 = vadd.f32 0.0, %v1595
        %v1597 = vpop.f32.mrb[0].mxu0
        %v1598 = vpop.f32.mrb[0].mxu0
        %v1599 = vadd.f32 0.0, %v1598
        %v1600 = vpop.f32.mrb[0].mxu0
        %1601 = vmatprep.mubr.bf16.mxu0 0
        %1602 = vmatmul.mubr.bf16.gmra.mrb[0].mxu0 %v1454
        %v1603 = vpop.f32.mrb[0].mxu0
        %v1604 = vadd.f32 0.0, %v1603
        %v1605 = vpop.f32.mrb[0].mxu0
        %v1606 = vpop.f32.mrb[0].mxu0
        %v1607 = vadd.f32 0.0, %v1606
        %v1608 = vpop.f32.mrb[0].mxu0
        %1609 = vmatprep.mubr.bf16.mxu0 0
        %1610 = vmatmul.mubr.bf16.gmra.mrb[0].mxu0 %v1457
        %v1611 = vpop.f32.mrb[0].mxu0
        %v1612 = vadd.f32 0.0, %v1611
        %v1613 = vpop.f32.mrb[0].mxu0
        %v1614 = vpop.f32.mrb[0].mxu0
        %v1615 = vadd.f32 0.0, %v1614
        %v1616 = vpop.f32.mrb[0].mxu0
        %1617 = vmatprep.mubr.bf16.mxu0 0
        %1618 = vmatmul.mubr.bf16.gmra.mrb[0].mxu0 %v1460
        %v1619 = vpop.f32.mrb[0].mxu0
        %v1620 = vadd.f32 0.0, %v1619
        %v1621 = vpop.f32.mrb[0].mxu0
        %v1622 = vpop.f32.mrb[0].mxu0
        %v1623 = vadd.f32 0.0, %v1622
        %v1624 = vpop.f32.mrb[0].mxu0
        %1625 = vdwg.mxu0
        %v1626 = vadd.f32 %v1267, %v1500
        %v1627 = vadd.f32 %v1268, %v1503
        %v1628 = vadd.f32 %v1269, %v1508
        %v1629 = vadd.f32 %v1270, %v1511
        %v1630 = vadd.f32 %v1271, %v1516
        %v1631 = vadd.f32 %v1272, %v1519
        %v1632 = vadd.f32 %v1273, %v1524
        %v1633 = vadd.f32 %v1274, %v1527
        %v1634 = vadd.f32 %v1275, %v1532
        %v1635 = vadd.f32 %v1276, %v1535
        %v1636 = vadd.f32 %v1277, %v1540
        %v1637 = vadd.f32 %v1278, %v1543
        %v1638 = vadd.f32 %v1279, %v1548
        %v1639 = vadd.f32 %v1280, %v1551
        %v1640 = vadd.f32 %v1281, %v1556
        %v1641 = vadd.f32 %v1282, %v1559
        %v1642 = vadd.f32 %v1283, %v1564
        %v1643 = vadd.f32 %v1284, %v1567
        %v1644 = vadd.f32 %v1285, %v1572
        %v1645 = vadd.f32 %v1286, %v1575
        %v1646 = vadd.f32 %v1287, %v1580
        %v1647 = vadd.f32 %v1288, %v1583
        %v1648 = vadd.f32 %v1289, %v1588
        %v1649 = vadd.f32 %v1290, %v1591
        %v1650 = vadd.f32 %v1291, %v1596
        %v1651 = vadd.f32 %v1292, %v1599
        %v1652 = vadd.f32 %v1293, %v1604
        %v1653 = vadd.f32 %v1294, %v1607
        %v1654 = vadd.f32 %v1295, %v1612
        %v1655 = vadd.f32 %v1296, %v1615
        %v1656 = vadd.f32 %v1297, %v1620
        %v1657 = vadd.f32 %v1298, %v1623
        %v1706 = vrot.slane %v1348, 1
        %v1707 = vrot.slane %v1349, 1
        %v1708 = vsel %vm367, %v1706, %v1707
        %v1709 = vrot.slane %v1350, 1
        %v1710 = vsel %vm367, %v1707, %v1709
        %v1711 = vrot.slane %v1351, 1
        %v1712 = vrot.slane %v1352, 1
        %v1713 = vsel %vm367, %v1711, %v1712
        %v1714 = vrot.slane %v1353, 1
        %v1715 = vsel %vm367, %v1712, %v1714
        %v1716 = vrot.slane %v1354, 1
        %v1717 = vrot.slane %v1355, 1
        %v1718 = vsel %vm367, %v1716, %v1717
        %v1719 = vrot.slane %v1356, 1
        %v1720 = vsel %vm367, %v1717, %v1719
        %v1721 = vrot.slane %v1357, 1
        %v1722 = vrot.slane %v1358, 1
        %v1723 = vsel %vm367, %v1721, %v1722
        %v1724 = vrot.slane %v1359, 1
        %v1725 = vsel %vm367, %v1722, %v1724
        %v1726 = vrot.slane %v1360, 1
        %v1727 = vrot.slane %v1361, 1
        %v1728 = vsel %vm367, %v1726, %v1727
        %v1729 = vrot.slane %v1362, 1
        %v1730 = vsel %vm367, %v1727, %v1729
        %v1731 = vrot.slane %v1363, 1
        %v1732 = vrot.slane %v1364, 1
        %v1733 = vsel %vm367, %v1731, %v1732
        %v1734 = vrot.slane %v1365, 1
        %v1735 = vsel %vm367, %v1732, %v1734
        %v1736 = vrot.slane %v1366, 1
        %v1737 = vrot.slane %v1367, 1
        %v1738 = vsel %vm367, %v1736, %v1737
        %v1739 = vrot.slane %v1368, 1
        %v1740 = vsel %vm367, %v1737, %v1739
        %v1741 = vrot.slane %v1369, 1
        %v1742 = vrot.slane %v1370, 1
        %v1743 = vsel %vm367, %v1741, %v1742
        %v1744 = vrot.slane %v1371, 1
        %v1745 = vsel %vm367, %v1742, %v1744
        %v1746 = vrot.slane %v1372, 1
        %v1747 = vrot.slane %v1373, 1
        %v1748 = vsel %vm367, %v1746, %v1747
        %v1749 = vrot.slane %v1374, 1
        %v1750 = vsel %vm367, %v1747, %v1749
        %v1751 = vrot.slane %v1375, 1
        %v1752 = vrot.slane %v1376, 1
        %v1753 = vsel %vm367, %v1751, %v1752
        %v1754 = vrot.slane %v1377, 1
        %v1755 = vsel %vm367, %v1752, %v1754
        %v1756 = vrot.slane %v1378, 1
        %v1757 = vrot.slane %v1379, 1
        %v1758 = vsel %vm367, %v1756, %v1757
        %v1759 = vrot.slane %v1380, 1
        %v1760 = vsel %vm367, %v1757, %v1759
        %v1761 = vrot.slane %v1381, 1
        %v1762 = vrot.slane %v1382, 1
        %v1763 = vsel %vm367, %v1761, %v1762
        %v1764 = vrot.slane %v1383, 1
        %v1765 = vsel %vm367, %v1762, %v1764
        %v1766 = vrot.slane %v1384, 1
        %v1767 = vrot.slane %v1385, 1
        %v1768 = vsel %vm367, %v1766, %v1767
        %v1769 = vrot.slane %v1386, 1
        %v1770 = vsel %vm367, %v1767, %v1769
        %v1771 = vrot.slane %v1387, 1
        %v1772 = vrot.slane %v1388, 1
        %v1773 = vsel %vm367, %v1771, %v1772
        %v1774 = vrot.slane %v1389, 1
        %v1775 = vsel %vm367, %v1772, %v1774
        %v1776 = vrot.slane %v1390, 1
        %v1777 = vrot.slane %v1391, 1
        %v1778 = vsel %vm367, %v1776, %v1777
        %v1779 = vrot.slane %v1392, 1
        %v1780 = vsel %vm367, %v1777, %v1779
        %v1781 = vrot.slane %v1393, 1
        %v1782 = vrot.slane %v1394, 1
        %v1783 = vsel %vm367, %v1781, %v1782
        %v1784 = vrot.slane %v1395, 1
        %v1785 = vsel %vm367, %v1782, %v1784
        %v1818 = vpack.c.bf16 %v1710, %v1708
        %v1819 = vpack.c.bf16 %v1715, %v1713
        %v1820 = vpack.c.bf16 %v1720, %v1718
        %v1821 = vpack.c.bf16 %v1725, %v1723
        %v1822 = vpack.c.bf16 %v1730, %v1728
        %v1823 = vpack.c.bf16 %v1735, %v1733
        %v1824 = vpack.c.bf16 %v1740, %v1738
        %v1825 = vpack.c.bf16 %v1745, %v1743
        %v1826 = vpack.c.bf16 %v1750, %v1748
        %v1827 = vpack.c.bf16 %v1755, %v1753
        %v1828 = vpack.c.bf16 %v1760, %v1758
        %v1829 = vpack.c.bf16 %v1765, %v1763
        %v1830 = vpack.c.bf16 %v1770, %v1768
        %v1831 = vpack.c.bf16 %v1775, %v1773
        %v1832 = vpack.c.bf16 %v1780, %v1778
        %v1833 = vpack.c.bf16 %v1785, %v1783
        %s1834 = scalar_lea.vmem %s1, 8
        %v1835 = vld [vmem:[%s1834] sm:$0x3]
        %v1837 = vsel %vm498, %v1818, 0
        %v1840 = vsel %vm498, %v1819, 0
        %v1843 = vsel %vm498, %v1820, 0
        %v1846 = vsel %vm498, %v1821, 0
        %v1849 = vsel %vm498, %v1822, 0
        %v1852 = vsel %vm498, %v1823, 0
        %v1855 = vsel %vm498, %v1824, 0
        %v1858 = vsel %vm498, %v1825, 0
        %v1861 = vsel %vm498, %v1826, 0
        %v1864 = vsel %vm498, %v1827, 0
        %v1867 = vsel %vm498, %v1828, 0
        %v1870 = vsel %vm498, %v1829, 0
        %v1873 = vsel %vm498, %v1830, 0
        %v1876 = vsel %vm498, %v1831, 0
        %v1879 = vsel %vm498, %v1832, 0
        %v1882 = vsel %vm498, %v1833, 0
        %v1885 = vsel %vm547, %v1835, 0
        %1887 = vmatprep.subr.bf16.mxu0 0
        %1888 = vmatpush1.bf16.msra.mxu0 %v1885
        %1889 = vmatprep.subr.bf16.mxu0 0
        %1890 = vmatpush1.bf16.msra.mxu0 0
        %1891 = vmatprep.subr.bf16.mxu0 0
        %1892 = vmatpush1.bf16.msra.mxu0 0
        %1893 = vmatprep.subr.bf16.mxu0 0
        %1894 = vmatpush1.bf16.msra.mxu0 0
        %1895 = vmatprep.subr.bf16.mxu0 0
        %1896 = vmatpush1.bf16.msra.mxu0 0
        %1897 = vmatprep.subr.bf16.mxu0 0
        %1898 = vmatpush1.bf16.msra.mxu0 0
        %1899 = vmatprep.subr.bf16.mxu0 0
        %1900 = vmatpush1.bf16.msra.mxu0 0
        %1901 = vmatprep.subr.bf16.mxu0 0
        %1902 = vmatpush1.bf16.msra.mxu0 0
        %1903 = vmatprep.subr.bf16.mxu0 0
        %1904 = vmatpush1.bf16.msra.mxu0 0
        %1905 = vmatprep.subr.bf16.mxu0 0
        %1906 = vmatpush1.bf16.msra.mxu0 0
        %1907 = vmatprep.subr.bf16.mxu0 0
        %1908 = vmatpush1.bf16.msra.mxu0 0
        %1909 = vmatprep.subr.bf16.mxu0 0
        %1910 = vmatpush1.bf16.msra.mxu0 0
        %1911 = vmatprep.subr.bf16.mxu0 0
        %1912 = vmatpush1.bf16.msra.mxu0 0
        %1913 = vmatprep.subr.bf16.mxu0 0
        %1914 = vmatpush1.bf16.msra.mxu0 0
        %1915 = vmatprep.subr.bf16.mxu0 0
        %1916 = vmatpush1.bf16.msra.mxu0 0
        %1917 = vmatprep.subr.bf16.mxu0 0
        %1918 = vmatpush1.bf16.msra.mxu0 0
        %1919 = vmatprep.mubr.bf16.mxu0 0
        %1920 = vmatmul.mubr.bf16.gmra.mrb[0].mxu0 %v1837
        %v1921 = vpop.f32.mrb[0].mxu0
        %v1922 = vadd.f32 0.0, %v1921
        %v1923 = vpop.f32.mrb[0].mxu0
        %v1924 = vpop.f32.mrb[0].mxu0
        %v1925 = vadd.f32 0.0, %v1924
        %v1926 = vpop.f32.mrb[0].mxu0
        %1927 = vmatprep.mubr.bf16.mxu0 0
        %1928 = vmatmul.mubr.bf16.gmra.mrb[0].mxu0 %v1840
        %v1929 = vpop.f32.mrb[0].mxu0
        %v1930 = vadd.f32 0.0, %v1929
        %v1931 = vpop.f32.mrb[0].mxu0
        %v1932 = vpop.f32.mrb[0].mxu0
        %v1933 = vadd.f32 0.0, %v1932
        %v1934 = vpop.f32.mrb[0].mxu0
        %1935 = vmatprep.mubr.bf16.mxu0 0
        %1936 = vmatmul.mubr.bf16.gmra.mrb[0].mxu0 %v1843
        %v1937 = vpop.f32.mrb[0].mxu0
        %v1938 = vadd.f32 0.0, %v1937
        %v1939 = vpop.f32.mrb[0].mxu0
        %v1940 = vpop.f32.mrb[0].mxu0
        %v1941 = vadd.f32 0.0, %v1940
        %v1942 = vpop.f32.mrb[0].mxu0
        %1943 = vmatprep.mubr.bf16.mxu0 0
        %1944 = vmatmul.mubr.bf16.gmra.mrb[0].mxu0 %v1846
        %v1945 = vpop.f32.mrb[0].mxu0
        %v1946 = vadd.f32 0.0, %v1945
        %v1947 = vpop.f32.mrb[0].mxu0
        %v1948 = vpop.f32.mrb[0].mxu0
        %v1949 = vadd.f32 0.0, %v1948
        %v1950 = vpop.f32.mrb[0].mxu0
        %1951 = vmatprep.mubr.bf16.mxu0 0
        %1952 = vmatmul.mubr.bf16.gmra.mrb[0].mxu0 %v1849
        %v1953 = vpop.f32.mrb[0].mxu0
        %v1954 = vadd.f32 0.0, %v1953
        %v1955 = vpop.f32.mrb[0].mxu0
        %v1956 = vpop.f32.mrb[0].mxu0
        %v1957 = vadd.f32 0.0, %v1956
        %v1958 = vpop.f32.mrb[0].mxu0
        %1959 = vmatprep.mubr.bf16.mxu0 0
        %1960 = vmatmul.mubr.bf16.gmra.mrb[0].mxu0 %v1852
        %v1961 = vpop.f32.mrb[0].mxu0
        %v1962 = vadd.f32 0.0, %v1961
        %v1963 = vpop.f32.mrb[0].mxu0
        %v1964 = vpop.f32.mrb[0].mxu0
        %v1965 = vadd.f32 0.0, %v1964
        %v1966 = vpop.f32.mrb[0].mxu0
        %1967 = vmatprep.mubr.bf16.mxu0 0
        %1968 = vmatmul.mubr.bf16.gmra.mrb[0].mxu0 %v1855
        %v1969 = vpop.f32.mrb[0].mxu0
        %v1970 = vadd.f32 0.0, %v1969
        %v1971 = vpop.f32.mrb[0].mxu0
        %v1972 = vpop.f32.mrb[0].mxu0
        %v1973 = vadd.f32 0.0, %v1972
        %v1974 = vpop.f32.mrb[0].mxu0
        %1975 = vmatprep.mubr.bf16.mxu0 0
        %1976 = vmatmul.mubr.bf16.gmra.mrb[0].mxu0 %v1858
        %v1977 = vpop.f32.mrb[0].mxu0
        %v1978 = vadd.f32 0.0, %v1977
        %v1979 = vpop.f32.mrb[0].mxu0
        %v1980 = vpop.f32.mrb[0].mxu0
        %v1981 = vadd.f32 0.0, %v1980
        %v1982 = vpop.f32.mrb[0].mxu0
        %1983 = vmatprep.mubr.bf16.mxu0 0
        %1984 = vmatmul.mubr.bf16.gmra.mrb[0].mxu0 %v1861
        %v1985 = vpop.f32.mrb[0].mxu0
        %v1986 = vadd.f32 0.0, %v1985
        %v1987 = vpop.f32.mrb[0].mxu0
        %v1988 = vpop.f32.mrb[0].mxu0
        %v1989 = vadd.f32 0.0, %v1988
        %v1990 = vpop.f32.mrb[0].mxu0
        %1991 = vmatprep.mubr.bf16.mxu0 0
        %1992 = vmatmul.mubr.bf16.gmra.mrb[0].mxu0 %v1864
        %v1993 = vpop.f32.mrb[0].mxu0
        %v1994 = vadd.f32 0.0, %v1993
        %v1995 = vpop.f32.mrb[0].mxu0
        %v1996 = vpop.f32.mrb[0].mxu0
        %v1997 = vadd.f32 0.0, %v1996
        %v1998 = vpop.f32.mrb[0].mxu0
        %1999 = vmatprep.mubr.bf16.mxu0 0
        %2000 = vmatmul.mubr.bf16.gmra.mrb[0].mxu0 %v1867
        %v2001 = vpop.f32.mrb[0].mxu0
        %v2002 = vadd.f32 0.0, %v2001
        %v2003 = vpop.f32.mrb[0].mxu0
        %v2004 = vpop.f32.mrb[0].mxu0
        %v2005 = vadd.f32 0.0, %v2004
        %v2006 = vpop.f32.mrb[0].mxu0
        %2007 = vmatprep.mubr.bf16.mxu0 0
        %2008 = vmatmul.mubr.bf16.gmra.mrb[0].mxu0 %v1870
        %v2009 = vpop.f32.mrb[0].mxu0
        %v2010 = vadd.f32 0.0, %v2009
        %v2011 = vpop.f32.mrb[0].mxu0
        %v2012 = vpop.f32.mrb[0].mxu0
        %v2013 = vadd.f32 0.0, %v2012
        %v2014 = vpop.f32.mrb[0].mxu0
        %2015 = vmatprep.mubr.bf16.mxu0 0
        %2016 = vmatmul.mubr.bf16.gmra.mrb[0].mxu0 %v1873
        %v2017 = vpop.f32.mrb[0].mxu0
        %v2018 = vadd.f32 0.0, %v2017
        %v2019 = vpop.f32.mrb[0].mxu0
        %v2020 = vpop.f32.mrb[0].mxu0
        %v2021 = vadd.f32 0.0, %v2020
        %v2022 = vpop.f32.mrb[0].mxu0
        %2023 = vmatprep.mubr.bf16.mxu0 0
        %2024 = vmatmul.mubr.bf16.gmra.mrb[0].mxu0 %v1876
        %v2025 = vpop.f32.mrb[0].mxu0
        %v2026 = vadd.f32 0.0, %v2025
        %v2027 = vpop.f32.mrb[0].mxu0
        %v2028 = vpop.f32.mrb[0].mxu0
        %v2029 = vadd.f32 0.0, %v2028
        %v2030 = vpop.f32.mrb[0].mxu0
        %2031 = vmatprep.mubr.bf16.mxu0 0
        %2032 = vmatmul.mubr.bf16.gmra.mrb[0].mxu0 %v1879
        %v2033 = vpop.f32.mrb[0].mxu0
        %v2034 = vadd.f32 0.0, %v2033
        %v2035 = vpop.f32.mrb[0].mxu0
        %v2036 = vpop.f32.mrb[0].mxu0
        %v2037 = vadd.f32 0.0, %v2036
        %v2038 = vpop.f32.mrb[0].mxu0
        %2039 = vmatprep.mubr.bf16.mxu0 0
        %2040 = vmatmul.mubr.bf16.gmra.mrb[0].mxu0 %v1882
        %v2041 = vpop.f32.mrb[0].mxu0
        %v2042 = vadd.f32 0.0, %v2041
        %v2043 = vpop.f32.mrb[0].mxu0
        %v2044 = vpop.f32.mrb[0].mxu0
        %v2045 = vadd.f32 0.0, %v2044
        %v2046 = vpop.f32.mrb[0].mxu0
        %2047 = vdwg.mxu0
        %v2048 = vadd.f32 %v1626, %v1922
        %v2049 = vadd.f32 %v1627, %v1925
        %v2050 = vadd.f32 %v1628, %v1930
        %v2051 = vadd.f32 %v1629, %v1933
        %v2052 = vadd.f32 %v1630, %v1938
        %v2053 = vadd.f32 %v1631, %v1941
        %v2054 = vadd.f32 %v1632, %v1946
        %v2055 = vadd.f32 %v1633, %v1949
        %v2056 = vadd.f32 %v1634, %v1954
        %v2057 = vadd.f32 %v1635, %v1957
        %v2058 = vadd.f32 %v1636, %v1962
        %v2059 = vadd.f32 %v1637, %v1965
        %v2060 = vadd.f32 %v1638, %v1970
        %v2061 = vadd.f32 %v1639, %v1973
        %v2062 = vadd.f32 %v1640, %v1978
        %v2063 = vadd.f32 %v1641, %v1981
        %v2064 = vadd.f32 %v1642, %v1986
        %v2065 = vadd.f32 %v1643, %v1989
        %v2066 = vadd.f32 %v1644, %v1994
        %v2067 = vadd.f32 %v1645, %v1997
        %v2068 = vadd.f32 %v1646, %v2002
        %v2069 = vadd.f32 %v1647, %v2005
        %v2070 = vadd.f32 %v1648, %v2010
        %v2071 = vadd.f32 %v1649, %v2013
        %v2072 = vadd.f32 %v1650, %v2018
        %v2073 = vadd.f32 %v1651, %v2021
        %v2074 = vadd.f32 %v1652, %v2026
        %v2075 = vadd.f32 %v1653, %v2029
        %v2076 = vadd.f32 %v1654, %v2034
        %v2077 = vadd.f32 %v1655, %v2037
        %v2078 = vadd.f32 %v1656, %v2042
        %v2079 = vadd.f32 %v1657, %v2045
        %v2080 = vrot.slane %v1348, 2
        %v2081 = vrot.slane %v1349, 2
        %v2082 = vsel %vm924, %v2080, %v2081
        %v2083 = vrot.slane %v1350, 2
        %v2084 = vsel %vm924, %v2081, %v2083
        %v2085 = vrot.slane %v1351, 2
        %v2086 = vrot.slane %v1352, 2
        %v2087 = vsel %vm924, %v2085, %v2086
        %v2088 = vrot.slane %v1353, 2
        %v2089 = vsel %vm924, %v2086, %v2088
        %v2090 = vrot.slane %v1354, 2
        %v2091 = vrot.slane %v1355, 2
        %v2092 = vsel %vm924, %v2090, %v2091
        %v2093 = vrot.slane %v1356, 2
        %v2094 = vsel %vm924, %v2091, %v2093
        %v2095 = vrot.slane %v1357, 2
        %v2096 = vrot.slane %v1358, 2
        %v2097 = vsel %vm924, %v2095, %v2096
        %v2098 = vrot.slane %v1359, 2
        %v2099 = vsel %vm924, %v2096, %v2098
        %v2100 = vrot.slane %v1360, 2
        %v2101 = vrot.slane %v1361, 2
        %v2102 = vsel %vm924, %v2100, %v2101
        %v2103 = vrot.slane %v1362, 2
        %v2104 = vsel %vm924, %v2101, %v2103
        %v2105 = vrot.slane %v1363, 2
        %v2106 = vrot.slane %v1364, 2
        %v2107 = vsel %vm924, %v2105, %v2106
        %v2108 = vrot.slane %v1365, 2
        %v2109 = vsel %vm924, %v2106, %v2108
        %v2110 = vrot.slane %v1366, 2
        %v2111 = vrot.slane %v1367, 2
        %v2112 = vsel %vm924, %v2110, %v2111
        %v2113 = vrot.slane %v1368, 2
        %v2114 = vsel %vm924, %v2111, %v2113
        %v2115 = vrot.slane %v1369, 2
        %v2116 = vrot.slane %v1370, 2
        %v2117 = vsel %vm924, %v2115, %v2116
        %v2118 = vrot.slane %v1371, 2
        %v2119 = vsel %vm924, %v2116, %v2118
        %v2120 = vrot.slane %v1372, 2
        %v2121 = vrot.slane %v1373, 2
        %v2122 = vsel %vm924, %v2120, %v2121
        %v2123 = vrot.slane %v1374, 2
        %v2124 = vsel %vm924, %v2121, %v2123
        %v2125 = vrot.slane %v1375, 2
        %v2126 = vrot.slane %v1376, 2
        %v2127 = vsel %vm924, %v2125, %v2126
        %v2128 = vrot.slane %v1377, 2
        %v2129 = vsel %vm924, %v2126, %v2128
        %v2130 = vrot.slane %v1378, 2
        %v2131 = vrot.slane %v1379, 2
        %v2132 = vsel %vm924, %v2130, %v2131
        %v2133 = vrot.slane %v1380, 2
        %v2134 = vsel %vm924, %v2131, %v2133
        %v2135 = vrot.slane %v1381, 2
        %v2136 = vrot.slane %v1382, 2
        %v2137 = vsel %vm924, %v2135, %v2136
        %v2138 = vrot.slane %v1383, 2
        %v2139 = vsel %vm924, %v2136, %v2138
        %v2140 = vrot.slane %v1384, 2
        %v2141 = vrot.slane %v1385, 2
        %v2142 = vsel %vm924, %v2140, %v2141
        %v2143 = vrot.slane %v1386, 2
        %v2144 = vsel %vm924, %v2141, %v2143
        %v2145 = vrot.slane %v1387, 2
        %v2146 = vrot.slane %v1388, 2
        %v2147 = vsel %vm924, %v2145, %v2146
        %v2148 = vrot.slane %v1389, 2
        %v2149 = vsel %vm924, %v2146, %v2148
        %v2150 = vrot.slane %v1390, 2
        %v2151 = vrot.slane %v1391, 2
        %v2152 = vsel %vm924, %v2150, %v2151
        %v2153 = vrot.slane %v1392, 2
        %v2154 = vsel %vm924, %v2151, %v2153
        %v2155 = vrot.slane %v1393, 2
        %v2156 = vrot.slane %v1394, 2
        %v2157 = vsel %vm924, %v2155, %v2156
        %v2158 = vrot.slane %v1395, 2
        %v2159 = vsel %vm924, %v2156, %v2158
        %v2192 = vpack.c.bf16 %v2084, %v2082
        %v2193 = vpack.c.bf16 %v2089, %v2087
        %v2194 = vpack.c.bf16 %v2094, %v2092
        %v2195 = vpack.c.bf16 %v2099, %v2097
        %v2196 = vpack.c.bf16 %v2104, %v2102
        %v2197 = vpack.c.bf16 %v2109, %v2107
        %v2198 = vpack.c.bf16 %v2114, %v2112
        %v2199 = vpack.c.bf16 %v2119, %v2117
        %v2200 = vpack.c.bf16 %v2124, %v2122
        %v2201 = vpack.c.bf16 %v2129, %v2127
        %v2202 = vpack.c.bf16 %v2134, %v2132
        %v2203 = vpack.c.bf16 %v2139, %v2137
        %v2204 = vpack.c.bf16 %v2144, %v2142
        %v2205 = vpack.c.bf16 %v2149, %v2147
        %v2206 = vpack.c.bf16 %v2154, %v2152
        %v2207 = vpack.c.bf16 %v2159, %v2157
        %s2208 = scalar_lea.vmem %s1, 10
        %v2209 = vld [vmem:[%s2208] sm:$0x3]
        %v2211 = vsel %vm498, %v2192, 0
        %v2214 = vsel %vm498, %v2193, 0
        %v2217 = vsel %vm498, %v2194, 0
        %v2220 = vsel %vm498, %v2195, 0
        %v2223 = vsel %vm498, %v2196, 0
        %v2226 = vsel %vm498, %v2197, 0
        %v2229 = vsel %vm498, %v2198, 0
        %v2232 = vsel %vm498, %v2199, 0
        %v2235 = vsel %vm498, %v2200, 0
        %v2238 = vsel %vm498, %v2201, 0
        %v2241 = vsel %vm498, %v2202, 0
        %v2244 = vsel %vm498, %v2203, 0
        %v2247 = vsel %vm498, %v2204, 0
        %v2250 = vsel %vm498, %v2205, 0
        %v2253 = vsel %vm498, %v2206, 0
        %v2256 = vsel %vm498, %v2207, 0
        %v2259 = vsel %vm547, %v2209, 0
        %2261 = vmatprep.subr.bf16.mxu0 0
        %2262 = vmatpush1.bf16.msra.mxu0 %v2259
        %2263 = vmatprep.subr.bf16.mxu0 0
        %2264 = vmatpush1.bf16.msra.mxu0 0
        %2265 = vmatprep.subr.bf16.mxu0 0
        %2266 = vmatpush1.bf16.msra.mxu0 0
        %2267 = vmatprep.subr.bf16.mxu0 0
        %2268 = vmatpush1.bf16.msra.mxu0 0
        %2269 = vmatprep.subr.bf16.mxu0 0
        %2270 = vmatpush1.bf16.msra.mxu0 0
        %2271 = vmatprep.subr.bf16.mxu0 0
        %2272 = vmatpush1.bf16.msra.mxu0 0
        %2273 = vmatprep.subr.bf16.mxu0 0
        %2274 = vmatpush1.bf16.msra.mxu0 0
        %2275 = vmatprep.subr.bf16.mxu0 0
        %2276 = vmatpush1.bf16.msra.mxu0 0
        %2277 = vmatprep.subr.bf16.mxu0 0
        %2278 = vmatpush1.bf16.msra.mxu0 0
        %2279 = vmatprep.subr.bf16.mxu0 0
        %2280 = vmatpush1.bf16.msra.mxu0 0
        %2281 = vmatprep.subr.bf16.mxu0 0
        %2282 = vmatpush1.bf16.msra.mxu0 0
        %2283 = vmatprep.subr.bf16.mxu0 0
        %2284 = vmatpush1.bf16.msra.mxu0 0
        %2285 = vmatprep.subr.bf16.mxu0 0
        %2286 = vmatpush1.bf16.msra.mxu0 0
        %2287 = vmatprep.subr.bf16.mxu0 0
        %2288 = vmatpush1.bf16.msra.mxu0 0
        %2289 = vmatprep.subr.bf16.mxu0 0
        %2290 = vmatpush1.bf16.msra.mxu0 0
        %2291 = vmatprep.subr.bf16.mxu0 0
        %2292 = vmatpush1.bf16.msra.mxu0 0
        %2293 = vmatprep.mubr.bf16.mxu0 0
        %2294 = vmatmul.mubr.bf16.gmra.mrb[0].mxu0 %v2211
        %v2295 = vpop.f32.mrb[0].mxu0
        %v2296 = vadd.f32 0.0, %v2295
        %v2297 = vpop.f32.mrb[0].mxu0
        %v2298 = vpop.f32.mrb[0].mxu0
        %v2299 = vadd.f32 0.0, %v2298
        %v2300 = vpop.f32.mrb[0].mxu0
        %2301 = vmatprep.mubr.bf16.mxu0 0
        %2302 = vmatmul.mubr.bf16.gmra.mrb[0].mxu0 %v2214
        %v2303 = vpop.f32.mrb[0].mxu0
        %v2304 = vadd.f32 0.0, %v2303
        %v2305 = vpop.f32.mrb[0].mxu0
        %v2306 = vpop.f32.mrb[0].mxu0
        %v2307 = vadd.f32 0.0, %v2306
        %v2308 = vpop.f32.mrb[0].mxu0
        %2309 = vmatprep.mubr.bf16.mxu0 0
        %2310 = vmatmul.mubr.bf16.gmra.mrb[0].mxu0 %v2217
        %v2311 = vpop.f32.mrb[0].mxu0
        %v2312 = vadd.f32 0.0, %v2311
        %v2313 = vpop.f32.mrb[0].mxu0
        %v2314 = vpop.f32.mrb[0].mxu0
        %v2315 = vadd.f32 0.0, %v2314
        %v2316 = vpop.f32.mrb[0].mxu0
        %2317 = vmatprep.mubr.bf16.mxu0 0
        %2318 = vmatmul.mubr.bf16.gmra.mrb[0].mxu0 %v2220
        %v2319 = vpop.f32.mrb[0].mxu0
        %v2320 = vadd.f32 0.0, %v2319
        %v2321 = vpop.f32.mrb[0].mxu0
        %v2322 = vpop.f32.mrb[0].mxu0
        %v2323 = vadd.f32 0.0, %v2322
        %v2324 = vpop.f32.mrb[0].mxu0
        %2325 = vmatprep.mubr.bf16.mxu0 0
        %2326 = vmatmul.mubr.bf16.gmra.mrb[0].mxu0 %v2223
        %v2327 = vpop.f32.mrb[0].mxu0
        %v2328 = vadd.f32 0.0, %v2327
        %v2329 = vpop.f32.mrb[0].mxu0
        %v2330 = vpop.f32.mrb[0].mxu0
        %v2331 = vadd.f32 0.0, %v2330
        %v2332 = vpop.f32.mrb[0].mxu0
        %2333 = vmatprep.mubr.bf16.mxu0 0
        %2334 = vmatmul.mubr.bf16.gmra.mrb[0].mxu0 %v2226
        %v2335 = vpop.f32.mrb[0].mxu0
        %v2336 = vadd.f32 0.0, %v2335
        %v2337 = vpop.f32.mrb[0].mxu0
        %v2338 = vpop.f32.mrb[0].mxu0
        %v2339 = vadd.f32 0.0, %v2338
        %v2340 = vpop.f32.mrb[0].mxu0
        %2341 = vmatprep.mubr.bf16.mxu0 0
        %2342 = vmatmul.mubr.bf16.gmra.mrb[0].mxu0 %v2229
        %v2343 = vpop.f32.mrb[0].mxu0
        %v2344 = vadd.f32 0.0, %v2343
        %v2345 = vpop.f32.mrb[0].mxu0
        %v2346 = vpop.f32.mrb[0].mxu0
        %v2347 = vadd.f32 0.0, %v2346
        %v2348 = vpop.f32.mrb[0].mxu0
        %2349 = vmatprep.mubr.bf16.mxu0 0
        %2350 = vmatmul.mubr.bf16.gmra.mrb[0].mxu0 %v2232
        %v2351 = vpop.f32.mrb[0].mxu0
        %v2352 = vadd.f32 0.0, %v2351
        %v2353 = vpop.f32.mrb[0].mxu0
        %v2354 = vpop.f32.mrb[0].mxu0
        %v2355 = vadd.f32 0.0, %v2354
        %v2356 = vpop.f32.mrb[0].mxu0
        %2357 = vmatprep.mubr.bf16.mxu0 0
        %2358 = vmatmul.mubr.bf16.gmra.mrb[0].mxu0 %v2235
        %v2359 = vpop.f32.mrb[0].mxu0
        %v2360 = vadd.f32 0.0, %v2359
        %v2361 = vpop.f32.mrb[0].mxu0
        %v2362 = vpop.f32.mrb[0].mxu0
        %v2363 = vadd.f32 0.0, %v2362
        %v2364 = vpop.f32.mrb[0].mxu0
        %2365 = vmatprep.mubr.bf16.mxu0 0
        %2366 = vmatmul.mubr.bf16.gmra.mrb[0].mxu0 %v2238
        %v2367 = vpop.f32.mrb[0].mxu0
        %v2368 = vadd.f32 0.0, %v2367
        %v2369 = vpop.f32.mrb[0].mxu0
        %v2370 = vpop.f32.mrb[0].mxu0
        %v2371 = vadd.f32 0.0, %v2370
        %v2372 = vpop.f32.mrb[0].mxu0
        %2373 = vmatprep.mubr.bf16.mxu0 0
        %2374 = vmatmul.mubr.bf16.gmra.mrb[0].mxu0 %v2241
        %v2375 = vpop.f32.mrb[0].mxu0
        %v2376 = vadd.f32 0.0, %v2375
        %v2377 = vpop.f32.mrb[0].mxu0
        %v2378 = vpop.f32.mrb[0].mxu0
        %v2379 = vadd.f32 0.0, %v2378
        %v2380 = vpop.f32.mrb[0].mxu0
        %2381 = vmatprep.mubr.bf16.mxu0 0
        %2382 = vmatmul.mubr.bf16.gmra.mrb[0].mxu0 %v2244
        %v2383 = vpop.f32.mrb[0].mxu0
        %v2384 = vadd.f32 0.0, %v2383
        %v2385 = vpop.f32.mrb[0].mxu0
        %v2386 = vpop.f32.mrb[0].mxu0
        %v2387 = vadd.f32 0.0, %v2386
        %v2388 = vpop.f32.mrb[0].mxu0
        %2389 = vmatprep.mubr.bf16.mxu0 0
        %2390 = vmatmul.mubr.bf16.gmra.mrb[0].mxu0 %v2247
        %v2391 = vpop.f32.mrb[0].mxu0
        %v2392 = vadd.f32 0.0, %v2391
        %v2393 = vpop.f32.mrb[0].mxu0
        %v2394 = vpop.f32.mrb[0].mxu0
        %v2395 = vadd.f32 0.0, %v2394
        %v2396 = vpop.f32.mrb[0].mxu0
        %2397 = vmatprep.mubr.bf16.mxu0 0
        %2398 = vmatmul.mubr.bf16.gmra.mrb[0].mxu0 %v2250
        %v2399 = vpop.f32.mrb[0].mxu0
        %v2400 = vadd.f32 0.0, %v2399
        %v2401 = vpop.f32.mrb[0].mxu0
        %v2402 = vpop.f32.mrb[0].mxu0
        %v2403 = vadd.f32 0.0, %v2402
        %v2404 = vpop.f32.mrb[0].mxu0
        %2405 = vmatprep.mubr.bf16.mxu0 0
        %2406 = vmatmul.mubr.bf16.gmra.mrb[0].mxu0 %v2253
        %v2407 = vpop.f32.mrb[0].mxu0
        %v2408 = vadd.f32 0.0, %v2407
        %v2409 = vpop.f32.mrb[0].mxu0
        %v2410 = vpop.f32.mrb[0].mxu0
        %v2411 = vadd.f32 0.0, %v2410
        %v2412 = vpop.f32.mrb[0].mxu0
        %2413 = vmatprep.mubr.bf16.mxu0 0
        %2414 = vmatmul.mubr.bf16.gmra.mrb[0].mxu0 %v2256
        %v2415 = vpop.f32.mrb[0].mxu0
        %v2416 = vadd.f32 0.0, %v2415
        %v2417 = vpop.f32.mrb[0].mxu0
        %v2418 = vpop.f32.mrb[0].mxu0
        %v2419 = vadd.f32 0.0, %v2418
        %v2420 = vpop.f32.mrb[0].mxu0
        %2421 = vdwg.mxu0
        %v2422 = vadd.f32 %v2048, %v2296
        %v2423 = vadd.f32 %v2049, %v2299
        %v2424 = vadd.f32 %v2050, %v2304
        %v2425 = vadd.f32 %v2051, %v2307
        %v2426 = vadd.f32 %v2052, %v2312
        %v2427 = vadd.f32 %v2053, %v2315
        %v2428 = vadd.f32 %v2054, %v2320
        %v2429 = vadd.f32 %v2055, %v2323
        %v2430 = vadd.f32 %v2056, %v2328
        %v2431 = vadd.f32 %v2057, %v2331
        %v2432 = vadd.f32 %v2058, %v2336
        %v2433 = vadd.f32 %v2059, %v2339
        %v2434 = vadd.f32 %v2060, %v2344
        %v2435 = vadd.f32 %v2061, %v2347
        %v2436 = vadd.f32 %v2062, %v2352
        %v2437 = vadd.f32 %v2063, %v2355
        %v2438 = vadd.f32 %v2064, %v2360
        %v2439 = vadd.f32 %v2065, %v2363
        %v2440 = vadd.f32 %v2066, %v2368
        %v2441 = vadd.f32 %v2067, %v2371
        %v2442 = vadd.f32 %v2068, %v2376
        %v2443 = vadd.f32 %v2069, %v2379
        %v2444 = vadd.f32 %v2070, %v2384
        %v2445 = vadd.f32 %v2071, %v2387
        %v2446 = vadd.f32 %v2072, %v2392
        %v2447 = vadd.f32 %v2073, %v2395
        %v2448 = vadd.f32 %v2074, %v2400
        %v2449 = vadd.f32 %v2075, %v2403
        %v2450 = vadd.f32 %v2076, %v2408
        %v2451 = vadd.f32 %v2077, %v2411
        %v2452 = vadd.f32 %v2078, %v2416
        %v2453 = vadd.f32 %v2079, %v2419
        %s2454 = scalar_lea.vmem %s204, 24
        %v2455 = vld [vmem:[%s2454] sm:$0xf]
        %v2456 = vld [vmem:[%s2454 + $0x4] sm:$0xf]
        %v2457 = vld [vmem:[%s2454 + $0x8] sm:$0x1]
        %v2458 = vld [vmem:[%s2454 + $0xc] sm:$0xf]
        %v2459 = vld [vmem:[%s2454 + $0x10] sm:$0xf]
        %v2460 = vld [vmem:[%s2454 + $0x14] sm:$0x1]
        %v2461 = vld [vmem:[%s2454 + $0x18] sm:$0xf]
        %v2462 = vld [vmem:[%s2454 + $0x1c] sm:$0xf]
        %v2463 = vld [vmem:[%s2454 + $0x20] sm:$0x1]
        %v2464 = vld [vmem:[%s2454 + $0x24] sm:$0xf]
        %v2465 = vld [vmem:[%s2454 + $0x28] sm:$0xf]
        %v2466 = vld [vmem:[%s2454 + $0x2c] sm:$0x1]
        %v2467 = vld [vmem:[%s2454 + $0x30] sm:$0xf]
        %v2468 = vld [vmem:[%s2454 + $0x34] sm:$0xf]
        %v2469 = vld [vmem:[%s2454 + $0x38] sm:$0x1]
        %v2470 = vld [vmem:[%s2454 + $0x3c] sm:$0xf]
        %v2471 = vld [vmem:[%s2454 + $0x40] sm:$0xf]
        %v2472 = vld [vmem:[%s2454 + $0x44] sm:$0x1]
        %v2473 = vld [vmem:[%s2454 + $0x48] sm:$0xf]
        %v2474 = vld [vmem:[%s2454 + $0x4c] sm:$0xf]
        %v2475 = vld [vmem:[%s2454 + $0x50] sm:$0x1]
        %v2476 = vld [vmem:[%s2454 + $0x54] sm:$0xf]
        %v2477 = vld [vmem:[%s2454 + $0x58] sm:$0xf]
        %v2478 = vld [vmem:[%s2454 + $0x5c] sm:$0x1]
        %v2479 = vld [vmem:[%s2454 + $0x60] sm:$0xf]
        %v2480 = vld [vmem:[%s2454 + $0x64] sm:$0xf]
        %v2481 = vld [vmem:[%s2454 + $0x68] sm:$0x1]
        %v2482 = vld [vmem:[%s2454 + $0x6c] sm:$0xf]
        %v2483 = vld [vmem:[%s2454 + $0x70] sm:$0xf]
        %v2484 = vld [vmem:[%s2454 + $0x74] sm:$0x1]
        %v2485 = vld [vmem:[%s2454 + $0x78] sm:$0xf]
        %v2486 = vld [vmem:[%s2454 + $0x7c] sm:$0xf]
        %v2487 = vld [vmem:[%s2454 + $0x80] sm:$0x1]
        %v2488 = vld [vmem:[%s2454 + $0x84] sm:$0xf]
        %v2489 = vld [vmem:[%s2454 + $0x88] sm:$0xf]
        %v2490 = vld [vmem:[%s2454 + $0x8c] sm:$0x1]
        %v2491 = vld [vmem:[%s2454 + $0x90] sm:$0xf]
        %v2492 = vld [vmem:[%s2454 + $0x94] sm:$0xf]
        %v2493 = vld [vmem:[%s2454 + $0x98] sm:$0x1]
        %v2494 = vld [vmem:[%s2454 + $0x9c] sm:$0xf]
        %v2495 = vld [vmem:[%s2454 + $0xa0] sm:$0xf]
        %v2496 = vld [vmem:[%s2454 + $0xa4] sm:$0x1]
        %v2497 = vld [vmem:[%s2454 + $0xa8] sm:$0xf]
        %v2498 = vld [vmem:[%s2454 + $0xac] sm:$0xf]
        %v2499 = vld [vmem:[%s2454 + $0xb0] sm:$0x1]
        %v2500 = vld [vmem:[%s2454 + $0xb4] sm:$0xf]
        %v2501 = vld [vmem:[%s2454 + $0xb8] sm:$0xf]
        %v2502 = vld [vmem:[%s2454 + $0xbc] sm:$0x1]
        %v2503 = vunpack.c.l.bf16 %v2455
        %v2504 = vunpack.c.l.bf16 %v2456
        %v2505 = vunpack.c.l.bf16 %v2457
        %v2506 = vunpack.c.l.bf16 %v2458
        %v2507 = vunpack.c.l.bf16 %v2459
        %v2508 = vunpack.c.l.bf16 %v2460
        %v2509 = vunpack.c.l.bf16 %v2461
        %v2510 = vunpack.c.l.bf16 %v2462
        %v2511 = vunpack.c.l.bf16 %v2463
        %v2512 = vunpack.c.l.bf16 %v2464
        %v2513 = vunpack.c.l.bf16 %v2465
        %v2514 = vunpack.c.l.bf16 %v2466
        %v2515 = vunpack.c.l.bf16 %v2467
        %v2516 = vunpack.c.l.bf16 %v2468
        %v2517 = vunpack.c.l.bf16 %v2469
        %v2518 = vunpack.c.l.bf16 %v2470
        %v2519 = vunpack.c.l.bf16 %v2471
        %v2520 = vunpack.c.l.bf16 %v2472
        %v2521 = vunpack.c.l.bf16 %v2473
        %v2522 = vunpack.c.l.bf16 %v2474
        %v2523 = vunpack.c.l.bf16 %v2475
        %v2524 = vunpack.c.l.bf16 %v2476
        %v2525 = vunpack.c.l.bf16 %v2477
        %v2526 = vunpack.c.l.bf16 %v2478
        %v2527 = vunpack.c.l.bf16 %v2479
        %v2528 = vunpack.c.l.bf16 %v2480
        %v2529 = vunpack.c.l.bf16 %v2481
        %v2530 = vunpack.c.l.bf16 %v2482
        %v2531 = vunpack.c.l.bf16 %v2483
        %v2532 = vunpack.c.l.bf16 %v2484
        %v2533 = vunpack.c.l.bf16 %v2485
        %v2534 = vunpack.c.l.bf16 %v2486
        %v2535 = vunpack.c.l.bf16 %v2487
        %v2536 = vunpack.c.l.bf16 %v2488
        %v2537 = vunpack.c.l.bf16 %v2489
        %v2538 = vunpack.c.l.bf16 %v2490
        %v2539 = vunpack.c.l.bf16 %v2491
        %v2540 = vunpack.c.l.bf16 %v2492
        %v2541 = vunpack.c.l.bf16 %v2493
        %v2542 = vunpack.c.l.bf16 %v2494
        %v2543 = vunpack.c.l.bf16 %v2495
        %v2544 = vunpack.c.l.bf16 %v2496
        %v2545 = vunpack.c.l.bf16 %v2497
        %v2546 = vunpack.c.l.bf16 %v2498
        %v2547 = vunpack.c.l.bf16 %v2499
        %v2548 = vunpack.c.l.bf16 %v2500
        %v2549 = vunpack.c.l.bf16 %v2501
        %v2550 = vunpack.c.l.bf16 %v2502
        %v2551 = vpack.c.bf16 %v2504, %v2503
        %v2552 = vpack.c.bf16 %v2507, %v2506
        %v2553 = vpack.c.bf16 %v2510, %v2509
        %v2554 = vpack.c.bf16 %v2513, %v2512
        %v2555 = vpack.c.bf16 %v2516, %v2515
        %v2556 = vpack.c.bf16 %v2519, %v2518
        %v2557 = vpack.c.bf16 %v2522, %v2521
        %v2558 = vpack.c.bf16 %v2525, %v2524
        %v2559 = vpack.c.bf16 %v2528, %v2527
        %v2560 = vpack.c.bf16 %v2531, %v2530
        %v2561 = vpack.c.bf16 %v2534, %v2533
        %v2562 = vpack.c.bf16 %v2537, %v2536
        %v2563 = vpack.c.bf16 %v2540, %v2539
        %v2564 = vpack.c.bf16 %v2543, %v2542
        %v2565 = vpack.c.bf16 %v2546, %v2545
        %v2566 = vpack.c.bf16 %v2549, %v2548
        %s2567 = scalar_lea.vmem %s1, 12
        %v2568 = vld [vmem:[%s2567] sm:$0x3]
        %v2570 = vsel %vm498, %v2551, 0
        %v2573 = vsel %vm498, %v2552, 0
        %v2576 = vsel %vm498, %v2553, 0
        %v2579 = vsel %vm498, %v2554, 0
        %v2582 = vsel %vm498, %v2555, 0
        %v2585 = vsel %vm498, %v2556, 0
        %v2588 = vsel %vm498, %v2557, 0
        %v2591 = vsel %vm498, %v2558, 0
        %v2594 = vsel %vm498, %v2559, 0
        %v2597 = vsel %vm498, %v2560, 0
        %v2600 = vsel %vm498, %v2561, 0
        %v2603 = vsel %vm498, %v2562, 0
        %v2606 = vsel %vm498, %v2563, 0
        %v2609 = vsel %vm498, %v2564, 0
        %v2612 = vsel %vm498, %v2565, 0
        %v2615 = vsel %vm498, %v2566, 0
        %v2618 = vsel %vm547, %v2568, 0
        %2620 = vmatprep.subr.bf16.mxu0 0
        %2621 = vmatpush1.bf16.msra.mxu0 %v2618
        %2622 = vmatprep.subr.bf16.mxu0 0
        %2623 = vmatpush1.bf16.msra.mxu0 0
        %2624 = vmatprep.subr.bf16.mxu0 0
        %2625 = vmatpush1.bf16.msra.mxu0 0
        %2626 = vmatprep.subr.bf16.mxu0 0
        %2627 = vmatpush1.bf16.msra.mxu0 0
        %2628 = vmatprep.subr.bf16.mxu0 0
        %2629 = vmatpush1.bf16.msra.mxu0 0
        %2630 = vmatprep.subr.bf16.mxu0 0
        %2631 = vmatpush1.bf16.msra.mxu0 0
        %2632 = vmatprep.subr.bf16.mxu0 0
        %2633 = vmatpush1.bf16.msra.mxu0 0
        %2634 = vmatprep.subr.bf16.mxu0 0
        %2635 = vmatpush1.bf16.msra.mxu0 0
        %2636 = vmatprep.subr.bf16.mxu0 0
        %2637 = vmatpush1.bf16.msra.mxu0 0
        %2638 = vmatprep.subr.bf16.mxu0 0
        %2639 = vmatpush1.bf16.msra.mxu0 0
        %2640 = vmatprep.subr.bf16.mxu0 0
        %2641 = vmatpush1.bf16.msra.mxu0 0
        %2642 = vmatprep.subr.bf16.mxu0 0
        %2643 = vmatpush1.bf16.msra.mxu0 0
        %2644 = vmatprep.subr.bf16.mxu0 0
        %2645 = vmatpush1.bf16.msra.mxu0 0
        %2646 = vmatprep.subr.bf16.mxu0 0
        %2647 = vmatpush1.bf16.msra.mxu0 0
        %2648 = vmatprep.subr.bf16.mxu0 0
        %2649 = vmatpush1.bf16.msra.mxu0 0
        %2650 = vmatprep.subr.bf16.mxu0 0
        %2651 = vmatpush1.bf16.msra.mxu0 0
        %2652 = vmatprep.mubr.bf16.mxu0 0
        %2653 = vmatmul.mubr.bf16.gmra.mrb[0].mxu0 %v2570
        %v2654 = vpop.f32.mrb[0].mxu0
        %v2655 = vadd.f32 0.0, %v2654
        %v2656 = vpop.f32.mrb[0].mxu0
        %v2657 = vpop.f32.mrb[0].mxu0
        %v2658 = vadd.f32 0.0, %v2657
        %v2659 = vpop.f32.mrb[0].mxu0
        %2660 = vmatprep.mubr.bf16.mxu0 0
        %2661 = vmatmul.mubr.bf16.gmra.mrb[0].mxu0 %v2573
        %v2662 = vpop.f32.mrb[0].mxu0
        %v2663 = vadd.f32 0.0, %v2662
        %v2664 = vpop.f32.mrb[0].mxu0
        %v2665 = vpop.f32.mrb[0].mxu0
        %v2666 = vadd.f32 0.0, %v2665
        %v2667 = vpop.f32.mrb[0].mxu0
        %2668 = vmatprep.mubr.bf16.mxu0 0
        %2669 = vmatmul.mubr.bf16.gmra.mrb[0].mxu0 %v2576
        %v2670 = vpop.f32.mrb[0].mxu0
        %v2671 = vadd.f32 0.0, %v2670
        %v2672 = vpop.f32.mrb[0].mxu0
        %v2673 = vpop.f32.mrb[0].mxu0
        %v2674 = vadd.f32 0.0, %v2673
        %v2675 = vpop.f32.mrb[0].mxu0
        %2676 = vmatprep.mubr.bf16.mxu0 0
        %2677 = vmatmul.mubr.bf16.gmra.mrb[0].mxu0 %v2579
        %v2678 = vpop.f32.mrb[0].mxu0
        %v2679 = vadd.f32 0.0, %v2678
        %v2680 = vpop.f32.mrb[0].mxu0
        %v2681 = vpop.f32.mrb[0].mxu0
        %v2682 = vadd.f32 0.0, %v2681
        %v2683 = vpop.f32.mrb[0].mxu0
        %2684 = vmatprep.mubr.bf16.mxu0 0
        %2685 = vmatmul.mubr.bf16.gmra.mrb[0].mxu0 %v2582
        %v2686 = vpop.f32.mrb[0].mxu0
        %v2687 = vadd.f32 0.0, %v2686
        %v2688 = vpop.f32.mrb[0].mxu0
        %v2689 = vpop.f32.mrb[0].mxu0
        %v2690 = vadd.f32 0.0, %v2689
        %v2691 = vpop.f32.mrb[0].mxu0
        %2692 = vmatprep.mubr.bf16.mxu0 0
        %2693 = vmatmul.mubr.bf16.gmra.mrb[0].mxu0 %v2585
        %v2694 = vpop.f32.mrb[0].mxu0
        %v2695 = vadd.f32 0.0, %v2694
        %v2696 = vpop.f32.mrb[0].mxu0
        %v2697 = vpop.f32.mrb[0].mxu0
        %v2698 = vadd.f32 0.0, %v2697
        %v2699 = vpop.f32.mrb[0].mxu0
        %2700 = vmatprep.mubr.bf16.mxu0 0
        %2701 = vmatmul.mubr.bf16.gmra.mrb[0].mxu0 %v2588
        %v2702 = vpop.f32.mrb[0].mxu0
        %v2703 = vadd.f32 0.0, %v2702
        %v2704 = vpop.f32.mrb[0].mxu0
        %v2705 = vpop.f32.mrb[0].mxu0
        %v2706 = vadd.f32 0.0, %v2705
        %v2707 = vpop.f32.mrb[0].mxu0
        %2708 = vmatprep.mubr.bf16.mxu0 0
        %2709 = vmatmul.mubr.bf16.gmra.mrb[0].mxu0 %v2591
        %v2710 = vpop.f32.mrb[0].mxu0
        %v2711 = vadd.f32 0.0, %v2710
        %v2712 = vpop.f32.mrb[0].mxu0
        %v2713 = vpop.f32.mrb[0].mxu0
        %v2714 = vadd.f32 0.0, %v2713
        %v2715 = vpop.f32.mrb[0].mxu0
        %2716 = vmatprep.mubr.bf16.mxu0 0
        %2717 = vmatmul.mubr.bf16.gmra.mrb[0].mxu0 %v2594
        %v2718 = vpop.f32.mrb[0].mxu0
        %v2719 = vadd.f32 0.0, %v2718
        %v2720 = vpop.f32.mrb[0].mxu0
        %v2721 = vpop.f32.mrb[0].mxu0
        %v2722 = vadd.f32 0.0, %v2721
        %v2723 = vpop.f32.mrb[0].mxu0
        %2724 = vmatprep.mubr.bf16.mxu0 0
        %2725 = vmatmul.mubr.bf16.gmra.mrb[0].mxu0 %v2597
        %v2726 = vpop.f32.mrb[0].mxu0
        %v2727 = vadd.f32 0.0, %v2726
        %v2728 = vpop.f32.mrb[0].mxu0
        %v2729 = vpop.f32.mrb[0].mxu0
        %v2730 = vadd.f32 0.0, %v2729
        %v2731 = vpop.f32.mrb[0].mxu0
        %2732 = vmatprep.mubr.bf16.mxu0 0
        %2733 = vmatmul.mubr.bf16.gmra.mrb[0].mxu0 %v2600
        %v2734 = vpop.f32.mrb[0].mxu0
        %v2735 = vadd.f32 0.0, %v2734
        %v2736 = vpop.f32.mrb[0].mxu0
        %v2737 = vpop.f32.mrb[0].mxu0
        %v2738 = vadd.f32 0.0, %v2737
        %v2739 = vpop.f32.mrb[0].mxu0
        %2740 = vmatprep.mubr.bf16.mxu0 0
        %2741 = vmatmul.mubr.bf16.gmra.mrb[0].mxu0 %v2603
        %v2742 = vpop.f32.mrb[0].mxu0
        %v2743 = vadd.f32 0.0, %v2742
        %v2744 = vpop.f32.mrb[0].mxu0
        %v2745 = vpop.f32.mrb[0].mxu0
        %v2746 = vadd.f32 0.0, %v2745
        %v2747 = vpop.f32.mrb[0].mxu0
        %2748 = vmatprep.mubr.bf16.mxu0 0
        %2749 = vmatmul.mubr.bf16.gmra.mrb[0].mxu0 %v2606
        %v2750 = vpop.f32.mrb[0].mxu0
        %v2751 = vadd.f32 0.0, %v2750
        %v2752 = vpop.f32.mrb[0].mxu0
        %v2753 = vpop.f32.mrb[0].mxu0
        %v2754 = vadd.f32 0.0, %v2753
        %v2755 = vpop.f32.mrb[0].mxu0
        %2756 = vmatprep.mubr.bf16.mxu0 0
        %2757 = vmatmul.mubr.bf16.gmra.mrb[0].mxu0 %v2609
        %v2758 = vpop.f32.mrb[0].mxu0
        %v2759 = vadd.f32 0.0, %v2758
        %v2760 = vpop.f32.mrb[0].mxu0
        %v2761 = vpop.f32.mrb[0].mxu0
        %v2762 = vadd.f32 0.0, %v2761
        %v2763 = vpop.f32.mrb[0].mxu0
        %2764 = vmatprep.mubr.bf16.mxu0 0
        %2765 = vmatmul.mubr.bf16.gmra.mrb[0].mxu0 %v2612
        %v2766 = vpop.f32.mrb[0].mxu0
        %v2767 = vadd.f32 0.0, %v2766
        %v2768 = vpop.f32.mrb[0].mxu0
        %v2769 = vpop.f32.mrb[0].mxu0
        %v2770 = vadd.f32 0.0, %v2769
        %v2771 = vpop.f32.mrb[0].mxu0
        %2772 = vmatprep.mubr.bf16.mxu0 0
        %2773 = vmatmul.mubr.bf16.gmra.mrb[0].mxu0 %v2615
        %v2774 = vpop.f32.mrb[0].mxu0
        %v2775 = vadd.f32 0.0, %v2774
        %v2776 = vpop.f32.mrb[0].mxu0
        %v2777 = vpop.f32.mrb[0].mxu0
        %v2778 = vadd.f32 0.0, %v2777
        %v2779 = vpop.f32.mrb[0].mxu0
        %2780 = vdwg.mxu0
        %v2781 = vadd.f32 %v2422, %v2655
        %v2782 = vadd.f32 %v2423, %v2658
        %v2783 = vadd.f32 %v2424, %v2663
        %v2784 = vadd.f32 %v2425, %v2666
        %v2785 = vadd.f32 %v2426, %v2671
        %v2786 = vadd.f32 %v2427, %v2674
        %v2787 = vadd.f32 %v2428, %v2679
        %v2788 = vadd.f32 %v2429, %v2682
        %v2789 = vadd.f32 %v2430, %v2687
        %v2790 = vadd.f32 %v2431, %v2690
        %v2791 = vadd.f32 %v2432, %v2695
        %v2792 = vadd.f32 %v2433, %v2698
        %v2793 = vadd.f32 %v2434, %v2703
        %v2794 = vadd.f32 %v2435, %v2706
        %v2795 = vadd.f32 %v2436, %v2711
        %v2796 = vadd.f32 %v2437, %v2714
        %v2797 = vadd.f32 %v2438, %v2719
        %v2798 = vadd.f32 %v2439, %v2722
        %v2799 = vadd.f32 %v2440, %v2727
        %v2800 = vadd.f32 %v2441, %v2730
        %v2801 = vadd.f32 %v2442, %v2735
        %v2802 = vadd.f32 %v2443, %v2738
        %v2803 = vadd.f32 %v2444, %v2743
        %v2804 = vadd.f32 %v2445, %v2746
        %v2805 = vadd.f32 %v2446, %v2751
        %v2806 = vadd.f32 %v2447, %v2754
        %v2807 = vadd.f32 %v2448, %v2759
        %v2808 = vadd.f32 %v2449, %v2762
        %v2809 = vadd.f32 %v2450, %v2767
        %v2810 = vadd.f32 %v2451, %v2770
        %v2811 = vadd.f32 %v2452, %v2775
        %v2812 = vadd.f32 %v2453, %v2778
        %v2861 = vrot.slane %v2503, 1
        %v2862 = vrot.slane %v2504, 1
        %v2863 = vsel %vm367, %v2861, %v2862
        %v2864 = vrot.slane %v2505, 1
        %v2865 = vsel %vm367, %v2862, %v2864
        %v2866 = vrot.slane %v2506, 1
        %v2867 = vrot.slane %v2507, 1
        %v2868 = vsel %vm367, %v2866, %v2867
        %v2869 = vrot.slane %v2508, 1
        %v2870 = vsel %vm367, %v2867, %v2869
        %v2871 = vrot.slane %v2509, 1
        %v2872 = vrot.slane %v2510, 1
        %v2873 = vsel %vm367, %v2871, %v2872
        %v2874 = vrot.slane %v2511, 1
        %v2875 = vsel %vm367, %v2872, %v2874
        %v2876 = vrot.slane %v2512, 1
        %v2877 = vrot.slane %v2513, 1
        %v2878 = vsel %vm367, %v2876, %v2877
        %v2879 = vrot.slane %v2514, 1
        %v2880 = vsel %vm367, %v2877, %v2879
        %v2881 = vrot.slane %v2515, 1
        %v2882 = vrot.slane %v2516, 1
        %v2883 = vsel %vm367, %v2881, %v2882
        %v2884 = vrot.slane %v2517, 1
        %v2885 = vsel %vm367, %v2882, %v2884
        %v2886 = vrot.slane %v2518, 1
        %v2887 = vrot.slane %v2519, 1
        %v2888 = vsel %vm367, %v2886, %v2887
        %v2889 = vrot.slane %v2520, 1
        %v2890 = vsel %vm367, %v2887, %v2889
        %v2891 = vrot.slane %v2521, 1
        %v2892 = vrot.slane %v2522, 1
        %v2893 = vsel %vm367, %v2891, %v2892
        %v2894 = vrot.slane %v2523, 1
        %v2895 = vsel %vm367, %v2892, %v2894
        %v2896 = vrot.slane %v2524, 1
        %v2897 = vrot.slane %v2525, 1
        %v2898 = vsel %vm367, %v2896, %v2897
        %v2899 = vrot.slane %v2526, 1
        %v2900 = vsel %vm367, %v2897, %v2899
        %v2901 = vrot.slane %v2527, 1
        %v2902 = vrot.slane %v2528, 1
        %v2903 = vsel %vm367, %v2901, %v2902
        %v2904 = vrot.slane %v2529, 1
        %v2905 = vsel %vm367, %v2902, %v2904
        %v2906 = vrot.slane %v2530, 1
        %v2907 = vrot.slane %v2531, 1
        %v2908 = vsel %vm367, %v2906, %v2907
        %v2909 = vrot.slane %v2532, 1
        %v2910 = vsel %vm367, %v2907, %v2909
        %v2911 = vrot.slane %v2533, 1
        %v2912 = vrot.slane %v2534, 1
        %v2913 = vsel %vm367, %v2911, %v2912
        %v2914 = vrot.slane %v2535, 1
        %v2915 = vsel %vm367, %v2912, %v2914
        %v2916 = vrot.slane %v2536, 1
        %v2917 = vrot.slane %v2537, 1
        %v2918 = vsel %vm367, %v2916, %v2917
        %v2919 = vrot.slane %v2538, 1
        %v2920 = vsel %vm367, %v2917, %v2919
        %v2921 = vrot.slane %v2539, 1
        %v2922 = vrot.slane %v2540, 1
        %v2923 = vsel %vm367, %v2921, %v2922
        %v2924 = vrot.slane %v2541, 1
        %v2925 = vsel %vm367, %v2922, %v2924
        %v2926 = vrot.slane %v2542, 1
        %v2927 = vrot.slane %v2543, 1
        %v2928 = vsel %vm367, %v2926, %v2927
        %v2929 = vrot.slane %v2544, 1
        %v2930 = vsel %vm367, %v2927, %v2929
        %v2931 = vrot.slane %v2545, 1
        %v2932 = vrot.slane %v2546, 1
        %v2933 = vsel %vm367, %v2931, %v2932
        %v2934 = vrot.slane %v2547, 1
        %v2935 = vsel %vm367, %v2932, %v2934
        %v2936 = vrot.slane %v2548, 1
        %v2937 = vrot.slane %v2549, 1
        %v2938 = vsel %vm367, %v2936, %v2937
        %v2939 = vrot.slane %v2550, 1
        %v2940 = vsel %vm367, %v2937, %v2939
        %v2973 = vpack.c.bf16 %v2865, %v2863
        %v2974 = vpack.c.bf16 %v2870, %v2868
        %v2975 = vpack.c.bf16 %v2875, %v2873
        %v2976 = vpack.c.bf16 %v2880, %v2878
        %v2977 = vpack.c.bf16 %v2885, %v2883
        %v2978 = vpack.c.bf16 %v2890, %v2888
        %v2979 = vpack.c.bf16 %v2895, %v2893
        %v2980 = vpack.c.bf16 %v2900, %v2898
        %v2981 = vpack.c.bf16 %v2905, %v2903
        %v2982 = vpack.c.bf16 %v2910, %v2908
        %v2983 = vpack.c.bf16 %v2915, %v2913
        %v2984 = vpack.c.bf16 %v2920, %v2918
        %v2985 = vpack.c.bf16 %v2925, %v2923
        %v2986 = vpack.c.bf16 %v2930, %v2928
        %v2987 = vpack.c.bf16 %v2935, %v2933
        %v2988 = vpack.c.bf16 %v2940, %v2938
        %s2989 = scalar_lea.vmem %s1, 14
        %v2990 = vld [vmem:[%s2989] sm:$0x3]
        %v2992 = vsel %vm498, %v2973, 0
        %v2995 = vsel %vm498, %v2974, 0
        %v2998 = vsel %vm498, %v2975, 0
        %v3001 = vsel %vm498, %v2976, 0
        %v3004 = vsel %vm498, %v2977, 0
        %v3007 = vsel %vm498, %v2978, 0
        %v3010 = vsel %vm498, %v2979, 0
        %v3013 = vsel %vm498, %v2980, 0
        %v3016 = vsel %vm498, %v2981, 0
        %v3019 = vsel %vm498, %v2982, 0
        %v3022 = vsel %vm498, %v2983, 0
        %v3025 = vsel %vm498, %v2984, 0
        %v3028 = vsel %vm498, %v2985, 0
        %v3031 = vsel %vm498, %v2986, 0
        %v3034 = vsel %vm498, %v2987, 0
        %v3037 = vsel %vm498, %v2988, 0
        %v3040 = vsel %vm547, %v2990, 0
        %3042 = vmatprep.subr.bf16.mxu0 0
        %3043 = vmatpush1.bf16.msra.mxu0 %v3040
        %3044 = vmatprep.subr.bf16.mxu0 0
        %3045 = vmatpush1.bf16.msra.mxu0 0
        %3046 = vmatprep.subr.bf16.mxu0 0
        %3047 = vmatpush1.bf16.msra.mxu0 0
        %3048 = vmatprep.subr.bf16.mxu0 0
        %3049 = vmatpush1.bf16.msra.mxu0 0
        %3050 = vmatprep.subr.bf16.mxu0 0
        %3051 = vmatpush1.bf16.msra.mxu0 0
        %3052 = vmatprep.subr.bf16.mxu0 0
        %3053 = vmatpush1.bf16.msra.mxu0 0
        %3054 = vmatprep.subr.bf16.mxu0 0
        %3055 = vmatpush1.bf16.msra.mxu0 0
        %3056 = vmatprep.subr.bf16.mxu0 0
        %3057 = vmatpush1.bf16.msra.mxu0 0
        %3058 = vmatprep.subr.bf16.mxu0 0
        %3059 = vmatpush1.bf16.msra.mxu0 0
        %3060 = vmatprep.subr.bf16.mxu0 0
        %3061 = vmatpush1.bf16.msra.mxu0 0
        %3062 = vmatprep.subr.bf16.mxu0 0
        %3063 = vmatpush1.bf16.msra.mxu0 0
        %3064 = vmatprep.subr.bf16.mxu0 0
        %3065 = vmatpush1.bf16.msra.mxu0 0
        %3066 = vmatprep.subr.bf16.mxu0 0
        %3067 = vmatpush1.bf16.msra.mxu0 0
        %3068 = vmatprep.subr.bf16.mxu0 0
        %3069 = vmatpush1.bf16.msra.mxu0 0
        %3070 = vmatprep.subr.bf16.mxu0 0
        %3071 = vmatpush1.bf16.msra.mxu0 0
        %3072 = vmatprep.subr.bf16.mxu0 0
        %3073 = vmatpush1.bf16.msra.mxu0 0
        %3074 = vmatprep.mubr.bf16.mxu0 0
        %3075 = vmatmul.mubr.bf16.gmra.mrb[0].mxu0 %v2992
        %v3076 = vpop.f32.mrb[0].mxu0
        %v3077 = vadd.f32 0.0, %v3076
        %v3078 = vpop.f32.mrb[0].mxu0
        %v3079 = vpop.f32.mrb[0].mxu0
        %v3080 = vadd.f32 0.0, %v3079
        %v3081 = vpop.f32.mrb[0].mxu0
        %3082 = vmatprep.mubr.bf16.mxu0 0
        %3083 = vmatmul.mubr.bf16.gmra.mrb[0].mxu0 %v2995
        %v3084 = vpop.f32.mrb[0].mxu0
        %v3085 = vadd.f32 0.0, %v3084
        %v3086 = vpop.f32.mrb[0].mxu0
        %v3087 = vpop.f32.mrb[0].mxu0
        %v3088 = vadd.f32 0.0, %v3087
        %v3089 = vpop.f32.mrb[0].mxu0
        %3090 = vmatprep.mubr.bf16.mxu0 0
        %3091 = vmatmul.mubr.bf16.gmra.mrb[0].mxu0 %v2998
        %v3092 = vpop.f32.mrb[0].mxu0
        %v3093 = vadd.f32 0.0, %v3092
        %v3094 = vpop.f32.mrb[0].mxu0
        %v3095 = vpop.f32.mrb[0].mxu0
        %v3096 = vadd.f32 0.0, %v3095
        %v3097 = vpop.f32.mrb[0].mxu0
        %3098 = vmatprep.mubr.bf16.mxu0 0
        %3099 = vmatmul.mubr.bf16.gmra.mrb[0].mxu0 %v3001
        %v3100 = vpop.f32.mrb[0].mxu0
        %v3101 = vadd.f32 0.0, %v3100
        %v3102 = vpop.f32.mrb[0].mxu0
        %v3103 = vpop.f32.mrb[0].mxu0
        %v3104 = vadd.f32 0.0, %v3103
        %v3105 = vpop.f32.mrb[0].mxu0
        %3106 = vmatprep.mubr.bf16.mxu0 0
        %3107 = vmatmul.mubr.bf16.gmra.mrb[0].mxu0 %v3004
        %v3108 = vpop.f32.mrb[0].mxu0
        %v3109 = vadd.f32 0.0, %v3108
        %v3110 = vpop.f32.mrb[0].mxu0
        %v3111 = vpop.f32.mrb[0].mxu0
        %v3112 = vadd.f32 0.0, %v3111
        %v3113 = vpop.f32.mrb[0].mxu0
        %3114 = vmatprep.mubr.bf16.mxu0 0
        %3115 = vmatmul.mubr.bf16.gmra.mrb[0].mxu0 %v3007
        %v3116 = vpop.f32.mrb[0].mxu0
        %v3117 = vadd.f32 0.0, %v3116
        %v3118 = vpop.f32.mrb[0].mxu0
        %v3119 = vpop.f32.mrb[0].mxu0
        %v3120 = vadd.f32 0.0, %v3119
        %v3121 = vpop.f32.mrb[0].mxu0
        %3122 = vmatprep.mubr.bf16.mxu0 0
        %3123 = vmatmul.mubr.bf16.gmra.mrb[0].mxu0 %v3010
        %v3124 = vpop.f32.mrb[0].mxu0
        %v3125 = vadd.f32 0.0, %v3124
        %v3126 = vpop.f32.mrb[0].mxu0
        %v3127 = vpop.f32.mrb[0].mxu0
        %v3128 = vadd.f32 0.0, %v3127
        %v3129 = vpop.f32.mrb[0].mxu0
        %3130 = vmatprep.mubr.bf16.mxu0 0
        %3131 = vmatmul.mubr.bf16.gmra.mrb[0].mxu0 %v3013
        %v3132 = vpop.f32.mrb[0].mxu0
        %v3133 = vadd.f32 0.0, %v3132
        %v3134 = vpop.f32.mrb[0].mxu0
        %v3135 = vpop.f32.mrb[0].mxu0
        %v3136 = vadd.f32 0.0, %v3135
        %v3137 = vpop.f32.mrb[0].mxu0
        %3138 = vmatprep.mubr.bf16.mxu0 0
        %3139 = vmatmul.mubr.bf16.gmra.mrb[0].mxu0 %v3016
        %v3140 = vpop.f32.mrb[0].mxu0
        %v3141 = vadd.f32 0.0, %v3140
        %v3142 = vpop.f32.mrb[0].mxu0
        %v3143 = vpop.f32.mrb[0].mxu0
        %v3144 = vadd.f32 0.0, %v3143
        %v3145 = vpop.f32.mrb[0].mxu0
        %3146 = vmatprep.mubr.bf16.mxu0 0
        %3147 = vmatmul.mubr.bf16.gmra.mrb[0].mxu0 %v3019
        %v3148 = vpop.f32.mrb[0].mxu0
        %v3149 = vadd.f32 0.0, %v3148
        %v3150 = vpop.f32.mrb[0].mxu0
        %v3151 = vpop.f32.mrb[0].mxu0
        %v3152 = vadd.f32 0.0, %v3151
        %v3153 = vpop.f32.mrb[0].mxu0
        %3154 = vmatprep.mubr.bf16.mxu0 0
        %3155 = vmatmul.mubr.bf16.gmra.mrb[0].mxu0 %v3022
        %v3156 = vpop.f32.mrb[0].mxu0
        %v3157 = vadd.f32 0.0, %v3156
        %v3158 = vpop.f32.mrb[0].mxu0
        %v3159 = vpop.f32.mrb[0].mxu0
        %v3160 = vadd.f32 0.0, %v3159
        %v3161 = vpop.f32.mrb[0].mxu0
        %3162 = vmatprep.mubr.bf16.mxu0 0
        %3163 = vmatmul.mubr.bf16.gmra.mrb[0].mxu0 %v3025
        %v3164 = vpop.f32.mrb[0].mxu0
        %v3165 = vadd.f32 0.0, %v3164
        %v3166 = vpop.f32.mrb[0].mxu0
        %v3167 = vpop.f32.mrb[0].mxu0
        %v3168 = vadd.f32 0.0, %v3167
        %v3169 = vpop.f32.mrb[0].mxu0
        %3170 = vmatprep.mubr.bf16.mxu0 0
        %3171 = vmatmul.mubr.bf16.gmra.mrb[0].mxu0 %v3028
        %v3172 = vpop.f32.mrb[0].mxu0
        %v3173 = vadd.f32 0.0, %v3172
        %v3174 = vpop.f32.mrb[0].mxu0
        %v3175 = vpop.f32.mrb[0].mxu0
        %v3176 = vadd.f32 0.0, %v3175
        %v3177 = vpop.f32.mrb[0].mxu0
        %3178 = vmatprep.mubr.bf16.mxu0 0
        %3179 = vmatmul.mubr.bf16.gmra.mrb[0].mxu0 %v3031
        %v3180 = vpop.f32.mrb[0].mxu0
        %v3181 = vadd.f32 0.0, %v3180
        %v3182 = vpop.f32.mrb[0].mxu0
        %v3183 = vpop.f32.mrb[0].mxu0
        %v3184 = vadd.f32 0.0, %v3183
        %v3185 = vpop.f32.mrb[0].mxu0
        %3186 = vmatprep.mubr.bf16.mxu0 0
        %3187 = vmatmul.mubr.bf16.gmra.mrb[0].mxu0 %v3034
        %v3188 = vpop.f32.mrb[0].mxu0
        %v3189 = vadd.f32 0.0, %v3188
        %v3190 = vpop.f32.mrb[0].mxu0
        %v3191 = vpop.f32.mrb[0].mxu0
        %v3192 = vadd.f32 0.0, %v3191
        %v3193 = vpop.f32.mrb[0].mxu0
        %3194 = vmatprep.mubr.bf16.mxu0 0
        %3195 = vmatmul.mubr.bf16.gmra.mrb[0].mxu0 %v3037
        %v3196 = vpop.f32.mrb[0].mxu0
        %v3197 = vadd.f32 0.0, %v3196
        %v3198 = vpop.f32.mrb[0].mxu0
        %v3199 = vpop.f32.mrb[0].mxu0
        %v3200 = vadd.f32 0.0, %v3199
        %v3201 = vpop.f32.mrb[0].mxu0
        %3202 = vdwg.mxu0
        %v3203 = vadd.f32 %v2781, %v3077
        %v3204 = vadd.f32 %v2782, %v3080
        %v3205 = vadd.f32 %v2783, %v3085
        %v3206 = vadd.f32 %v2784, %v3088
        %v3207 = vadd.f32 %v2785, %v3093
        %v3208 = vadd.f32 %v2786, %v3096
        %v3209 = vadd.f32 %v2787, %v3101
        %v3210 = vadd.f32 %v2788, %v3104
        %v3211 = vadd.f32 %v2789, %v3109
        %v3212 = vadd.f32 %v2790, %v3112
        %v3213 = vadd.f32 %v2791, %v3117
        %v3214 = vadd.f32 %v2792, %v3120
        %v3215 = vadd.f32 %v2793, %v3125
        %v3216 = vadd.f32 %v2794, %v3128
        %v3217 = vadd.f32 %v2795, %v3133
        %v3218 = vadd.f32 %v2796, %v3136
        %v3219 = vadd.f32 %v2797, %v3141
        %v3220 = vadd.f32 %v2798, %v3144
        %v3221 = vadd.f32 %v2799, %v3149
        %v3222 = vadd.f32 %v2800, %v3152
        %v3223 = vadd.f32 %v2801, %v3157
        %v3224 = vadd.f32 %v2802, %v3160
        %v3225 = vadd.f32 %v2803, %v3165
        %v3226 = vadd.f32 %v2804, %v3168
        %v3227 = vadd.f32 %v2805, %v3173
        %v3228 = vadd.f32 %v2806, %v3176
        %v3229 = vadd.f32 %v2807, %v3181
        %v3230 = vadd.f32 %v2808, %v3184
        %v3231 = vadd.f32 %v2809, %v3189
        %v3232 = vadd.f32 %v2810, %v3192
        %v3233 = vadd.f32 %v2811, %v3197
        %v3234 = vadd.f32 %v2812, %v3200
        %v3235 = vrot.slane %v2503, 2
        %v3236 = vrot.slane %v2504, 2
        %v3237 = vsel %vm924, %v3235, %v3236
        %v3238 = vrot.slane %v2505, 2
        %v3239 = vsel %vm924, %v3236, %v3238
        %v3240 = vrot.slane %v2506, 2
        %v3241 = vrot.slane %v2507, 2
        %v3242 = vsel %vm924, %v3240, %v3241
        %v3243 = vrot.slane %v2508, 2
        %v3244 = vsel %vm924, %v3241, %v3243
        %v3245 = vrot.slane %v2509, 2
        %v3246 = vrot.slane %v2510, 2
        %v3247 = vsel %vm924, %v3245, %v3246
        %v3248 = vrot.slane %v2511, 2
        %v3249 = vsel %vm924, %v3246, %v3248
        %v3250 = vrot.slane %v2512, 2
        %v3251 = vrot.slane %v2513, 2
        %v3252 = vsel %vm924, %v3250, %v3251
        %v3253 = vrot.slane %v2514, 2
        %v3254 = vsel %vm924, %v3251, %v3253
        %v3255 = vrot.slane %v2515, 2
        %v3256 = vrot.slane %v2516, 2
        %v3257 = vsel %vm924, %v3255, %v3256
        %v3258 = vrot.slane %v2517, 2
        %v3259 = vsel %vm924, %v3256, %v3258
        %v3260 = vrot.slane %v2518, 2
        %v3261 = vrot.slane %v2519, 2
        %v3262 = vsel %vm924, %v3260, %v3261
        %v3263 = vrot.slane %v2520, 2
        %v3264 = vsel %vm924, %v3261, %v3263
        %v3265 = vrot.slane %v2521, 2
        %v3266 = vrot.slane %v2522, 2
        %v3267 = vsel %vm924, %v3265, %v3266
        %v3268 = vrot.slane %v2523, 2
        %v3269 = vsel %vm924, %v3266, %v3268
        %v3270 = vrot.slane %v2524, 2
        %v3271 = vrot.slane %v2525, 2
        %v3272 = vsel %vm924, %v3270, %v3271
        %v3273 = vrot.slane %v2526, 2
        %v3274 = vsel %vm924, %v3271, %v3273
        %v3275 = vrot.slane %v2527, 2
        %v3276 = vrot.slane %v2528, 2
        %v3277 = vsel %vm924, %v3275, %v3276
        %v3278 = vrot.slane %v2529, 2
        %v3279 = vsel %vm924, %v3276, %v3278
        %v3280 = vrot.slane %v2530, 2
        %v3281 = vrot.slane %v2531, 2
        %v3282 = vsel %vm924, %v3280, %v3281
        %v3283 = vrot.slane %v2532, 2
        %v3284 = vsel %vm924, %v3281, %v3283
        %v3285 = vrot.slane %v2533, 2
        %v3286 = vrot.slane %v2534, 2
        %v3287 = vsel %vm924, %v3285, %v3286
        %v3288 = vrot.slane %v2535, 2
        %v3289 = vsel %vm924, %v3286, %v3288
        %v3290 = vrot.slane %v2536, 2
        %v3291 = vrot.slane %v2537, 2
        %v3292 = vsel %vm924, %v3290, %v3291
        %v3293 = vrot.slane %v2538, 2
        %v3294 = vsel %vm924, %v3291, %v3293
        %v3295 = vrot.slane %v2539, 2
        %v3296 = vrot.slane %v2540, 2
        %v3297 = vsel %vm924, %v3295, %v3296
        %v3298 = vrot.slane %v2541, 2
        %v3299 = vsel %vm924, %v3296, %v3298
        %v3300 = vrot.slane %v2542, 2
        %v3301 = vrot.slane %v2543, 2
        %v3302 = vsel %vm924, %v3300, %v3301
        %v3303 = vrot.slane %v2544, 2
        %v3304 = vsel %vm924, %v3301, %v3303
        %v3305 = vrot.slane %v2545, 2
        %v3306 = vrot.slane %v2546, 2
        %v3307 = vsel %vm924, %v3305, %v3306
        %v3308 = vrot.slane %v2547, 2
        %v3309 = vsel %vm924, %v3306, %v3308
        %v3310 = vrot.slane %v2548, 2
        %v3311 = vrot.slane %v2549, 2
        %v3312 = vsel %vm924, %v3310, %v3311
        %v3313 = vrot.slane %v2550, 2
        %v3314 = vsel %vm924, %v3311, %v3313
        %v3347 = vpack.c.bf16 %v3239, %v3237
        %v3348 = vpack.c.bf16 %v3244, %v3242
        %v3349 = vpack.c.bf16 %v3249, %v3247
        %v3350 = vpack.c.bf16 %v3254, %v3252
        %v3351 = vpack.c.bf16 %v3259, %v3257
        %v3352 = vpack.c.bf16 %v3264, %v3262
        %v3353 = vpack.c.bf16 %v3269, %v3267
        %v3354 = vpack.c.bf16 %v3274, %v3272
        %v3355 = vpack.c.bf16 %v3279, %v3277
        %v3356 = vpack.c.bf16 %v3284, %v3282
        %v3357 = vpack.c.bf16 %v3289, %v3287
        %v3358 = vpack.c.bf16 %v3294, %v3292
        %v3359 = vpack.c.bf16 %v3299, %v3297
        %v3360 = vpack.c.bf16 %v3304, %v3302
        %v3361 = vpack.c.bf16 %v3309, %v3307
        %v3362 = vpack.c.bf16 %v3314, %v3312
        %s3363 = scalar_lea.vmem %s1, 16
        %v3364 = vld [vmem:[%s3363] sm:$0x3]
        %v3366 = vsel %vm498, %v3347, 0
        %v3369 = vsel %vm498, %v3348, 0
        %v3372 = vsel %vm498, %v3349, 0
        %v3375 = vsel %vm498, %v3350, 0
        %v3378 = vsel %vm498, %v3351, 0
        %v3381 = vsel %vm498, %v3352, 0
        %v3384 = vsel %vm498, %v3353, 0
        %v3387 = vsel %vm498, %v3354, 0
        %v3390 = vsel %vm498, %v3355, 0
        %v3393 = vsel %vm498, %v3356, 0
        %v3396 = vsel %vm498, %v3357, 0
        %v3399 = vsel %vm498, %v3358, 0
        %v3402 = vsel %vm498, %v3359, 0
        %v3405 = vsel %vm498, %v3360, 0
        %v3408 = vsel %vm498, %v3361, 0
        %v3411 = vsel %vm498, %v3362, 0
        %v3414 = vsel %vm547, %v3364, 0
        %3416 = vmatprep.subr.bf16.mxu0 0
        %3417 = vmatpush1.bf16.msra.mxu0 %v3414
        %3418 = vmatprep.subr.bf16.mxu0 0
        %3419 = vmatpush1.bf16.msra.mxu0 0
        %3420 = vmatprep.subr.bf16.mxu0 0
        %3421 = vmatpush1.bf16.msra.mxu0 0
        %3422 = vmatprep.subr.bf16.mxu0 0
        %3423 = vmatpush1.bf16.msra.mxu0 0
        %3424 = vmatprep.subr.bf16.mxu0 0
        %3425 = vmatpush1.bf16.msra.mxu0 0
        %3426 = vmatprep.subr.bf16.mxu0 0
        %3427 = vmatpush1.bf16.msra.mxu0 0
        %3428 = vmatprep.subr.bf16.mxu0 0
        %3429 = vmatpush1.bf16.msra.mxu0 0
        %3430 = vmatprep.subr.bf16.mxu0 0
        %3431 = vmatpush1.bf16.msra.mxu0 0
        %3432 = vmatprep.subr.bf16.mxu0 0
        %3433 = vmatpush1.bf16.msra.mxu0 0
        %3434 = vmatprep.subr.bf16.mxu0 0
        %3435 = vmatpush1.bf16.msra.mxu0 0
        %3436 = vmatprep.subr.bf16.mxu0 0
        %3437 = vmatpush1.bf16.msra.mxu0 0
        %3438 = vmatprep.subr.bf16.mxu0 0
        %3439 = vmatpush1.bf16.msra.mxu0 0
        %3440 = vmatprep.subr.bf16.mxu0 0
        %3441 = vmatpush1.bf16.msra.mxu0 0
        %3442 = vmatprep.subr.bf16.mxu0 0
        %3443 = vmatpush1.bf16.msra.mxu0 0
        %3444 = vmatprep.subr.bf16.mxu0 0
        %3445 = vmatpush1.bf16.msra.mxu0 0
        %3446 = vmatprep.subr.bf16.mxu0 0
        %3447 = vmatpush1.bf16.msra.mxu0 0
        %3448 = vmatprep.mubr.bf16.mxu0 0
        %3449 = vmatmul.mubr.bf16.gmra.mrb[0].mxu0 %v3366
        %v3450 = vpop.f32.mrb[0].mxu0
        %v3451 = vadd.f32 0.0, %v3450
        %v3452 = vpop.f32.mrb[0].mxu0
        %v3453 = vpop.f32.mrb[0].mxu0
        %v3454 = vadd.f32 0.0, %v3453
        %v3455 = vpop.f32.mrb[0].mxu0
        %3456 = vmatprep.mubr.bf16.mxu0 0
        %3457 = vmatmul.mubr.bf16.gmra.mrb[0].mxu0 %v3369
        %v3458 = vpop.f32.mrb[0].mxu0
        %v3459 = vadd.f32 0.0, %v3458
        %v3460 = vpop.f32.mrb[0].mxu0
        %v3461 = vpop.f32.mrb[0].mxu0
        %v3462 = vadd.f32 0.0, %v3461
        %v3463 = vpop.f32.mrb[0].mxu0
        %3464 = vmatprep.mubr.bf16.mxu0 0
        %3465 = vmatmul.mubr.bf16.gmra.mrb[0].mxu0 %v3372
        %v3466 = vpop.f32.mrb[0].mxu0
        %v3467 = vadd.f32 0.0, %v3466
        %v3468 = vpop.f32.mrb[0].mxu0
        %v3469 = vpop.f32.mrb[0].mxu0
        %v3470 = vadd.f32 0.0, %v3469
        %v3471 = vpop.f32.mrb[0].mxu0
        %3472 = vmatprep.mubr.bf16.mxu0 0
        %3473 = vmatmul.mubr.bf16.gmra.mrb[0].mxu0 %v3375
        %v3474 = vpop.f32.mrb[0].mxu0
        %v3475 = vadd.f32 0.0, %v3474
        %v3476 = vpop.f32.mrb[0].mxu0
        %v3477 = vpop.f32.mrb[0].mxu0
        %v3478 = vadd.f32 0.0, %v3477
        %v3479 = vpop.f32.mrb[0].mxu0
        %3480 = vmatprep.mubr.bf16.mxu0 0
        %3481 = vmatmul.mubr.bf16.gmra.mrb[0].mxu0 %v3378
        %v3482 = vpop.f32.mrb[0].mxu0
        %v3483 = vadd.f32 0.0, %v3482
        %v3484 = vpop.f32.mrb[0].mxu0
        %v3485 = vpop.f32.mrb[0].mxu0
        %v3486 = vadd.f32 0.0, %v3485
        %v3487 = vpop.f32.mrb[0].mxu0
        %3488 = vmatprep.mubr.bf16.mxu0 0
        %3489 = vmatmul.mubr.bf16.gmra.mrb[0].mxu0 %v3381
        %v3490 = vpop.f32.mrb[0].mxu0
        %v3491 = vadd.f32 0.0, %v3490
        %v3492 = vpop.f32.mrb[0].mxu0
        %v3493 = vpop.f32.mrb[0].mxu0
        %v3494 = vadd.f32 0.0, %v3493
        %v3495 = vpop.f32.mrb[0].mxu0
        %3496 = vmatprep.mubr.bf16.mxu0 0
        %3497 = vmatmul.mubr.bf16.gmra.mrb[0].mxu0 %v3384
        %v3498 = vpop.f32.mrb[0].mxu0
        %v3499 = vadd.f32 0.0, %v3498
        %v3500 = vpop.f32.mrb[0].mxu0
        %v3501 = vpop.f32.mrb[0].mxu0
        %v3502 = vadd.f32 0.0, %v3501
        %v3503 = vpop.f32.mrb[0].mxu0
        %3504 = vmatprep.mubr.bf16.mxu0 0
        %3505 = vmatmul.mubr.bf16.gmra.mrb[0].mxu0 %v3387
        %v3506 = vpop.f32.mrb[0].mxu0
        %v3507 = vadd.f32 0.0, %v3506
        %v3508 = vpop.f32.mrb[0].mxu0
        %v3509 = vpop.f32.mrb[0].mxu0
        %v3510 = vadd.f32 0.0, %v3509
        %v3511 = vpop.f32.mrb[0].mxu0
        %3512 = vmatprep.mubr.bf16.mxu0 0
        %3513 = vmatmul.mubr.bf16.gmra.mrb[0].mxu0 %v3390
        %v3514 = vpop.f32.mrb[0].mxu0
        %v3515 = vadd.f32 0.0, %v3514
        %v3516 = vpop.f32.mrb[0].mxu0
        %v3517 = vpop.f32.mrb[0].mxu0
        %v3518 = vadd.f32 0.0, %v3517
        %v3519 = vpop.f32.mrb[0].mxu0
        %3520 = vmatprep.mubr.bf16.mxu0 0
        %3521 = vmatmul.mubr.bf16.gmra.mrb[0].mxu0 %v3393
        %v3522 = vpop.f32.mrb[0].mxu0
        %v3523 = vadd.f32 0.0, %v3522
        %v3524 = vpop.f32.mrb[0].mxu0
        %v3525 = vpop.f32.mrb[0].mxu0
        %v3526 = vadd.f32 0.0, %v3525
        %v3527 = vpop.f32.mrb[0].mxu0
        %3528 = vmatprep.mubr.bf16.mxu0 0
        %3529 = vmatmul.mubr.bf16.gmra.mrb[0].mxu0 %v3396
        %v3530 = vpop.f32.mrb[0].mxu0
        %v3531 = vadd.f32 0.0, %v3530
        %v3532 = vpop.f32.mrb[0].mxu0
        %v3533 = vpop.f32.mrb[0].mxu0
        %v3534 = vadd.f32 0.0, %v3533
        %v3535 = vpop.f32.mrb[0].mxu0
        %3536 = vmatprep.mubr.bf16.mxu0 0
        %3537 = vmatmul.mubr.bf16.gmra.mrb[0].mxu0 %v3399
        %v3538 = vpop.f32.mrb[0].mxu0
        %v3539 = vadd.f32 0.0, %v3538
        %v3540 = vpop.f32.mrb[0].mxu0
        %v3541 = vpop.f32.mrb[0].mxu0
        %v3542 = vadd.f32 0.0, %v3541
        %v3543 = vpop.f32.mrb[0].mxu0
        %3544 = vmatprep.mubr.bf16.mxu0 0
        %3545 = vmatmul.mubr.bf16.gmra.mrb[0].mxu0 %v3402
        %v3546 = vpop.f32.mrb[0].mxu0
        %v3547 = vadd.f32 0.0, %v3546
        %v3548 = vpop.f32.mrb[0].mxu0
        %v3549 = vpop.f32.mrb[0].mxu0
        %v3550 = vadd.f32 0.0, %v3549
        %v3551 = vpop.f32.mrb[0].mxu0
        %3552 = vmatprep.mubr.bf16.mxu0 0
        %3553 = vmatmul.mubr.bf16.gmra.mrb[0].mxu0 %v3405
        %v3554 = vpop.f32.mrb[0].mxu0
        %v3555 = vadd.f32 0.0, %v3554
        %v3556 = vpop.f32.mrb[0].mxu0
        %v3557 = vpop.f32.mrb[0].mxu0
        %v3558 = vadd.f32 0.0, %v3557
        %v3559 = vpop.f32.mrb[0].mxu0
        %3560 = vmatprep.mubr.bf16.mxu0 0
        %3561 = vmatmul.mubr.bf16.gmra.mrb[0].mxu0 %v3408
        %v3562 = vpop.f32.mrb[0].mxu0
        %v3563 = vadd.f32 0.0, %v3562
        %v3564 = vpop.f32.mrb[0].mxu0
        %v3565 = vpop.f32.mrb[0].mxu0
        %v3566 = vadd.f32 0.0, %v3565
        %v3567 = vpop.f32.mrb[0].mxu0
        %3568 = vmatprep.mubr.bf16.mxu0 0
        %3569 = vmatmul.mubr.bf16.gmra.mrb[0].mxu0 %v3411
        %v3570 = vpop.f32.mrb[0].mxu0
        %v3571 = vadd.f32 0.0, %v3570
        %v3572 = vpop.f32.mrb[0].mxu0
        %v3573 = vpop.f32.mrb[0].mxu0
        %v3574 = vadd.f32 0.0, %v3573
        %v3575 = vpop.f32.mrb[0].mxu0
        %3576 = vdwg.mxu0
        %v3577 = vadd.f32 %v3203, %v3451
        %v3578 = vadd.f32 %v3204, %v3454
        %v3579 = vadd.f32 %v3205, %v3459
        %v3580 = vadd.f32 %v3206, %v3462
        %v3581 = vadd.f32 %v3207, %v3467
        %v3582 = vadd.f32 %v3208, %v3470
        %v3583 = vadd.f32 %v3209, %v3475
        %v3584 = vadd.f32 %v3210, %v3478
        %v3585 = vadd.f32 %v3211, %v3483
        %v3586 = vadd.f32 %v3212, %v3486
        %v3587 = vadd.f32 %v3213, %v3491
        %v3588 = vadd.f32 %v3214, %v3494
        %v3589 = vadd.f32 %v3215, %v3499
        %v3590 = vadd.f32 %v3216, %v3502
        %v3591 = vadd.f32 %v3217, %v3507
        %v3592 = vadd.f32 %v3218, %v3510
        %v3593 = vadd.f32 %v3219, %v3515
        %v3594 = vadd.f32 %v3220, %v3518
        %v3595 = vadd.f32 %v3221, %v3523
        %v3596 = vadd.f32 %v3222, %v3526
        %v3597 = vadd.f32 %v3223, %v3531
        %v3598 = vadd.f32 %v3224, %v3534
        %v3599 = vadd.f32 %v3225, %v3539
        %v3600 = vadd.f32 %v3226, %v3542
        %v3601 = vadd.f32 %v3227, %v3547
        %v3602 = vadd.f32 %v3228, %v3550
        %v3603 = vadd.f32 %v3229, %v3555
        %v3604 = vadd.f32 %v3230, %v3558
        %v3605 = vadd.f32 %v3231, %v3563
        %v3606 = vadd.f32 %v3232, %v3566
        %v3607 = vadd.f32 %v3233, %v3571
        %v3608 = vadd.f32 %v3234, %v3574
        %v3609 = vmax.f32 %v3577, 0.0
        %v3610 = vmax.f32 %v3578, 0.0
        %v3611 = vmax.f32 %v3579, 0.0
        %v3612 = vmax.f32 %v3580, 0.0
        %v3613 = vmax.f32 %v3581, 0.0
        %v3614 = vmax.f32 %v3582, 0.0
        %v3615 = vmax.f32 %v3583, 0.0
        %v3616 = vmax.f32 %v3584, 0.0
        %v3617 = vmax.f32 %v3585, 0.0
        %v3618 = vmax.f32 %v3586, 0.0
        %v3619 = vmax.f32 %v3587, 0.0
        %v3620 = vmax.f32 %v3588, 0.0
        %v3621 = vmax.f32 %v3589, 0.0
        %v3622 = vmax.f32 %v3590, 0.0
        %v3623 = vmax.f32 %v3591, 0.0
        %v3624 = vmax.f32 %v3592, 0.0
        %v3625 = vmax.f32 %v3593, 0.0
        %v3626 = vmax.f32 %v3594, 0.0
        %v3627 = vmax.f32 %v3595, 0.0
        %v3628 = vmax.f32 %v3596, 0.0
        %v3629 = vmax.f32 %v3597, 0.0
        %v3630 = vmax.f32 %v3598, 0.0
        %v3631 = vmax.f32 %v3599, 0.0
        %v3632 = vmax.f32 %v3600, 0.0
        %v3633 = vmax.f32 %v3601, 0.0
        %v3634 = vmax.f32 %v3602, 0.0
        %v3635 = vmax.f32 %v3603, 0.0
        %v3636 = vmax.f32 %v3604, 0.0
        %v3637 = vmax.f32 %v3605, 0.0
        %v3638 = vmax.f32 %v3606, 0.0
        %v3639 = vmax.f32 %v3607, 0.0
        %v3640 = vmax.f32 %v3608, 0.0
        %v3641 = vadd.f32 %v3609, %v3610
        %v3642 = vadd.f32 %v3641, %v3611
        %v3643 = vadd.f32 %v3642, %v3612
        %v3644 = vadd.f32 %v3643, %v3613
        %v3645 = vadd.f32 %v3644, %v3614
        %v3646 = vadd.f32 %v3645, %v3615
        %v3647 = vadd.f32 %v3646, %v3616
        %v3648 = vadd.f32 %v3647, %v3617
        %v3649 = vadd.f32 %v3648, %v3618
        %v3650 = vadd.f32 %v3649, %v3619
        %v3651 = vadd.f32 %v3650, %v3620
        %v3652 = vadd.f32 %v3651, %v3621
        %v3653 = vadd.f32 %v3652, %v3622
        %v3654 = vadd.f32 %v3653, %v3623
        %v3655 = vadd.f32 %v3654, %v3624
        %v3656 = vadd.f32 %v3655, %v3625
        %v3657 = vadd.f32 %v3656, %v3626
        %v3658 = vadd.f32 %v3657, %v3627
        %v3659 = vadd.f32 %v3658, %v3628
        %v3660 = vadd.f32 %v3659, %v3629
        %v3661 = vadd.f32 %v3660, %v3630
        %v3662 = vadd.f32 %v3661, %v3631
        %v3663 = vadd.f32 %v3662, %v3632
        %v3664 = vadd.f32 %v3663, %v3633
        %v3665 = vadd.f32 %v3664, %v3634
        %v3666 = vadd.f32 %v3665, %v3635
        %v3667 = vadd.f32 %v3666, %v3636
        %v3668 = vadd.f32 %v3667, %v3637
        %v3669 = vadd.f32 %v3668, %v3638
        %v3670 = vadd.f32 %v3669, %v3639
        %v3671 = vadd.f32 %v3670, %v3640
        %v3672 = vrot.slane %v3671, 4
        %v3673 = vadd.f32 %v3671, %v3672
        %v3674 = vrot.slane %v3673, 2
        %v3675 = vadd.f32 %v3673, %v3674
        %v3676 = vrot.slane %v3675, 1
        %v3677 = vadd.f32 %v3675, %v3676
        %v3678 = vadd.f32 %v3677, 0.0
        %v3679 = vmul.f32 %v3678, 0.00390625
        %3680 = vst [vmem:[%s199] sm:$0x1] %v3679
        %v3681 = vpack.c.bf16 %v3679, %v3679
        %v3682 = vld [vmem:[%s2] sm:$0xf]
        %v3683 = vld [vmem:[%s2 + $0x4] sm:$0xf]
        %v3684 = vld [vmem:[%s2 + $0x8] sm:$0xf]
        %v3685 = vld [vmem:[%s2 + $0xc] sm:$0xf]
        %v3686 = vld [vmem:[%s2 + $0x10] sm:$0xf]
        %v3687 = vld [vmem:[%s2 + $0x14] sm:$0xf]
        %v3688 = vld [vmem:[%s2 + $0x18] sm:$0xf]
        %v3689 = vld [vmem:[%s2 + $0x1c] sm:$0xf]
        %v3690 = vld [vmem:[%s2 + $0x20] sm:$0xf]
        %v3691 = vld [vmem:[%s2 + $0x24] sm:$0xf]
        %v3692 = vld [vmem:[%s2 + $0x28] sm:$0xf]
        %v3693 = vld [vmem:[%s2 + $0x2c] sm:$0xf]
        %v3694 = vld [vmem:[%s2 + $0x30] sm:$0xf]
        %v3695 = vld [vmem:[%s2 + $0x34] sm:$0xf]
        %v3696 = vld [vmem:[%s2 + $0x38] sm:$0xf]
        %v3697 = vld [vmem:[%s2 + $0x3c] sm:$0xf]
        %v3714 = vunpack.c.l.b16 %v3682
        %v3715 = vunpack.c.l.b16 %v3683
        %v3716 = vunpack.c.l.b16 %v3684
        %v3717 = vunpack.c.l.b16 %v3685
        %v3718 = vunpack.c.l.b16 %v3686
        %v3719 = vunpack.c.l.b16 %v3687
        %v3720 = vunpack.c.l.b16 %v3688
        %v3721 = vunpack.c.l.b16 %v3689
        %v3722 = vunpack.c.l.b16 %v3690
        %v3723 = vunpack.c.l.b16 %v3691
        %v3724 = vunpack.c.l.b16 %v3692
        %v3725 = vunpack.c.l.b16 %v3693
        %v3726 = vunpack.c.l.b16 %v3694
        %v3727 = vunpack.c.l.b16 %v3695
        %v3728 = vunpack.c.l.b16 %v3696
        %v3729 = vunpack.c.l.b16 %v3697
        %v3730 = vpack.c.b16 %v3715, %v3714
        %v3731 = vpack.c.b16 %v3717, %v3716
        %v3732 = vpack.c.b16 %v3719, %v3718
        %v3733 = vpack.c.b16 %v3721, %v3720
        %v3734 = vpack.c.b16 %v3723, %v3722
        %v3735 = vpack.c.b16 %v3725, %v3724
        %v3736 = vpack.c.b16 %v3727, %v3726
        %v3737 = vpack.c.b16 %v3729, %v3728
        %3746 = vmatprep.subr.bf16.mxu0 0
        %3747 = vmatpush1.bf16.msra.mxu0 %v3730
        %3748 = vmatprep.subr.bf16.mxu0 0
        %3749 = vmatpush1.bf16.msra.mxu0 %v3731
        %3750 = vmatprep.subr.bf16.mxu0 0
        %3751 = vmatpush1.bf16.msra.mxu0 %v3732
        %3752 = vmatprep.subr.bf16.mxu0 0
        %3753 = vmatpush1.bf16.msra.mxu0 %v3733
        %3754 = vmatprep.subr.bf16.mxu0 0
        %3755 = vmatpush1.bf16.msra.mxu0 %v3734
        %3756 = vmatprep.subr.bf16.mxu0 0
        %3757 = vmatpush1.bf16.msra.mxu0 %v3735
        %3758 = vmatprep.subr.bf16.mxu0 0
        %3759 = vmatpush1.bf16.msra.mxu0 %v3736
        %3760 = vmatprep.subr.bf16.mxu0 0
        %3761 = vmatpush1.bf16.msra.mxu0 %v3737
        %3762 = vmatprep.subr.bf16.mxu0 0
        %3763 = vmatpush1.bf16.msra.mxu0 0
        %3764 = vmatprep.subr.bf16.mxu0 0
        %3765 = vmatpush1.bf16.msra.mxu0 0
        %3766 = vmatprep.subr.bf16.mxu0 0
        %3767 = vmatpush1.bf16.msra.mxu0 0
        %3768 = vmatprep.subr.bf16.mxu0 0
        %3769 = vmatpush1.bf16.msra.mxu0 0
        %3770 = vmatprep.subr.bf16.mxu0 0
        %3771 = vmatpush1.bf16.msra.mxu0 0
        %3772 = vmatprep.subr.bf16.mxu0 0
        %3773 = vmatpush1.bf16.msra.mxu0 0
        %3774 = vmatprep.subr.bf16.mxu0 0
        %3775 = vmatpush1.bf16.msra.mxu0 0
        %3776 = vmatprep.subr.bf16.mxu0 0
        %3777 = vmatpush1.bf16.msra.mxu0 0
        %3778 = vmatprep.mubr.bf16.mxu0 0
        %3779 = vmatmul.mubr.bf16.gmra.mrb[0].mxu0 %v3681
        %v3780 = vpop.f32.mrb[0].mxu0
        %v3781 = vadd.f32 0.0, %v3780
        %v3782 = vpop.f32.mrb[0].mxu0
        %v3783 = vpop.f32.mrb[0].mxu0
        %v3784 = vpop.f32.mrb[0].mxu0
        %3785 = vdwg.mxu0
        %3786 = vst [vmem:[%s193] sm:$0x1] %v3781
        %s3787 = sand.u32 %s98, 1
        %s3788 = scalar_lea.sflag [#allocation3], %s3787
        %s3789 = sand.u32 %s98, 1
        %s3790 = scalar_lea.vmem [#allocation2], %s3789
        %s3791 = sand.u32 %s124, 1
        %s3792 = scalar_lea.sflag [#allocation5], %s3791
        %s3793 = sand.u32 %s124, 1
        %s3794 = scalar_lea.vmem [#allocation4], %s3793
        // Predicated region
        $region33: #{incremental_net_forward.1} parent=31 // pred_check
          %p3795 = pneg %p108
        $region34: #{incremental_net_forward.1} parent=31 // pred_check_branch
          %3797 = sbr.rel (%p3795) target = $region36
        $region35: #{incremental_net_forward.1} parent=31 // pred_region
          %s3799 = ssub.s32 16, 16
          %3800 = vsyncadd %s3788, %s3799
          %s3801 = smul.addr %s22, 16
          %s3802 = scalar_lea.hbm %s3, %s3801
          %s3804 = sshll.u32 %s3790, 4
          %s3805 = int_to_ptr.vmem [resolvable:$true] %s3804
          %3807 = dma.vmem_to_hbm [thread:$0]  %s3805, 16, %s3802, %s3788
        $region36: #{incremental_net_forward.1} parent=31 // pred_fallthru
          _
        // Predicated region
        $region37: #{incremental_net_forward.1} parent=31 // pred_check
          %p3808 = pneg %p134
        $region38: #{incremental_net_forward.1} parent=31 // pred_check_branch
          %3810 = sbr.rel (%p3808) target = $region40
        $region39: #{incremental_net_forward.1} parent=31 // pred_region
          %s3812 = ssub.s32 16, 16
          %3813 = vsyncadd %s3792, %s3812
          %s3814 = smul.addr %s22, 16
          %s3815 = scalar_lea.hbm %s4, %s3814
          %s3817 = sshll.u32 %s3794, 4
          %s3818 = int_to_ptr.vmem [resolvable:$true] %s3817
          %3820 = dma.vmem_to_hbm [thread:$0]  %s3818, 16, %s3815, %s3792
        $region40: #{incremental_net_forward.1} parent=31 // pred_fallthru
          _
      $region32: #{incremental_net_forward.1} parent=5 // pred_fallthru
        _
      %p3821 = scmp.le.s32.totalorder 2, %s17
      // Predicated region
      $region41: #{incremental_net_forward.1} parent=5 // pred_check
        %p3822 = pneg %p3821
      $region42: #{incremental_net_forward.1} parent=5 // pred_check_branch
        %3824 = sbr.rel (%p3822) target = $region44
      $region43: #{incremental_net_forward.1} parent=5 // pred_region
        %s3825 = ssub.s32 %s17, 2
        // Predicated region
        $region45: #{incremental_net_forward.1} parent=43 // pred_check
          %p3826 = pneg %p114
        $region46: #{incremental_net_forward.1} parent=43 // pred_check_branch
          %3828 = sbr.rel (%p3826) target = $region48
        $region47: #{incremental_net_forward.1} parent=43 // pred_region
          %s3829 = sand.u32 %s99, 1
          %s3830 = scalar_lea.sflag [#allocation3], %s3829
          %s3831 = sand.u32 %s99, 1
          %s3832 = scalar_lea.vmem [#allocation2], %s3831
          %3833 = dma.done %s3830, 16
        $region48: #{incremental_net_forward.1} parent=43 // pred_fallthru
          _
        // Predicated region
        $region49: #{incremental_net_forward.1} parent=43 // pred_check
          %p3834 = pneg %p140
        $region50: #{incremental_net_forward.1} parent=43 // pred_check_branch
          %3836 = sbr.rel (%p3834) target = $region52
        $region51: #{incremental_net_forward.1} parent=43 // pred_region
          %s3837 = sand.u32 %s125, 1
          %s3838 = scalar_lea.sflag [#allocation5], %s3837
          %s3839 = sand.u32 %s125, 1
          %s3840 = scalar_lea.vmem [#allocation4], %s3839
          %3841 = dma.done %s3838, 16
        $region52: #{incremental_net_forward.1} parent=43 // pred_fallthru
          _
      $region44: #{incremental_net_forward.1} parent=5 // pred_fallthru
        _
    $region6: #{incremental_net_forward.1} parent=1 // loop_footer
      %s21 = sadd.s32 1, %s17
    $region7: #{incremental_net_forward.1} parent=1 // loop_footer_branch
      %16 = sbr.rel target = $region3
    $region8: #{incremental_net_forward.1} parent=1 // loop_exit
      _
    %3842 = vsyncpa [#allocation3], 1
    %s3843 = scalar_lea.sflag [#allocation3], 1
    %3844 = vsyncpa %s3843, 1
    %3845 = vsyncpa [#allocation5], 1
    %s3846 = scalar_lea.sflag [#allocation5], 1
    %3847 = vsyncpa %s3846, 1

</llo_original>
